<compile_context>
chip_gen: v7x
topology: tpu7x:2x2x1
jax: 0.10.0
libtpu: 0.0.40
codegen_flags: <defaults>
</compile_context>

<pallas_src>
import functools

import jax
import jax.numpy as jnp
import numpy as np
from jax import lax
from jax.experimental import pallas as pl
from jax.experimental.pallas import tpu as pltpu


def _col_perm_matrix(w, dtype):
    """One-hot P_W so that (X @ P_W)[.., c2*w4 + q] = X[.., 4q + c2]."""
    w4 = w // 4
    pw = np.zeros((w, w), dtype=np.float32)
    for c2 in range(4):
        for q in range(w4):
            pw[4 * q + c2, c2 * w4 + q] = 1.0
    return jnp.asarray(pw, dtype)


def _double_squeeze_kernel(x_ref, pw_ref, o_ref, *, ct, h, w):
    # x_ref : (ct*H, W)        ct channel slabs stacked along rows (row = cc*H + hh)
    # pw_ref: (W, W)           shared one-hot column permutation (single-buffered)
    # o_ref : (ct, 16, H4, W4) output block for these ct channels
    h4, w4 = h // 4, w // 4
    aligned = (h4 % 8) == 0

    for r in range(4):
        s1, t1 = r % 2, r // 2
        # Row phase r via a native sublane-strided load, fused straight into the
        # MXU LHS (no intermediate VMEM scratch).  Row r + 4k of the block is
        # channel cc = k // h4, source row 4p + r with p = k % h4.
        lhs = x_ref[pl.ds(r, ct * h4, stride=4), :]                    # (ct*h4, W)
        # One-hot column gather on the MXU.  precision=HIGHEST keeps it exact
        # for f32 activations (default precision would bf16-truncate x).
        res = jnp.dot(lhs, pw_ref[...],
                      preferred_element_type=jnp.float32,
                      precision=lax.Precision.HIGHEST).astype(o_ref.dtype)

        if aligned:
            # h4 % 8 == 0: tile-aligned split of the sublane dim — no relayout.
            rows = res.reshape(ct, h4, w)
            for c2 in range(4):
                s2, t2 = c2 % 2, c2 // 2
                off = 8 * s1 + 4 * s2 + 2 * t1 + t2
                o_ref[:, off, :, :] = rows[:, :, c2 * w4:(c2 + 1) * w4]
        else:
            # h4 % 8 != 0: the 3-D reshape would force a sublane relayout; slice
            # per channel from the 2-D value instead (ct is kept small here).
            for c2 in range(4):
                s2, t2 = c2 % 2, c2 // 2
                off = 8 * s1 + 4 * s2 + 2 * t1 + t2
                for cc in range(ct):
                    o_ref[cc, off, :, :] = res[cc * h4:(cc + 1) * h4,
                                               c2 * w4:(c2 + 1) * w4]


def _vmem_limit_bytes():
    """Generation-aware VMEM limit: ~half physical VMEM, capped at 64 MiB."""
    try:
        cap = int(pltpu.get_tpu_info().vmem_capacity_bytes)
    except Exception:
        cap = 64 << 20
    return max(32 << 20, min(cap // 2, 64 << 20))


def _num_tensorcores():
    """2 on megacore parts (v4 / v7x), else 1 — used only to gate tile shrinking."""
    try:
        kind = jax.devices()[0].device_kind.lower()
    except Exception:
        return 1
    return 2 if ("v7" in kind or "v4" in kind) else 1


def _pick_c_tile(b, c, h, w, itemsize, vmem_limit):
    """Largest channel tile (divisor of C) whose real VMEM footprint fits the
    budget; returns None if even the smallest aligned tile cannot fit VMEM."""
    h4, w4 = h // 4, w // 4
    pad_h4 = -(-h4 // 8) * 8          # sublane padding of the (h4, w4) out tile
    pad_w4 = -(-w4 // 128) * 128      # lane padding

    def ok(ct):
        # (8,128) rule: block's second-to-last dim (ct*h) must be a multiple of 8
        # unless it spans the full array dim (ct == c).
        return c % ct == 0 and (ct == c or (ct * h) % 8 == 0)

    cands = [ct for ct in range(1, c + 1) if ok(ct)]
    if h4 % 8 != 0:
        # Unaligned store epilogue unrolls per channel: keep the tile small.
        capped = [ct for ct in cands if ct <= 8]
        cands = capped or [min(cands)]

    def footprint(ct):
        inp = 2 * ct * h * w * itemsize                     # double-buffered input
        out = 2 * ct * 16 * pad_h4 * pad_w4 * itemsize      # double-buffered, padded output
        return inp + out

    budget = 4 << 20                                        # ~4 MiB of blocks per step
    fitting = [ct for ct in cands if footprint(ct) <= budget]
    ct = max(fitting) if fitting else min(cands)

    if _num_tensorcores() >= 2:
        # Keep >= 2 grid steps so the parallel grid can shard across both cores.
        while ct > 1 and b * (c // ct) < 2:
            smaller = [d for d in cands if d < ct]
            if not smaller:
                break
            ct = max(smaller)

    pw_bytes = w * w * itemsize                             # single-buffered P_W
    if footprint(ct) + pw_bytes > vmem_limit:
        return None                                         # caller falls back to XLA path
    return ct


# ---------------- pure-JAX reference (mirrors PyTorch Block.forward) ---------
def _squeeze_ref(x):
    b, c, h, w = x.shape
    y = x.reshape(b, c, h // 2, 2, w // 2, 2)
    y = jnp.transpose(y, (0, 1, 3, 5, 2, 4))
    return y.reshape(b, c * 4, h // 2, w // 2)


def glow_intermediate_ref(x):
    z = x
    for _ in range(2):  # two Blocks; n_flow=0, style=None
        z = _squeeze_ref(z)
    return z


def glow_intermediate_forward(x, style=None):
    """x: (B, C, H, W) NCHW -> (B, 16*C, H//4, W//4), matching the two Glow Blocks."""
    assert style is None, "style path (AdaAttN) not implemented"  # TODO(synk): AdaAttN body not in reference
    b, c, h, w = x.shape
    assert h % 4 == 0 and w % 4 == 0, "H and W must be divisible by 4 (two squeezes)"
    h4, w4 = h // 4, w // 4

    if not jnp.issubdtype(x.dtype, jnp.floating):
        # Integer dtypes bypass the MXU one-hot-permute path (v7x MXU has no
        # integer mode): plain XLA layout path.
        return glow_intermediate_ref(x)

    itemsize = jnp.dtype(x.dtype).itemsize
    vmem_limit = _vmem_limit_bytes()
    ct = _pick_c_tile(b, c, h, w, itemsize, vmem_limit)
    if ct is None:
        # No aligned channel tile fits VMEM (e.g. prime C with huge H*W):
        # fall back instead of failing to compile.
        return glow_intermediate_ref(x)

    # One-hot 0/1 weights are exact in any float dtype; keep x.dtype so the f32
    # path is a plain f32 x f32 HIGHEST-precision matmul (no per-step converts).
    pw = _col_perm_matrix(w, x.dtype)
    x2 = x.reshape(b, c * h, w)  # free reshape: channel slabs stacked along rows

    kernel = functools.partial(_double_squeeze_kernel, ct=ct, h=h, w=w)
    out5 = pl.pallas_call(
        kernel,
        out_shape=jax.ShapeDtypeStruct((b, c, 16, h4, w4), x.dtype),
        grid_spec=pltpu.PrefetchScalarGridSpec(
            num_scalar_prefetch=0,
            grid=(b, c // ct),
            in_specs=[
                pl.BlockSpec((None, ct * h, w), lambda i, j: (i, j, 0)),
                # Constant P_W: constant index_map (fetched once) and single
                # buffered so it costs only one VMEM copy.
                pl.BlockSpec((w, w), lambda i, j: (0, 0),
                             pipeline_mode=pl.Buffered(1)),
            ],
            out_specs=pl.BlockSpec((None, ct, 16, h4, w4),
                                   lambda i, j: (i, j, 0, 0, 0)),
        ),
        compiler_params=pltpu.CompilerParams(
            dimension_semantics=("parallel", "parallel"),
            vmem_limit_bytes=vmem_limit),
    )(x2, pw)
    # Channel layout of out5 is (c, off): a pure contiguous reshape gives the
    # 16*c + off ordering, identical to PyTorch's two consecutive squeezes.
    return out5.reshape(b, c * 16, h4, w4)


if __name__ == "__main__":
    key = jax.random.PRNGKey(0)

    # Small shape from the module spec (h4 % 8 != 0 -> per-channel store path).
    x = jax.random.normal(key, (2, 4, 16, 16), dtype=jnp.float32)
    out = jax.block_until_ready(glow_intermediate_forward(x))
    ref = glow_intermediate_ref(x)
    assert out.shape == (2, 64, 4, 4), out.shape
    np.testing.assert_allclose(np.asarray(out), np.asarray(ref), rtol=1e-6, atol=1e-6)

    # Non-square shape exercising the tile-aligned (h4 % 8 == 0) store path.
    x2 = jax.random.normal(jax.random.PRNGKey(1), (1, 3, 32, 40), dtype=jnp.float32)
    out2 = jax.block_until_ready(glow_intermediate_forward(x2))
    ref2 = glow_intermediate_ref(x2)
    assert out2.shape == (1, 48, 8, 10), out2.shape
    np.testing.assert_allclose(np.asarray(out2), np.asarray(ref2), rtol=1e-6, atol=1e-6)

    print("KERNEL_OK")
</pallas_src>

<mosaic_0001>
module attributes {stable_mosaic.version = 11 : i64} {
  func.func @_double_squeeze_kernel(%arg0: i32, %arg1: i32, %arg2: memref<1x64x16xf32, #tpu.memory_space<vmem>>, %arg3: memref<16x16xf32, #tpu.memory_space<vmem>>, %arg4: memref<1x4x16x4x4xf32, #tpu.memory_space<vmem>>) attributes {dimension_semantics = [#tpu.dimension_semantics<parallel>, #tpu.dimension_semantics<parallel>], iteration_bounds = array<i64: 2, 1>, scalar_prefetch = 0 : i64, scratch_operands = 0 : i64, tpu.core_type = #tpu.core_type<tc>, window_params = [{transform_indices = @transform_0, window_bounds = array<i64: 1, 64, 16>}, {pipeline_mode = #tpu.pipeline_mode<synchronous>, transform_indices = @transform_1, window_bounds = array<i64: 16, 16>}, {transform_indices = @transform_2, window_bounds = array<i64: 1, 4, 16, 4, 4>}]} {
    %c0 = arith.constant 0 : index
    %c0_0 = arith.constant 0 : index
    %c0_1 = arith.constant 0 : index
    %0 = tpu.strided_load %arg2[%c0, %c0_0, %c0_1] {strides = array<i32: 1, 4, 1>} : memref<1x64x16xf32, #tpu.memory_space<vmem>>, vector<1x16x16xf32>
    %1 = vector.shape_cast %0 : vector<1x16x16xf32> to vector<16x16xf32>
    %c0_2 = arith.constant 0 : index
    %c0_3 = arith.constant 0 : index
    %2 = vector.load %arg3[%c0_2, %c0_3] : memref<16x16xf32, #tpu.memory_space<vmem>>, vector<16x16xf32>
    %cst = arith.constant dense<0.000000e+00> : vector<16x16xf32>
    %3 = tpu.matmul %1, %2, %cst {dimension_numbers = #tpu.dot_dimension_numbers<[1], [0], [0], [1], [0, 0, 1, 1], [], []>, precision = #tpu.contract_precision<fp32>} : vector<16x16xf32>, vector<16x16xf32>, vector<16x16xf32> -> vector<16x16xf32>
    %4 = vector.extract_strided_slice %3 {offsets = [0, 0], sizes = [4, 4], strides = [1, 1]} : vector<16x16xf32> to vector<4x4xf32>
    %c0_4 = arith.constant 0 : index
    %c0_5 = arith.constant 0 : index
    %c0_6 = arith.constant 0 : index
    %c0_7 = arith.constant 0 : index
    %c0_8 = arith.constant 0 : index
    %5 = vector.load %arg4[%c0_4, %c0_5, %c0_6, %c0_7, %c0_8] : memref<1x4x16x4x4xf32, #tpu.memory_space<vmem>>, vector<1x1x1x4x4xf32>
    %6 = vector.shape_cast %5 : vector<1x1x1x4x4xf32> to vector<4x4xf32>
    %7 = vector.shape_cast %4 : vector<4x4xf32> to vector<1x1x1x4x4xf32>
    tpu.vector_store %arg4[%c0_4, %c0_5, %c0_6, %c0_7, %c0_8], %7 {strides = array<i32>} : memref<1x4x16x4x4xf32, #tpu.memory_space<vmem>>, vector<1x1x1x4x4xf32>,
    %8 = vector.extract_strided_slice %3 {offsets = [4, 0], sizes = [4, 4], strides = [1, 1]} : vector<16x16xf32> to vector<4x4xf32>
    %c0_9 = arith.constant 0 : index
    %c1 = arith.constant 1 : index
    %c0_10 = arith.constant 0 : index
    %c0_11 = arith.constant 0 : index
    %c0_12 = arith.constant 0 : index
    %9 = vector.load %arg4[%c0_9, %c1, %c0_10, %c0_11, %c0_12] : memref<1x4x16x4x4xf32, #tpu.memory_space<vmem>>, vector<1x1x1x4x4xf32>
    %10 = vector.shape_cast %9 : vector<1x1x1x4x4xf32> to vector<4x4xf32>
    %11 = vector.shape_cast %8 : vector<4x4xf32> to vector<1x1x1x4x4xf32>
    tpu.vector_store %arg4[%c0_9, %c1, %c0_10, %c0_11, %c0_12], %11 {strides = array<i32>} : memref<1x4x16x4x4xf32, #tpu.memory_space<vmem>>, vector<1x1x1x4x4xf32>,
    %12 = vector.extract_strided_slice %3 {offsets = [8, 0], sizes = [4, 4], strides = [1, 1]} : vector<16x16xf32> to vector<4x4xf32>
    %c0_13 = arith.constant 0 : index
    %c2 = arith.constant 2 : index
    %c0_14 = arith.constant 0 : index
    %c0_15 = arith.constant 0 : index
    %c0_16 = arith.constant 0 : index
    %13 = vector.load %arg4[%c0_13, %c2, %c0_14, %c0_15, %c0_16] : memref<1x4x16x4x4xf32, #tpu.memory_space<vmem>>, vector<1x1x1x4x4xf32>
    %14 = vector.shape_cast %13 : vector<1x1x1x4x4xf32> to vector<4x4xf32>
    %15 = vector.shape_cast %12 : vector<4x4xf32> to vector<1x1x1x4x4xf32>
    tpu.vector_store %arg4[%c0_13, %c2, %c0_14, %c0_15, %c0_16], %15 {strides = array<i32>} : memref<1x4x16x4x4xf32, #tpu.memory_space<vmem>>, vector<1x1x1x4x4xf32>,
    %16 = vector.extract_strided_slice %3 {offsets = [12, 0], sizes = [4, 4], strides = [1, 1]} : vector<16x16xf32> to vector<4x4xf32>
    %c0_17 = arith.constant 0 : index
    %c3 = arith.constant 3 : index
    %c0_18 = arith.constant 0 : index
    %c0_19 = arith.constant 0 : index
    %c0_20 = arith.constant 0 : index
    %17 = vector.load %arg4[%c0_17, %c3, %c0_18, %c0_19, %c0_20] : memref<1x4x16x4x4xf32, #tpu.memory_space<vmem>>, vector<1x1x1x4x4xf32>
    %18 = vector.shape_cast %17 : vector<1x1x1x4x4xf32> to vector<4x4xf32>
    %19 = vector.shape_cast %16 : vector<4x4xf32> to vector<1x1x1x4x4xf32>
    tpu.vector_store %arg4[%c0_17, %c3, %c0_18, %c0_19, %c0_20], %19 {strides = array<i32>} : memref<1x4x16x4x4xf32, #tpu.memory_space<vmem>>, vector<1x1x1x4x4xf32>,
    %20 = vector.extract_strided_slice %3 {offsets = [0, 4], sizes = [4, 4], strides = [1, 1]} : vector<16x16xf32> to vector<4x4xf32>
    %c0_21 = arith.constant 0 : index
    %c0_22 = arith.constant 0 : index
    %c4 = arith.constant 4 : index
    %c0_23 = arith.constant 0 : index
    %c0_24 = arith.constant 0 : index
    %21 = vector.load %arg4[%c0_21, %c0_22, %c4, %c0_23, %c0_24] : memref<1x4x16x4x4xf32, #tpu.memory_space<vmem>>, vector<1x1x1x4x4xf32>
    %22 = vector.shape_cast %21 : vector<1x1x1x4x4xf32> to vector<4x4xf32>
    %23 = vector.shape_cast %20 : vector<4x4xf32> to vector<1x1x1x4x4xf32>
    tpu.vector_store %arg4[%c0_21, %c0_22, %c4, %c0_23, %c0_24], %23 {strides = array<i32>} : memref<1x4x16x4x4xf32, #tpu.memory_space<vmem>>, vector<1x1x1x4x4xf32>,
    %24 = vector.extract_strided_slice %3 {offsets = [4, 4], sizes = [4, 4], strides = [1, 1]} : vector<16x16xf32> to vector<4x4xf32>
    %c0_25 = arith.constant 0 : index
    %c1_26 = arith.constant 1 : index
    %c4_27 = arith.constant 4 : index
    %c0_28 = arith.constant 0 : index
    %c0_29 = arith.constant 0 : index
    %25 = vector.load %arg4[%c0_25, %c1_26, %c4_27, %c0_28, %c0_29] : memref<1x4x16x4x4xf32, #tpu.memory_space<vmem>>, vector<1x1x1x4x4xf32>
    %26 = vector.shape_cast %25 : vector<1x1x1x4x4xf32> to vector<4x4xf32>
    %27 = vector.shape_cast %24 : vector<4x4xf32> to vector<1x1x1x4x4xf32>
    tpu.vector_store %arg4[%c0_25, %c1_26, %c4_27, %c0_28, %c0_29], %27 {strides = array<i32>} : memref<1x4x16x4x4xf32, #tpu.memory_space<vmem>>, vector<1x1x1x4x4xf32>,
    %28 = vector.extract_strided_slice %3 {offsets = [8, 4], sizes = [4, 4], strides = [1, 1]} : vector<16x16xf32> to vector<4x4xf32>
    %c0_30 = arith.constant 0 : index
    %c2_31 = arith.constant 2 : index
    %c4_32 = arith.constant 4 : index
    %c0_33 = arith.constant 0 : index
    %c0_34 = arith.constant 0 : index
    %29 = vector.load %arg4[%c0_30, %c2_31, %c4_32, %c0_33, %c0_34] : memref<1x4x16x4x4xf32, #tpu.memory_space<vmem>>, vector<1x1x1x4x4xf32>
    %30 = vector.shape_cast %29 : vector<1x1x1x4x4xf32> to vector<4x4xf32>
    %31 = vector.shape_cast %28 : vector<4x4xf32> to vector<1x1x1x4x4xf32>
    tpu.vector_store %arg4[%c0_30, %c2_31, %c4_32, %c0_33, %c0_34], %31 {strides = array<i32>} : memref<1x4x16x4x4xf32, #tpu.memory_space<vmem>>, vector<1x1x1x4x4xf32>,
    %32 = vector.extract_strided_slice %3 {offsets = [12, 4], sizes = [4, 4], strides = [1, 1]} : vector<16x16xf32> to vector<4x4xf32>
    %c0_35 = arith.constant 0 : index
    %c3_36 = arith.constant 3 : index
    %c4_37 = arith.constant 4 : index
    %c0_38 = arith.constant 0 : index
    %c0_39 = arith.constant 0 : index
    %33 = vector.load %arg4[%c0_35, %c3_36, %c4_37, %c0_38, %c0_39] : memref<1x4x16x4x4xf32, #tpu.memory_space<vmem>>, vector<1x1x1x4x4xf32>
    %34 = vector.shape_cast %33 : vector<1x1x1x4x4xf32> to vector<4x4xf32>
    %35 = vector.shape_cast %32 : vector<4x4xf32> to vector<1x1x1x4x4xf32>
    tpu.vector_store %arg4[%c0_35, %c3_36, %c4_37, %c0_38, %c0_39], %35 {strides = array<i32>} : memref<1x4x16x4x4xf32, #tpu.memory_space<vmem>>, vector<1x1x1x4x4xf32>,
    %36 = vector.extract_strided_slice %3 {offsets = [0, 8], sizes = [4, 4], strides = [1, 1]} : vector<16x16xf32> to vector<4x4xf32>
    %c0_40 = arith.constant 0 : index
    %c0_41 = arith.constant 0 : index
    %c1_42 = arith.constant 1 : index
    %c0_43 = arith.constant 0 : index
    %c0_44 = arith.constant 0 : index
    %37 = vector.load %arg4[%c0_40, %c0_41, %c1_42, %c0_43, %c0_44] : memref<1x4x16x4x4xf32, #tpu.memory_space<vmem>>, vector<1x1x1x4x4xf32>
    %38 = vector.shape_cast %37 : vector<1x1x1x4x4xf32> to vector<4x4xf32>
    %39 = vector.shape_cast %36 : vector<4x4xf32> to vector<1x1x1x4x4xf32>
    tpu.vector_store %arg4[%c0_40, %c0_41, %c1_42, %c0_43, %c0_44], %39 {strides = array<i32>} : memref<1x4x16x4x4xf32, #tpu.memory_space<vmem>>, vector<1x1x1x4x4xf32>,
    %40 = vector.extract_strided_slice %3 {offsets = [4, 8], sizes = [4, 4], strides = [1, 1]} : vector<16x16xf32> to vector<4x4xf32>
    %c0_45 = arith.constant 0 : index
    %c1_46 = arith.constant 1 : index
    %c1_47 = arith.constant 1 : index
    %c0_48 = arith.constant 0 : index
    %c0_49 = arith.constant 0 : index
    %41 = vector.load %arg4[%c0_45, %c1_46, %c1_47, %c0_48, %c0_49] : memref<1x4x16x4x4xf32, #tpu.memory_space<vmem>>, vector<1x1x1x4x4xf32>
    %42 = vector.shape_cast %41 : vector<1x1x1x4x4xf32> to vector<4x4xf32>
    %43 = vector.shape_cast %40 : vector<4x4xf32> to vector<1x1x1x4x4xf32>
    tpu.vector_store %arg4[%c0_45, %c1_46, %c1_47, %c0_48, %c0_49], %43 {strides = array<i32>} : memref<1x4x16x4x4xf32, #tpu.memory_space<vmem>>, vector<1x1x1x4x4xf32>,
    %44 = vector.extract_strided_slice %3 {offsets = [8, 8], sizes = [4, 4], strides = [1, 1]} : vector<16x16xf32> to vector<4x4xf32>
    %c0_50 = arith.constant 0 : index
    %c2_51 = arith.constant 2 : index
    %c1_52 = arith.constant 1 : index
    %c0_53 = arith.constant 0 : index
    %c0_54 = arith.constant 0 : index
    %45 = vector.load %arg4[%c0_50, %c2_51, %c1_52, %c0_53, %c0_54] : memref<1x4x16x4x4xf32, #tpu.memory_space<vmem>>, vector<1x1x1x4x4xf32>
    %46 = vector.shape_cast %45 : vector<1x1x1x4x4xf32> to vector<4x4xf32>
    %47 = vector.shape_cast %44 : vector<4x4xf32> to vector<1x1x1x4x4xf32>
    tpu.vector_store %arg4[%c0_50, %c2_51, %c1_52, %c0_53, %c0_54], %47 {strides = array<i32>} : memref<1x4x16x4x4xf32, #tpu.memory_space<vmem>>, vector<1x1x1x4x4xf32>,
    %48 = vector.extract_strided_slice %3 {offsets = [12, 8], sizes = [4, 4], strides = [1, 1]} : vector<16x16xf32> to vector<4x4xf32>
    %c0_55 = arith.constant 0 : index
    %c3_56 = arith.constant 3 : index
    %c1_57 = arith.constant 1 : index
    %c0_58 = arith.constant 0 : index
    %c0_59 = arith.constant 0 : index
    %49 = vector.load %arg4[%c0_55, %c3_56, %c1_57, %c0_58, %c0_59] : memref<1x4x16x4x4xf32, #tpu.memory_space<vmem>>, vector<1x1x1x4x4xf32>
    %50 = vector.shape_cast %49 : vector<1x1x1x4x4xf32> to vector<4x4xf32>
    %51 = vector.shape_cast %48 : vector<4x4xf32> to vector<1x1x1x4x4xf32>
    tpu.vector_store %arg4[%c0_55, %c3_56, %c1_57, %c0_58, %c0_59], %51 {strides = array<i32>} : memref<1x4x16x4x4xf32, #tpu.memory_space<vmem>>, vector<1x1x1x4x4xf32>,
    %52 = vector.extract_strided_slice %3 {offsets = [0, 12], sizes = [4, 4], strides = [1, 1]} : vector<16x16xf32> to vector<4x4xf32>
    %c0_60 = arith.constant 0 : index
    %c0_61 = arith.constant 0 : index
    %c5 = arith.constant 5 : index
    %c0_62 = arith.constant 0 : index
    %c0_63 = arith.constant 0 : index
    %53 = vector.load %arg4[%c0_60, %c0_61, %c5, %c0_62, %c0_63] : memref<1x4x16x4x4xf32, #tpu.memory_space<vmem>>, vector<1x1x1x4x4xf32>
    %54 = vector.shape_cast %53 : vector<1x1x1x4x4xf32> to vector<4x4xf32>
    %55 = vector.shape_cast %52 : vector<4x4xf32> to vector<1x1x1x4x4xf32>
    tpu.vector_store %arg4[%c0_60, %c0_61, %c5, %c0_62, %c0_63], %55 {strides = array<i32>} : memref<1x4x16x4x4xf32, #tpu.memory_space<vmem>>, vector<1x1x1x4x4xf32>,
    %56 = vector.extract_strided_slice %3 {offsets = [4, 12], sizes = [4, 4], strides = [1, 1]} : vector<16x16xf32> to vector<4x4xf32>
    %c0_64 = arith.constant 0 : index
    %c1_65 = arith.constant 1 : index
    %c5_66 = arith.constant 5 : index
    %c0_67 = arith.constant 0 : index
    %c0_68 = arith.constant 0 : index
    %57 = vector.load %arg4[%c0_64, %c1_65, %c5_66, %c0_67, %c0_68] : memref<1x4x16x4x4xf32, #tpu.memory_space<vmem>>, vector<1x1x1x4x4xf32>
    %58 = vector.shape_cast %57 : vector<1x1x1x4x4xf32> to vector<4x4xf32>
    %59 = vector.shape_cast %56 : vector<4x4xf32> to vector<1x1x1x4x4xf32>
    tpu.vector_store %arg4[%c0_64, %c1_65, %c5_66, %c0_67, %c0_68], %59 {strides = array<i32>} : memref<1x4x16x4x4xf32, #tpu.memory_space<vmem>>, vector<1x1x1x4x4xf32>,
    %60 = vector.extract_strided_slice %3 {offsets = [8, 12], sizes = [4, 4], strides = [1, 1]} : vector<16x16xf32> to vector<4x4xf32>
    %c0_69 = arith.constant 0 : index
    %c2_70 = arith.constant 2 : index
    %c5_71 = arith.constant 5 : index
    %c0_72 = arith.constant 0 : index
    %c0_73 = arith.constant 0 : index
    %61 = vector.load %arg4[%c0_69, %c2_70, %c5_71, %c0_72, %c0_73] : memref<1x4x16x4x4xf32, #tpu.memory_space<vmem>>, vector<1x1x1x4x4xf32>
    %62 = vector.shape_cast %61 : vector<1x1x1x4x4xf32> to vector<4x4xf32>
    %63 = vector.shape_cast %60 : vector<4x4xf32> to vector<1x1x1x4x4xf32>
    tpu.vector_store %arg4[%c0_69, %c2_70, %c5_71, %c0_72, %c0_73], %63 {strides = array<i32>} : memref<1x4x16x4x4xf32, #tpu.memory_space<vmem>>, vector<1x1x1x4x4xf32>,
    %64 = vector.extract_strided_slice %3 {offsets = [12, 12], sizes = [4, 4], strides = [1, 1]} : vector<16x16xf32> to vector<4x4xf32>
    %c0_74 = arith.constant 0 : index
    %c3_75 = arith.constant 3 : index
    %c5_76 = arith.constant 5 : index
    %c0_77 = arith.constant 0 : index
    %c0_78 = arith.constant 0 : index
    %65 = vector.load %arg4[%c0_74, %c3_75, %c5_76, %c0_77, %c0_78] : memref<1x4x16x4x4xf32, #tpu.memory_space<vmem>>, vector<1x1x1x4x4xf32>
    %66 = vector.shape_cast %65 : vector<1x1x1x4x4xf32> to vector<4x4xf32>
    %67 = vector.shape_cast %64 : vector<4x4xf32> to vector<1x1x1x4x4xf32>
    tpu.vector_store %arg4[%c0_74, %c3_75, %c5_76, %c0_77, %c0_78], %67 {strides = array<i32>} : memref<1x4x16x4x4xf32, #tpu.memory_space<vmem>>, vector<1x1x1x4x4xf32>,
    %c0_79 = arith.constant 0 : index
    %c1_80 = arith.constant 1 : index
    %c0_81 = arith.constant 0 : index
    %68 = tpu.strided_load %arg2[%c0_79, %c1_80, %c0_81] {strides = array<i32: 1, 4, 1>} : memref<1x64x16xf32, #tpu.memory_space<vmem>>, vector<1x16x16xf32>
    %69 = vector.shape_cast %68 : vector<1x16x16xf32> to vector<16x16xf32>
    %c0_82 = arith.constant 0 : index
    %c0_83 = arith.constant 0 : index
    %70 = vector.load %arg3[%c0_82, %c0_83] : memref<16x16xf32, #tpu.memory_space<vmem>>, vector<16x16xf32>
    %cst_84 = arith.constant dense<0.000000e+00> : vector<16x16xf32>
    %71 = tpu.matmul %69, %70, %cst_84 {dimension_numbers = #tpu.dot_dimension_numbers<[1], [0], [0], [1], [0, 0, 1, 1], [], []>, precision = #tpu.contract_precision<fp32>} : vector<16x16xf32>, vector<16x16xf32>, vector<16x16xf32> -> vector<16x16xf32>
    %72 = vector.extract_strided_slice %71 {offsets = [0, 0], sizes = [4, 4], strides = [1, 1]} : vector<16x16xf32> to vector<4x4xf32>
    %c0_85 = arith.constant 0 : index
    %c0_86 = arith.constant 0 : index
    %c8 = arith.constant 8 : index
    %c0_87 = arith.constant 0 : index
    %c0_88 = arith.constant 0 : index
    %73 = vector.load %arg4[%c0_85, %c0_86, %c8, %c0_87, %c0_88] : memref<1x4x16x4x4xf32, #tpu.memory_space<vmem>>, vector<1x1x1x4x4xf32>
    %74 = vector.shape_cast %73 : vector<1x1x1x4x4xf32> to vector<4x4xf32>
    %75 = vector.shape_cast %72 : vector<4x4xf32> to vector<1x1x1x4x4xf32>
    tpu.vector_store %arg4[%c0_85, %c0_86, %c8, %c0_87, %c0_88], %75 {strides = array<i32>} : memref<1x4x16x4x4xf32, #tpu.memory_space<vmem>>, vector<1x1x1x4x4xf32>,
    %76 = vector.extract_strided_slice %71 {offsets = [4, 0], sizes = [4, 4], strides = [1, 1]} : vector<16x16xf32> to vector<4x4xf32>
    %c0_89 = arith.constant 0 : index
    %c1_90 = arith.constant 1 : index
    %c8_91 = arith.constant 8 : index
    %c0_92 = arith.constant 0 : index
    %c0_93 = arith.constant 0 : index
    %77 = vector.load %arg4[%c0_89, %c1_90, %c8_91, %c0_92, %c0_93] : memref<1x4x16x4x4xf32, #tpu.memory_space<vmem>>, vector<1x1x1x4x4xf32>
    %78 = vector.shape_cast %77 : vector<1x1x1x4x4xf32> to vector<4x4xf32>
    %79 = vector.shape_cast %76 : vector<4x4xf32> to vector<1x1x1x4x4xf32>
    tpu.vector_store %arg4[%c0_89, %c1_90, %c8_91, %c0_92, %c0_93], %79 {strides = array<i32>} : memref<1x4x16x4x4xf32, #tpu.memory_space<vmem>>, vector<1x1x1x4x4xf32>,
    %80 = vector.extract_strided_slice %71 {offsets = [8, 0], sizes = [4, 4], strides = [1, 1]} : vector<16x16xf32> to vector<4x4xf32>
    %c0_94 = arith.constant 0 : index
    %c2_95 = arith.constant 2 : index
    %c8_96 = arith.constant 8 : index
    %c0_97 = arith.constant 0 : index
    %c0_98 = arith.constant 0 : index
    %81 = vector.load %arg4[%c0_94, %c2_95, %c8_96, %c0_97, %c0_98] : memref<1x4x16x4x4xf32, #tpu.memory_space<vmem>>, vector<1x1x1x4x4xf32>
    %82 = vector.shape_cast %81 : vector<1x1x1x4x4xf32> to vector<4x4xf32>
    %83 = vector.shape_cast %80 : vector<4x4xf32> to vector<1x1x1x4x4xf32>
    tpu.vector_store %arg4[%c0_94, %c2_95, %c8_96, %c0_97, %c0_98], %83 {strides = array<i32>} : memref<1x4x16x4x4xf32, #tpu.memory_space<vmem>>, vector<1x1x1x4x4xf32>,
    %84 = vector.extract_strided_slice %71 {offsets = [12, 0], sizes = [4, 4], strides = [1, 1]} : vector<16x16xf32> to vector<4x4xf32>
    %c0_99 = arith.constant 0 : index
    %c3_100 = arith.constant 3 : index
    %c8_101 = arith.constant 8 : index
    %c0_102 = arith.constant 0 : index
    %c0_103 = arith.constant 0 : index
    %85 = vector.load %arg4[%c0_99, %c3_100, %c8_101, %c0_102, %c0_103] : memref<1x4x16x4x4xf32, #tpu.memory_space<vmem>>, vector<1x1x1x4x4xf32>
    %86 = vector.shape_cast %85 : vector<1x1x1x4x4xf32> to vector<4x4xf32>
    %87 = vector.shape_cast %84 : vector<4x4xf32> to vector<1x1x1x4x4xf32>
    tpu.vector_store %arg4[%c0_99, %c3_100, %c8_101, %c0_102, %c0_103], %87 {strides = array<i32>} : memref<1x4x16x4x4xf32, #tpu.memory_space<vmem>>, vector<1x1x1x4x4xf32>,
    %88 = vector.extract_strided_slice %71 {offsets = [0, 4], sizes = [4, 4], strides = [1, 1]} : vector<16x16xf32> to vector<4x4xf32>
    %c0_104 = arith.constant 0 : index
    %c0_105 = arith.constant 0 : index
    %c12 = arith.constant 12 : index
    %c0_106 = arith.constant 0 : index
    %c0_107 = arith.constant 0 : index
    %89 = vector.load %arg4[%c0_104, %c0_105, %c12, %c0_106, %c0_107] : memref<1x4x16x4x4xf32, #tpu.memory_space<vmem>>, vector<1x1x1x4x4xf32>
    %90 = vector.shape_cast %89 : vector<1x1x1x4x4xf32> to vector<4x4xf32>
    %91 = vector.shape_cast %88 : vector<4x4xf32> to vector<1x1x1x4x4xf32>
    tpu.vector_store %arg4[%c0_104, %c0_105, %c12, %c0_106, %c0_107], %91 {strides = array<i32>} : memref<1x4x16x4x4xf32, #tpu.memory_space<vmem>>, vector<1x1x1x4x4xf32>,
    %92 = vector.extract_strided_slice %71 {offsets = [4, 4], sizes = [4, 4], strides = [1, 1]} : vector<16x16xf32> to vector<4x4xf32>
    %c0_108 = arith.constant 0 : index
    %c1_109 = arith.constant 1 : index
    %c12_110 = arith.constant 12 : index
    %c0_111 = arith.constant 0 : index
    %c0_112 = arith.constant 0 : index
    %93 = vector.load %arg4[%c0_108, %c1_109, %c12_110, %c0_111, %c0_112] : memref<1x4x16x4x4xf32, #tpu.memory_space<vmem>>, vector<1x1x1x4x4xf32>
    %94 = vector.shape_cast %93 : vector<1x1x1x4x4xf32> to vector<4x4xf32>
    %95 = vector.shape_cast %92 : vector<4x4xf32> to vector<1x1x1x4x4xf32>
    tpu.vector_store %arg4[%c0_108, %c1_109, %c12_110, %c0_111, %c0_112], %95 {strides = array<i32>} : memref<1x4x16x4x4xf32, #tpu.memory_space<vmem>>, vector<1x1x1x4x4xf32>,
    %96 = vector.extract_strided_slice %71 {offsets = [8, 4], sizes = [4, 4], strides = [1, 1]} : vector<16x16xf32> to vector<4x4xf32>
    %c0_113 = arith.constant 0 : index
    %c2_114 = arith.constant 2 : index
    %c12_115 = arith.constant 12 : index
    %c0_116 = arith.constant 0 : index
    %c0_117 = arith.constant 0 : index
    %97 = vector.load %arg4[%c0_113, %c2_114, %c12_115, %c0_116, %c0_117] : memref<1x4x16x4x4xf32, #tpu.memory_space<vmem>>, vector<1x1x1x4x4xf32>
    %98 = vector.shape_cast %97 : vector<1x1x1x4x4xf32> to vector<4x4xf32>
    %99 = vector.shape_cast %96 : vector<4x4xf32> to vector<1x1x1x4x4xf32>
    tpu.vector_store %arg4[%c0_113, %c2_114, %c12_115, %c0_116, %c0_117], %99 {strides = array<i32>} : memref<1x4x16x4x4xf32, #tpu.memory_space<vmem>>, vector<1x1x1x4x4xf32>,
    %100 = vector.extract_strided_slice %71 {offsets = [12, 4], sizes = [4, 4], strides = [1, 1]} : vector<16x16xf32> to vector<4x4xf32>
    %c0_118 = arith.constant 0 : index
    %c3_119 = arith.constant 3 : index
    %c12_120 = arith.constant 12 : index
    %c0_121 = arith.constant 0 : index
    %c0_122 = arith.constant 0 : index
    %101 = vector.load %arg4[%c0_118, %c3_119, %c12_120, %c0_121, %c0_122] : memref<1x4x16x4x4xf32, #tpu.memory_space<vmem>>, vector<1x1x1x4x4xf32>
    %102 = vector.shape_cast %101 : vector<1x1x1x4x4xf32> to vector<4x4xf32>
    %103 = vector.shape_cast %100 : vector<4x4xf32> to vector<1x1x1x4x4xf32>
    tpu.vector_store %arg4[%c0_118, %c3_119, %c12_120, %c0_121, %c0_122], %103 {strides = array<i32>} : memref<1x4x16x4x4xf32, #tpu.memory_space<vmem>>, vector<1x1x1x4x4xf32>,
    %104 = vector.extract_strided_slice %71 {offsets = [0, 8], sizes = [4, 4], strides = [1, 1]} : vector<16x16xf32> to vector<4x4xf32>
    %c0_123 = arith.constant 0 : index
    %c0_124 = arith.constant 0 : index
    %c9 = arith.constant 9 : index
    %c0_125 = arith.constant 0 : index
    %c0_126 = arith.constant 0 : index
    %105 = vector.load %arg4[%c0_123, %c0_124, %c9, %c0_125, %c0_126] : memref<1x4x16x4x4xf32, #tpu.memory_space<vmem>>, vector<1x1x1x4x4xf32>
    %106 = vector.shape_cast %105 : vector<1x1x1x4x4xf32> to vector<4x4xf32>
    %107 = vector.shape_cast %104 : vector<4x4xf32> to vector<1x1x1x4x4xf32>
    tpu.vector_store %arg4[%c0_123, %c0_124, %c9, %c0_125, %c0_126], %107 {strides = array<i32>} : memref<1x4x16x4x4xf32, #tpu.memory_space<vmem>>, vector<1x1x1x4x4xf32>,
    %108 = vector.extract_strided_slice %71 {offsets = [4, 8], sizes = [4, 4], strides = [1, 1]} : vector<16x16xf32> to vector<4x4xf32>
    %c0_127 = arith.constant 0 : index
    %c1_128 = arith.constant 1 : index
    %c9_129 = arith.constant 9 : index
    %c0_130 = arith.constant 0 : index
    %c0_131 = arith.constant 0 : index
    %109 = vector.load %arg4[%c0_127, %c1_128, %c9_129, %c0_130, %c0_131] : memref<1x4x16x4x4xf32, #tpu.memory_space<vmem>>, vector<1x1x1x4x4xf32>
    %110 = vector.shape_cast %109 : vector<1x1x1x4x4xf32> to vector<4x4xf32>
    %111 = vector.shape_cast %108 : vector<4x4xf32> to vector<1x1x1x4x4xf32>
    tpu.vector_store %arg4[%c0_127, %c1_128, %c9_129, %c0_130, %c0_131], %111 {strides = array<i32>} : memref<1x4x16x4x4xf32, #tpu.memory_space<vmem>>, vector<1x1x1x4x4xf32>,
    %112 = vector.extract_strided_slice %71 {offsets = [8, 8], sizes = [4, 4], strides = [1, 1]} : vector<16x16xf32> to vector<4x4xf32>
    %c0_132 = arith.constant 0 : index
    %c2_133 = arith.constant 2 : index
    %c9_134 = arith.constant 9 : index
    %c0_135 = arith.constant 0 : index
    %c0_136 = arith.constant 0 : index
    %113 = vector.load %arg4[%c0_132, %c2_133, %c9_134, %c0_135, %c0_136] : memref<1x4x16x4x4xf32, #tpu.memory_space<vmem>>, vector<1x1x1x4x4xf32>
    %114 = vector.shape_cast %113 : vector<1x1x1x4x4xf32> to vector<4x4xf32>
    %115 = vector.shape_cast %112 : vector<4x4xf32> to vector<1x1x1x4x4xf32>
    tpu.vector_store %arg4[%c0_132, %c2_133, %c9_134, %c0_135, %c0_136], %115 {strides = array<i32>} : memref<1x4x16x4x4xf32, #tpu.memory_space<vmem>>, vector<1x1x1x4x4xf32>,
    %116 = vector.extract_strided_slice %71 {offsets = [12, 8], sizes = [4, 4], strides = [1, 1]} : vector<16x16xf32> to vector<4x4xf32>
    %c0_137 = arith.constant 0 : index
    %c3_138 = arith.constant 3 : index
    %c9_139 = arith.constant 9 : index
    %c0_140 = arith.constant 0 : index
    %c0_141 = arith.constant 0 : index
    %117 = vector.load %arg4[%c0_137, %c3_138, %c9_139, %c0_140, %c0_141] : memref<1x4x16x4x4xf32, #tpu.memory_space<vmem>>, vector<1x1x1x4x4xf32>
    %118 = vector.shape_cast %117 : vector<1x1x1x4x4xf32> to vector<4x4xf32>
    %119 = vector.shape_cast %116 : vector<4x4xf32> to vector<1x1x1x4x4xf32>
    tpu.vector_store %arg4[%c0_137, %c3_138, %c9_139, %c0_140, %c0_141], %119 {strides = array<i32>} : memref<1x4x16x4x4xf32, #tpu.memory_space<vmem>>, vector<1x1x1x4x4xf32>,
    %120 = vector.extract_strided_slice %71 {offsets = [0, 12], sizes = [4, 4], strides = [1, 1]} : vector<16x16xf32> to vector<4x4xf32>
    %c0_142 = arith.constant 0 : index
    %c0_143 = arith.constant 0 : index
    %c13 = arith.constant 13 : index
    %c0_144 = arith.constant 0 : index
    %c0_145 = arith.constant 0 : index
    %121 = vector.load %arg4[%c0_142, %c0_143, %c13, %c0_144, %c0_145] : memref<1x4x16x4x4xf32, #tpu.memory_space<vmem>>, vector<1x1x1x4x4xf32>
    %122 = vector.shape_cast %121 : vector<1x1x1x4x4xf32> to vector<4x4xf32>
    %123 = vector.shape_cast %120 : vector<4x4xf32> to vector<1x1x1x4x4xf32>
    tpu.vector_store %arg4[%c0_142, %c0_143, %c13, %c0_144, %c0_145], %123 {strides = array<i32>} : memref<1x4x16x4x4xf32, #tpu.memory_space<vmem>>, vector<1x1x1x4x4xf32>,
    %124 = vector.extract_strided_slice %71 {offsets = [4, 12], sizes = [4, 4], strides = [1, 1]} : vector<16x16xf32> to vector<4x4xf32>
    %c0_146 = arith.constant 0 : index
    %c1_147 = arith.constant 1 : index
    %c13_148 = arith.constant 13 : index
    %c0_149 = arith.constant 0 : index
    %c0_150 = arith.constant 0 : index
    %125 = vector.load %arg4[%c0_146, %c1_147, %c13_148, %c0_149, %c0_150] : memref<1x4x16x4x4xf32, #tpu.memory_space<vmem>>, vector<1x1x1x4x4xf32>
    %126 = vector.shape_cast %125 : vector<1x1x1x4x4xf32> to vector<4x4xf32>
    %127 = vector.shape_cast %124 : vector<4x4xf32> to vector<1x1x1x4x4xf32>
    tpu.vector_store %arg4[%c0_146, %c1_147, %c13_148, %c0_149, %c0_150], %127 {strides = array<i32>} : memref<1x4x16x4x4xf32, #tpu.memory_space<vmem>>, vector<1x1x1x4x4xf32>,
    %128 = vector.extract_strided_slice %71 {offsets = [8, 12], sizes = [4, 4], strides = [1, 1]} : vector<16x16xf32> to vector<4x4xf32>
    %c0_151 = arith.constant 0 : index
    %c2_152 = arith.constant 2 : index
    %c13_153 = arith.constant 13 : index
    %c0_154 = arith.constant 0 : index
    %c0_155 = arith.constant 0 : index
    %129 = vector.load %arg4[%c0_151, %c2_152, %c13_153, %c0_154, %c0_155] : memref<1x4x16x4x4xf32, #tpu.memory_space<vmem>>, vector<1x1x1x4x4xf32>
    %130 = vector.shape_cast %129 : vector<1x1x1x4x4xf32> to vector<4x4xf32>
    %131 = vector.shape_cast %128 : vector<4x4xf32> to vector<1x1x1x4x4xf32>
    tpu.vector_store %arg4[%c0_151, %c2_152, %c13_153, %c0_154, %c0_155], %131 {strides = array<i32>} : memref<1x4x16x4x4xf32, #tpu.memory_space<vmem>>, vector<1x1x1x4x4xf32>,
    %132 = vector.extract_strided_slice %71 {offsets = [12, 12], sizes = [4, 4], strides = [1, 1]} : vector<16x16xf32> to vector<4x4xf32>
    %c0_156 = arith.constant 0 : index
    %c3_157 = arith.constant 3 : index
    %c13_158 = arith.constant 13 : index
    %c0_159 = arith.constant 0 : index
    %c0_160 = arith.constant 0 : index
    %133 = vector.load %arg4[%c0_156, %c3_157, %c13_158, %c0_159, %c0_160] : memref<1x4x16x4x4xf32, #tpu.memory_space<vmem>>, vector<1x1x1x4x4xf32>
    %134 = vector.shape_cast %133 : vector<1x1x1x4x4xf32> to vector<4x4xf32>
    %135 = vector.shape_cast %132 : vector<4x4xf32> to vector<1x1x1x4x4xf32>
    tpu.vector_store %arg4[%c0_156, %c3_157, %c13_158, %c0_159, %c0_160], %135 {strides = array<i32>} : memref<1x4x16x4x4xf32, #tpu.memory_space<vmem>>, vector<1x1x1x4x4xf32>,
    %c0_161 = arith.constant 0 : index
    %c2_162 = arith.constant 2 : index
    %c0_163 = arith.constant 0 : index
    %136 = tpu.strided_load %arg2[%c0_161, %c2_162, %c0_163] {strides = array<i32: 1, 4, 1>} : memref<1x64x16xf32, #tpu.memory_space<vmem>>, vector<1x16x16xf32>
    %137 = vector.shape_cast %136 : vector<1x16x16xf32> to vector<16x16xf32>
    %c0_164 = arith.constant 0 : index
    %c0_165 = arith.constant 0 : index
    %138 = vector.load %arg3[%c0_164, %c0_165] : memref<16x16xf32, #tpu.memory_space<vmem>>, vector<16x16xf32>
    %cst_166 = arith.constant dense<0.000000e+00> : vector<16x16xf32>
    %139 = tpu.matmul %137, %138, %cst_166 {dimension_numbers = #tpu.dot_dimension_numbers<[1], [0], [0], [1], [0, 0, 1, 1], [], []>, precision = #tpu.contract_precision<fp32>} : vector<16x16xf32>, vector<16x16xf32>, vector<16x16xf32> -> vector<16x16xf32>
    %140 = vector.extract_strided_slice %139 {offsets = [0, 0], sizes = [4, 4], strides = [1, 1]} : vector<16x16xf32> to vector<4x4xf32>
    %c0_167 = arith.constant 0 : index
    %c0_168 = arith.constant 0 : index
    %c2_169 = arith.constant 2 : index
    %c0_170 = arith.constant 0 : index
    %c0_171 = arith.constant 0 : index
    %141 = vector.load %arg4[%c0_167, %c0_168, %c2_169, %c0_170, %c0_171] : memref<1x4x16x4x4xf32, #tpu.memory_space<vmem>>, vector<1x1x1x4x4xf32>
    %142 = vector.shape_cast %141 : vector<1x1x1x4x4xf32> to vector<4x4xf32>
    %143 = vector.shape_cast %140 : vector<4x4xf32> to vector<1x1x1x4x4xf32>
    tpu.vector_store %arg4[%c0_167, %c0_168, %c2_169, %c0_170, %c0_171], %143 {strides = array<i32>} : memref<1x4x16x4x4xf32, #tpu.memory_space<vmem>>, vector<1x1x1x4x4xf32>,
    %144 = vector.extract_strided_slice %139 {offsets = [4, 0], sizes = [4, 4], strides = [1, 1]} : vector<16x16xf32> to vector<4x4xf32>
    %c0_172 = arith.constant 0 : index
    %c1_173 = arith.constant 1 : index
    %c2_174 = arith.constant 2 : index
    %c0_175 = arith.constant 0 : index
    %c0_176 = arith.constant 0 : index
    %145 = vector.load %arg4[%c0_172, %c1_173, %c2_174, %c0_175, %c0_176] : memref<1x4x16x4x4xf32, #tpu.memory_space<vmem>>, vector<1x1x1x4x4xf32>
    %146 = vector.shape_cast %145 : vector<1x1x1x4x4xf32> to vector<4x4xf32>
    %147 = vector.shape_cast %144 : vector<4x4xf32> to vector<1x1x1x4x4xf32>
    tpu.vector_store %arg4[%c0_172, %c1_173, %c2_174, %c0_175, %c0_176], %147 {strides = array<i32>} : memref<1x4x16x4x4xf32, #tpu.memory_space<vmem>>, vector<1x1x1x4x4xf32>,
    %148 = vector.extract_strided_slice %139 {offsets = [8, 0], sizes = [4, 4], strides = [1, 1]} : vector<16x16xf32> to vector<4x4xf32>
    %c0_177 = arith.constant 0 : index
    %c2_178 = arith.constant 2 : index
    %c2_179 = arith.constant 2 : index
    %c0_180 = arith.constant 0 : index
    %c0_181 = arith.constant 0 : index
    %149 = vector.load %arg4[%c0_177, %c2_178, %c2_179, %c0_180, %c0_181] : memref<1x4x16x4x4xf32, #tpu.memory_space<vmem>>, vector<1x1x1x4x4xf32>
    %150 = vector.shape_cast %149 : vector<1x1x1x4x4xf32> to vector<4x4xf32>
    %151 = vector.shape_cast %148 : vector<4x4xf32> to vector<1x1x1x4x4xf32>
    tpu.vector_store %arg4[%c0_177, %c2_178, %c2_179, %c0_180, %c0_181], %151 {strides = array<i32>} : memref<1x4x16x4x4xf32, #tpu.memory_space<vmem>>, vector<1x1x1x4x4xf32>,
    %152 = vector.extract_strided_slice %139 {offsets = [12, 0], sizes = [4, 4], strides = [1, 1]} : vector<16x16xf32> to vector<4x4xf32>
    %c0_182 = arith.constant 0 : index
    %c3_183 = arith.constant 3 : index
    %c2_184 = arith.constant 2 : index
    %c0_185 = arith.constant 0 : index
    %c0_186 = arith.constant 0 : index
    %153 = vector.load %arg4[%c0_182, %c3_183, %c2_184, %c0_185, %c0_186] : memref<1x4x16x4x4xf32, #tpu.memory_space<vmem>>, vector<1x1x1x4x4xf32>
    %154 = vector.shape_cast %153 : vector<1x1x1x4x4xf32> to vector<4x4xf32>
    %155 = vector.shape_cast %152 : vector<4x4xf32> to vector<1x1x1x4x4xf32>
    tpu.vector_store %arg4[%c0_182, %c3_183, %c2_184, %c0_185, %c0_186], %155 {strides = array<i32>} : memref<1x4x16x4x4xf32, #tpu.memory_space<vmem>>, vector<1x1x1x4x4xf32>,
    %156 = vector.extract_strided_slice %139 {offsets = [0, 4], sizes = [4, 4], strides = [1, 1]} : vector<16x16xf32> to vector<4x4xf32>
    %c0_187 = arith.constant 0 : index
    %c0_188 = arith.constant 0 : index
    %c6 = arith.constant 6 : index
    %c0_189 = arith.constant 0 : index
    %c0_190 = arith.constant 0 : index
    %157 = vector.load %arg4[%c0_187, %c0_188, %c6, %c0_189, %c0_190] : memref<1x4x16x4x4xf32, #tpu.memory_space<vmem>>, vector<1x1x1x4x4xf32>
    %158 = vector.shape_cast %157 : vector<1x1x1x4x4xf32> to vector<4x4xf32>
    %159 = vector.shape_cast %156 : vector<4x4xf32> to vector<1x1x1x4x4xf32>
    tpu.vector_store %arg4[%c0_187, %c0_188, %c6, %c0_189, %c0_190], %159 {strides = array<i32>} : memref<1x4x16x4x4xf32, #tpu.memory_space<vmem>>, vector<1x1x1x4x4xf32>,
    %160 = vector.extract_strided_slice %139 {offsets = [4, 4], sizes = [4, 4], strides = [1, 1]} : vector<16x16xf32> to vector<4x4xf32>
    %c0_191 = arith.constant 0 : index
    %c1_192 = arith.constant 1 : index
    %c6_193 = arith.constant 6 : index
    %c0_194 = arith.constant 0 : index
    %c0_195 = arith.constant 0 : index
    %161 = vector.load %arg4[%c0_191, %c1_192, %c6_193, %c0_194, %c0_195] : memref<1x4x16x4x4xf32, #tpu.memory_space<vmem>>, vector<1x1x1x4x4xf32>
    %162 = vector.shape_cast %161 : vector<1x1x1x4x4xf32> to vector<4x4xf32>
    %163 = vector.shape_cast %160 : vector<4x4xf32> to vector<1x1x1x4x4xf32>
    tpu.vector_store %arg4[%c0_191, %c1_192, %c6_193, %c0_194, %c0_195], %163 {strides = array<i32>} : memref<1x4x16x4x4xf32, #tpu.memory_space<vmem>>, vector<1x1x1x4x4xf32>,
    %164 = vector.extract_strided_slice %139 {offsets = [8, 4], sizes = [4, 4], strides = [1, 1]} : vector<16x16xf32> to vector<4x4xf32>
    %c0_196 = arith.constant 0 : index
    %c2_197 = arith.constant 2 : index
    %c6_198 = arith.constant 6 : index
    %c0_199 = arith.constant 0 : index
    %c0_200 = arith.constant 0 : index
    %165 = vector.load %arg4[%c0_196, %c2_197, %c6_198, %c0_199, %c0_200] : memref<1x4x16x4x4xf32, #tpu.memory_space<vmem>>, vector<1x1x1x4x4xf32>
    %166 = vector.shape_cast %165 : vector<1x1x1x4x4xf32> to vector<4x4xf32>
    %167 = vector.shape_cast %164 : vector<4x4xf32> to vector<1x1x1x4x4xf32>
    tpu.vector_store %arg4[%c0_196, %c2_197, %c6_198, %c0_199, %c0_200], %167 {strides = array<i32>} : memref<1x4x16x4x4xf32, #tpu.memory_space<vmem>>, vector<1x1x1x4x4xf32>,
    %168 = vector.extract_strided_slice %139 {offsets = [12, 4], sizes = [4, 4], strides = [1, 1]} : vector<16x16xf32> to vector<4x4xf32>
    %c0_201 = arith.constant 0 : index
    %c3_202 = arith.constant 3 : index
    %c6_203 = arith.constant 6 : index
    %c0_204 = arith.constant 0 : index
    %c0_205 = arith.constant 0 : index
    %169 = vector.load %arg4[%c0_201, %c3_202, %c6_203, %c0_204, %c0_205] : memref<1x4x16x4x4xf32, #tpu.memory_space<vmem>>, vector<1x1x1x4x4xf32>
    %170 = vector.shape_cast %169 : vector<1x1x1x4x4xf32> to vector<4x4xf32>
    %171 = vector.shape_cast %168 : vector<4x4xf32> to vector<1x1x1x4x4xf32>
    tpu.vector_store %arg4[%c0_201, %c3_202, %c6_203, %c0_204, %c0_205], %171 {strides = array<i32>} : memref<1x4x16x4x4xf32, #tpu.memory_space<vmem>>, vector<1x1x1x4x4xf32>,
    %172 = vector.extract_strided_slice %139 {offsets = [0, 8], sizes = [4, 4], strides = [1, 1]} : vector<16x16xf32> to vector<4x4xf32>
    %c0_206 = arith.constant 0 : index
    %c0_207 = arith.constant 0 : index
    %c3_208 = arith.constant 3 : index
    %c0_209 = arith.constant 0 : index
    %c0_210 = arith.constant 0 : index
    %173 = vector.load %arg4[%c0_206, %c0_207, %c3_208, %c0_209, %c0_210] : memref<1x4x16x4x4xf32, #tpu.memory_space<vmem>>, vector<1x1x1x4x4xf32>
    %174 = vector.shape_cast %173 : vector<1x1x1x4x4xf32> to vector<4x4xf32>
    %175 = vector.shape_cast %172 : vector<4x4xf32> to vector<1x1x1x4x4xf32>
    tpu.vector_store %arg4[%c0_206, %c0_207, %c3_208, %c0_209, %c0_210], %175 {strides = array<i32>} : memref<1x4x16x4x4xf32, #tpu.memory_space<vmem>>, vector<1x1x1x4x4xf32>,
    %176 = vector.extract_strided_slice %139 {offsets = [4, 8], sizes = [4, 4], strides = [1, 1]} : vector<16x16xf32> to vector<4x4xf32>
    %c0_211 = arith.constant 0 : index
    %c1_212 = arith.constant 1 : index
    %c3_213 = arith.constant 3 : index
    %c0_214 = arith.constant 0 : index
    %c0_215 = arith.constant 0 : index
    %177 = vector.load %arg4[%c0_211, %c1_212, %c3_213, %c0_214, %c0_215] : memref<1x4x16x4x4xf32, #tpu.memory_space<vmem>>, vector<1x1x1x4x4xf32>
    %178 = vector.shape_cast %177 : vector<1x1x1x4x4xf32> to vector<4x4xf32>
    %179 = vector.shape_cast %176 : vector<4x4xf32> to vector<1x1x1x4x4xf32>
    tpu.vector_store %arg4[%c0_211, %c1_212, %c3_213, %c0_214, %c0_215], %179 {strides = array<i32>} : memref<1x4x16x4x4xf32, #tpu.memory_space<vmem>>, vector<1x1x1x4x4xf32>,
    %180 = vector.extract_strided_slice %139 {offsets = [8, 8], sizes = [4, 4], strides = [1, 1]} : vector<16x16xf32> to vector<4x4xf32>
    %c0_216 = arith.constant 0 : index
    %c2_217 = arith.constant 2 : index
    %c3_218 = arith.constant 3 : index
    %c0_219 = arith.constant 0 : index
    %c0_220 = arith.constant 0 : index
    %181 = vector.load %arg4[%c0_216, %c2_217, %c3_218, %c0_219, %c0_220] : memref<1x4x16x4x4xf32, #tpu.memory_space<vmem>>, vector<1x1x1x4x4xf32>
    %182 = vector.shape_cast %181 : vector<1x1x1x4x4xf32> to vector<4x4xf32>
    %183 = vector.shape_cast %180 : vector<4x4xf32> to vector<1x1x1x4x4xf32>
    tpu.vector_store %arg4[%c0_216, %c2_217, %c3_218, %c0_219, %c0_220], %183 {strides = array<i32>} : memref<1x4x16x4x4xf32, #tpu.memory_space<vmem>>, vector<1x1x1x4x4xf32>,
    %184 = vector.extract_strided_slice %139 {offsets = [12, 8], sizes = [4, 4], strides = [1, 1]} : vector<16x16xf32> to vector<4x4xf32>
    %c0_221 = arith.constant 0 : index
    %c3_222 = arith.constant 3 : index
    %c3_223 = arith.constant 3 : index
    %c0_224 = arith.constant 0 : index
    %c0_225 = arith.constant 0 : index
    %185 = vector.load %arg4[%c0_221, %c3_222, %c3_223, %c0_224, %c0_225] : memref<1x4x16x4x4xf32, #tpu.memory_space<vmem>>, vector<1x1x1x4x4xf32>
    %186 = vector.shape_cast %185 : vector<1x1x1x4x4xf32> to vector<4x4xf32>
    %187 = vector.shape_cast %184 : vector<4x4xf32> to vector<1x1x1x4x4xf32>
    tpu.vector_store %arg4[%c0_221, %c3_222, %c3_223, %c0_224, %c0_225], %187 {strides = array<i32>} : memref<1x4x16x4x4xf32, #tpu.memory_space<vmem>>, vector<1x1x1x4x4xf32>,
    %188 = vector.extract_strided_slice %139 {offsets = [0, 12], sizes = [4, 4], strides = [1, 1]} : vector<16x16xf32> to vector<4x4xf32>
    %c0_226 = arith.constant 0 : index
    %c0_227 = arith.constant 0 : index
    %c7 = arith.constant 7 : index
    %c0_228 = arith.constant 0 : index
    %c0_229 = arith.constant 0 : index
    %189 = vector.load %arg4[%c0_226, %c0_227, %c7, %c0_228, %c0_229] : memref<1x4x16x4x4xf32, #tpu.memory_space<vmem>>, vector<1x1x1x4x4xf32>
    %190 = vector.shape_cast %189 : vector<1x1x1x4x4xf32> to vector<4x4xf32>
    %191 = vector.shape_cast %188 : vector<4x4xf32> to vector<1x1x1x4x4xf32>
    tpu.vector_store %arg4[%c0_226, %c0_227, %c7, %c0_228, %c0_229], %191 {strides = array<i32>} : memref<1x4x16x4x4xf32, #tpu.memory_space<vmem>>, vector<1x1x1x4x4xf32>,
    %192 = vector.extract_strided_slice %139 {offsets = [4, 12], sizes = [4, 4], strides = [1, 1]} : vector<16x16xf32> to vector<4x4xf32>
    %c0_230 = arith.constant 0 : index
    %c1_231 = arith.constant 1 : index
    %c7_232 = arith.constant 7 : index
    %c0_233 = arith.constant 0 : index
    %c0_234 = arith.constant 0 : index
    %193 = vector.load %arg4[%c0_230, %c1_231, %c7_232, %c0_233, %c0_234] : memref<1x4x16x4x4xf32, #tpu.memory_space<vmem>>, vector<1x1x1x4x4xf32>
    %194 = vector.shape_cast %193 : vector<1x1x1x4x4xf32> to vector<4x4xf32>
    %195 = vector.shape_cast %192 : vector<4x4xf32> to vector<1x1x1x4x4xf32>
    tpu.vector_store %arg4[%c0_230, %c1_231, %c7_232, %c0_233, %c0_234], %195 {strides = array<i32>} : memref<1x4x16x4x4xf32, #tpu.memory_space<vmem>>, vector<1x1x1x4x4xf32>,
    %196 = vector.extract_strided_slice %139 {offsets = [8, 12], sizes = [4, 4], strides = [1, 1]} : vector<16x16xf32> to vector<4x4xf32>
    %c0_235 = arith.constant 0 : index
    %c2_236 = arith.constant 2 : index
    %c7_237 = arith.constant 7 : index
    %c0_238 = arith.constant 0 : index
    %c0_239 = arith.constant 0 : index
    %197 = vector.load %arg4[%c0_235, %c2_236, %c7_237, %c0_238, %c0_239] : memref<1x4x16x4x4xf32, #tpu.memory_space<vmem>>, vector<1x1x1x4x4xf32>
    %198 = vector.shape_cast %197 : vector<1x1x1x4x4xf32> to vector<4x4xf32>
    %199 = vector.shape_cast %196 : vector<4x4xf32> to vector<1x1x1x4x4xf32>
    tpu.vector_store %arg4[%c0_235, %c2_236, %c7_237, %c0_238, %c0_239], %199 {strides = array<i32>} : memref<1x4x16x4x4xf32, #tpu.memory_space<vmem>>, vector<1x1x1x4x4xf32>,
    %200 = vector.extract_strided_slice %139 {offsets = [12, 12], sizes = [4, 4], strides = [1, 1]} : vector<16x16xf32> to vector<4x4xf32>
    %c0_240 = arith.constant 0 : index
    %c3_241 = arith.constant 3 : index
    %c7_242 = arith.constant 7 : index
    %c0_243 = arith.constant 0 : index
    %c0_244 = arith.constant 0 : index
    %201 = vector.load %arg4[%c0_240, %c3_241, %c7_242, %c0_243, %c0_244] : memref<1x4x16x4x4xf32, #tpu.memory_space<vmem>>, vector<1x1x1x4x4xf32>
    %202 = vector.shape_cast %201 : vector<1x1x1x4x4xf32> to vector<4x4xf32>
    %203 = vector.shape_cast %200 : vector<4x4xf32> to vector<1x1x1x4x4xf32>
    tpu.vector_store %arg4[%c0_240, %c3_241, %c7_242, %c0_243, %c0_244], %203 {strides = array<i32>} : memref<1x4x16x4x4xf32, #tpu.memory_space<vmem>>, vector<1x1x1x4x4xf32>,
    %c0_245 = arith.constant 0 : index
    %c3_246 = arith.constant 3 : index
    %c0_247 = arith.constant 0 : index
    %204 = tpu.strided_load %arg2[%c0_245, %c3_246, %c0_247] {strides = array<i32: 1, 4, 1>} : memref<1x64x16xf32, #tpu.memory_space<vmem>>, vector<1x16x16xf32>
    %205 = vector.shape_cast %204 : vector<1x16x16xf32> to vector<16x16xf32>
    %c0_248 = arith.constant 0 : index
    %c0_249 = arith.constant 0 : index
    %206 = vector.load %arg3[%c0_248, %c0_249] : memref<16x16xf32, #tpu.memory_space<vmem>>, vector<16x16xf32>
    %cst_250 = arith.constant dense<0.000000e+00> : vector<16x16xf32>
    %207 = tpu.matmul %205, %206, %cst_250 {dimension_numbers = #tpu.dot_dimension_numbers<[1], [0], [0], [1], [0, 0, 1, 1], [], []>, precision = #tpu.contract_precision<fp32>} : vector<16x16xf32>, vector<16x16xf32>, vector<16x16xf32> -> vector<16x16xf32>
    %208 = vector.extract_strided_slice %207 {offsets = [0, 0], sizes = [4, 4], strides = [1, 1]} : vector<16x16xf32> to vector<4x4xf32>
    %c0_251 = arith.constant 0 : index
    %c0_252 = arith.constant 0 : index
    %c10 = arith.constant 10 : index
    %c0_253 = arith.constant 0 : index
    %c0_254 = arith.constant 0 : index
    %209 = vector.load %arg4[%c0_251, %c0_252, %c10, %c0_253, %c0_254] : memref<1x4x16x4x4xf32, #tpu.memory_space<vmem>>, vector<1x1x1x4x4xf32>
    %210 = vector.shape_cast %209 : vector<1x1x1x4x4xf32> to vector<4x4xf32>
    %211 = vector.shape_cast %208 : vector<4x4xf32> to vector<1x1x1x4x4xf32>
    tpu.vector_store %arg4[%c0_251, %c0_252, %c10, %c0_253, %c0_254], %211 {strides = array<i32>} : memref<1x4x16x4x4xf32, #tpu.memory_space<vmem>>, vector<1x1x1x4x4xf32>,
    %212 = vector.extract_strided_slice %207 {offsets = [4, 0], sizes = [4, 4], strides = [1, 1]} : vector<16x16xf32> to vector<4x4xf32>
    %c0_255 = arith.constant 0 : index
    %c1_256 = arith.constant 1 : index
    %c10_257 = arith.constant 10 : index
    %c0_258 = arith.constant 0 : index
    %c0_259 = arith.constant 0 : index
    %213 = vector.load %arg4[%c0_255, %c1_256, %c10_257, %c0_258, %c0_259] : memref<1x4x16x4x4xf32, #tpu.memory_space<vmem>>, vector<1x1x1x4x4xf32>
    %214 = vector.shape_cast %213 : vector<1x1x1x4x4xf32> to vector<4x4xf32>
    %215 = vector.shape_cast %212 : vector<4x4xf32> to vector<1x1x1x4x4xf32>
    tpu.vector_store %arg4[%c0_255, %c1_256, %c10_257, %c0_258, %c0_259], %215 {strides = array<i32>} : memref<1x4x16x4x4xf32, #tpu.memory_space<vmem>>, vector<1x1x1x4x4xf32>,
    %216 = vector.extract_strided_slice %207 {offsets = [8, 0], sizes = [4, 4], strides = [1, 1]} : vector<16x16xf32> to vector<4x4xf32>
    %c0_260 = arith.constant 0 : index
    %c2_261 = arith.constant 2 : index
    %c10_262 = arith.constant 10 : index
    %c0_263 = arith.constant 0 : index
    %c0_264 = arith.constant 0 : index
    %217 = vector.load %arg4[%c0_260, %c2_261, %c10_262, %c0_263, %c0_264] : memref<1x4x16x4x4xf32, #tpu.memory_space<vmem>>, vector<1x1x1x4x4xf32>
    %218 = vector.shape_cast %217 : vector<1x1x1x4x4xf32> to vector<4x4xf32>
    %219 = vector.shape_cast %216 : vector<4x4xf32> to vector<1x1x1x4x4xf32>
    tpu.vector_store %arg4[%c0_260, %c2_261, %c10_262, %c0_263, %c0_264], %219 {strides = array<i32>} : memref<1x4x16x4x4xf32, #tpu.memory_space<vmem>>, vector<1x1x1x4x4xf32>,
    %220 = vector.extract_strided_slice %207 {offsets = [12, 0], sizes = [4, 4], strides = [1, 1]} : vector<16x16xf32> to vector<4x4xf32>
    %c0_265 = arith.constant 0 : index
    %c3_266 = arith.constant 3 : index
    %c10_267 = arith.constant 10 : index
    %c0_268 = arith.constant 0 : index
    %c0_269 = arith.constant 0 : index
    %221 = vector.load %arg4[%c0_265, %c3_266, %c10_267, %c0_268, %c0_269] : memref<1x4x16x4x4xf32, #tpu.memory_space<vmem>>, vector<1x1x1x4x4xf32>
    %222 = vector.shape_cast %221 : vector<1x1x1x4x4xf32> to vector<4x4xf32>
    %223 = vector.shape_cast %220 : vector<4x4xf32> to vector<1x1x1x4x4xf32>
    tpu.vector_store %arg4[%c0_265, %c3_266, %c10_267, %c0_268, %c0_269], %223 {strides = array<i32>} : memref<1x4x16x4x4xf32, #tpu.memory_space<vmem>>, vector<1x1x1x4x4xf32>,
    %224 = vector.extract_strided_slice %207 {offsets = [0, 4], sizes = [4, 4], strides = [1, 1]} : vector<16x16xf32> to vector<4x4xf32>
    %c0_270 = arith.constant 0 : index
    %c0_271 = arith.constant 0 : index
    %c14 = arith.constant 14 : index
    %c0_272 = arith.constant 0 : index
    %c0_273 = arith.constant 0 : index
    %225 = vector.load %arg4[%c0_270, %c0_271, %c14, %c0_272, %c0_273] : memref<1x4x16x4x4xf32, #tpu.memory_space<vmem>>, vector<1x1x1x4x4xf32>
    %226 = vector.shape_cast %225 : vector<1x1x1x4x4xf32> to vector<4x4xf32>
    %227 = vector.shape_cast %224 : vector<4x4xf32> to vector<1x1x1x4x4xf32>
    tpu.vector_store %arg4[%c0_270, %c0_271, %c14, %c0_272, %c0_273], %227 {strides = array<i32>} : memref<1x4x16x4x4xf32, #tpu.memory_space<vmem>>, vector<1x1x1x4x4xf32>,
    %228 = vector.extract_strided_slice %207 {offsets = [4, 4], sizes = [4, 4], strides = [1, 1]} : vector<16x16xf32> to vector<4x4xf32>
    %c0_274 = arith.constant 0 : index
    %c1_275 = arith.constant 1 : index
    %c14_276 = arith.constant 14 : index
    %c0_277 = arith.constant 0 : index
    %c0_278 = arith.constant 0 : index
    %229 = vector.load %arg4[%c0_274, %c1_275, %c14_276, %c0_277, %c0_278] : memref<1x4x16x4x4xf32, #tpu.memory_space<vmem>>, vector<1x1x1x4x4xf32>
    %230 = vector.shape_cast %229 : vector<1x1x1x4x4xf32> to vector<4x4xf32>
    %231 = vector.shape_cast %228 : vector<4x4xf32> to vector<1x1x1x4x4xf32>
    tpu.vector_store %arg4[%c0_274, %c1_275, %c14_276, %c0_277, %c0_278], %231 {strides = array<i32>} : memref<1x4x16x4x4xf32, #tpu.memory_space<vmem>>, vector<1x1x1x4x4xf32>,
    %232 = vector.extract_strided_slice %207 {offsets = [8, 4], sizes = [4, 4], strides = [1, 1]} : vector<16x16xf32> to vector<4x4xf32>
    %c0_279 = arith.constant 0 : index
    %c2_280 = arith.constant 2 : index
    %c14_281 = arith.constant 14 : index
    %c0_282 = arith.constant 0 : index
    %c0_283 = arith.constant 0 : index
    %233 = vector.load %arg4[%c0_279, %c2_280, %c14_281, %c0_282, %c0_283] : memref<1x4x16x4x4xf32, #tpu.memory_space<vmem>>, vector<1x1x1x4x4xf32>
    %234 = vector.shape_cast %233 : vector<1x1x1x4x4xf32> to vector<4x4xf32>
    %235 = vector.shape_cast %232 : vector<4x4xf32> to vector<1x1x1x4x4xf32>
    tpu.vector_store %arg4[%c0_279, %c2_280, %c14_281, %c0_282, %c0_283], %235 {strides = array<i32>} : memref<1x4x16x4x4xf32, #tpu.memory_space<vmem>>, vector<1x1x1x4x4xf32>,
    %236 = vector.extract_strided_slice %207 {offsets = [12, 4], sizes = [4, 4], strides = [1, 1]} : vector<16x16xf32> to vector<4x4xf32>
    %c0_284 = arith.constant 0 : index
    %c3_285 = arith.constant 3 : index
    %c14_286 = arith.constant 14 : index
    %c0_287 = arith.constant 0 : index
    %c0_288 = arith.constant 0 : index
    %237 = vector.load %arg4[%c0_284, %c3_285, %c14_286, %c0_287, %c0_288] : memref<1x4x16x4x4xf32, #tpu.memory_space<vmem>>, vector<1x1x1x4x4xf32>
    %238 = vector.shape_cast %237 : vector<1x1x1x4x4xf32> to vector<4x4xf32>
    %239 = vector.shape_cast %236 : vector<4x4xf32> to vector<1x1x1x4x4xf32>
    tpu.vector_store %arg4[%c0_284, %c3_285, %c14_286, %c0_287, %c0_288], %239 {strides = array<i32>} : memref<1x4x16x4x4xf32, #tpu.memory_space<vmem>>, vector<1x1x1x4x4xf32>,
    %240 = vector.extract_strided_slice %207 {offsets = [0, 8], sizes = [4, 4], strides = [1, 1]} : vector<16x16xf32> to vector<4x4xf32>
    %c0_289 = arith.constant 0 : index
    %c0_290 = arith.constant 0 : index
    %c11 = arith.constant 11 : index
    %c0_291 = arith.constant 0 : index
    %c0_292 = arith.constant 0 : index
    %241 = vector.load %arg4[%c0_289, %c0_290, %c11, %c0_291, %c0_292] : memref<1x4x16x4x4xf32, #tpu.memory_space<vmem>>, vector<1x1x1x4x4xf32>
    %242 = vector.shape_cast %241 : vector<1x1x1x4x4xf32> to vector<4x4xf32>
    %243 = vector.shape_cast %240 : vector<4x4xf32> to vector<1x1x1x4x4xf32>
    tpu.vector_store %arg4[%c0_289, %c0_290, %c11, %c0_291, %c0_292], %243 {strides = array<i32>} : memref<1x4x16x4x4xf32, #tpu.memory_space<vmem>>, vector<1x1x1x4x4xf32>,
    %244 = vector.extract_strided_slice %207 {offsets = [4, 8], sizes = [4, 4], strides = [1, 1]} : vector<16x16xf32> to vector<4x4xf32>
    %c0_293 = arith.constant 0 : index
    %c1_294 = arith.constant 1 : index
    %c11_295 = arith.constant 11 : index
    %c0_296 = arith.constant 0 : index
    %c0_297 = arith.constant 0 : index
    %245 = vector.load %arg4[%c0_293, %c1_294, %c11_295, %c0_296, %c0_297] : memref<1x4x16x4x4xf32, #tpu.memory_space<vmem>>, vector<1x1x1x4x4xf32>
    %246 = vector.shape_cast %245 : vector<1x1x1x4x4xf32> to vector<4x4xf32>
    %247 = vector.shape_cast %244 : vector<4x4xf32> to vector<1x1x1x4x4xf32>
    tpu.vector_store %arg4[%c0_293, %c1_294, %c11_295, %c0_296, %c0_297], %247 {strides = array<i32>} : memref<1x4x16x4x4xf32, #tpu.memory_space<vmem>>, vector<1x1x1x4x4xf32>,
    %248 = vector.extract_strided_slice %207 {offsets = [8, 8], sizes = [4, 4], strides = [1, 1]} : vector<16x16xf32> to vector<4x4xf32>
    %c0_298 = arith.constant 0 : index
    %c2_299 = arith.constant 2 : index
    %c11_300 = arith.constant 11 : index
    %c0_301 = arith.constant 0 : index
    %c0_302 = arith.constant 0 : index
    %249 = vector.load %arg4[%c0_298, %c2_299, %c11_300, %c0_301, %c0_302] : memref<1x4x16x4x4xf32, #tpu.memory_space<vmem>>, vector<1x1x1x4x4xf32>
    %250 = vector.shape_cast %249 : vector<1x1x1x4x4xf32> to vector<4x4xf32>
    %251 = vector.shape_cast %248 : vector<4x4xf32> to vector<1x1x1x4x4xf32>
    tpu.vector_store %arg4[%c0_298, %c2_299, %c11_300, %c0_301, %c0_302], %251 {strides = array<i32>} : memref<1x4x16x4x4xf32, #tpu.memory_space<vmem>>, vector<1x1x1x4x4xf32>,
    %252 = vector.extract_strided_slice %207 {offsets = [12, 8], sizes = [4, 4], strides = [1, 1]} : vector<16x16xf32> to vector<4x4xf32>
    %c0_303 = arith.constant 0 : index
    %c3_304 = arith.constant 3 : index
    %c11_305 = arith.constant 11 : index
    %c0_306 = arith.constant 0 : index
    %c0_307 = arith.constant 0 : index
    %253 = vector.load %arg4[%c0_303, %c3_304, %c11_305, %c0_306, %c0_307] : memref<1x4x16x4x4xf32, #tpu.memory_space<vmem>>, vector<1x1x1x4x4xf32>
    %254 = vector.shape_cast %253 : vector<1x1x1x4x4xf32> to vector<4x4xf32>
    %255 = vector.shape_cast %252 : vector<4x4xf32> to vector<1x1x1x4x4xf32>
    tpu.vector_store %arg4[%c0_303, %c3_304, %c11_305, %c0_306, %c0_307], %255 {strides = array<i32>} : memref<1x4x16x4x4xf32, #tpu.memory_space<vmem>>, vector<1x1x1x4x4xf32>,
    %256 = vector.extract_strided_slice %207 {offsets = [0, 12], sizes = [4, 4], strides = [1, 1]} : vector<16x16xf32> to vector<4x4xf32>
    %c0_308 = arith.constant 0 : index
    %c0_309 = arith.constant 0 : index
    %c15 = arith.constant 15 : index
    %c0_310 = arith.constant 0 : index
    %c0_311 = arith.constant 0 : index
    %257 = vector.load %arg4[%c0_308, %c0_309, %c15, %c0_310, %c0_311] : memref<1x4x16x4x4xf32, #tpu.memory_space<vmem>>, vector<1x1x1x4x4xf32>
    %258 = vector.shape_cast %257 : vector<1x1x1x4x4xf32> to vector<4x4xf32>
    %259 = vector.shape_cast %256 : vector<4x4xf32> to vector<1x1x1x4x4xf32>
    tpu.vector_store %arg4[%c0_308, %c0_309, %c15, %c0_310, %c0_311], %259 {strides = array<i32>} : memref<1x4x16x4x4xf32, #tpu.memory_space<vmem>>, vector<1x1x1x4x4xf32>,
    %260 = vector.extract_strided_slice %207 {offsets = [4, 12], sizes = [4, 4], strides = [1, 1]} : vector<16x16xf32> to vector<4x4xf32>
    %c0_312 = arith.constant 0 : index
    %c1_313 = arith.constant 1 : index
    %c15_314 = arith.constant 15 : index
    %c0_315 = arith.constant 0 : index
    %c0_316 = arith.constant 0 : index
    %261 = vector.load %arg4[%c0_312, %c1_313, %c15_314, %c0_315, %c0_316] : memref<1x4x16x4x4xf32, #tpu.memory_space<vmem>>, vector<1x1x1x4x4xf32>
    %262 = vector.shape_cast %261 : vector<1x1x1x4x4xf32> to vector<4x4xf32>
    %263 = vector.shape_cast %260 : vector<4x4xf32> to vector<1x1x1x4x4xf32>
    tpu.vector_store %arg4[%c0_312, %c1_313, %c15_314, %c0_315, %c0_316], %263 {strides = array<i32>} : memref<1x4x16x4x4xf32, #tpu.memory_space<vmem>>, vector<1x1x1x4x4xf32>,
    %264 = vector.extract_strided_slice %207 {offsets = [8, 12], sizes = [4, 4], strides = [1, 1]} : vector<16x16xf32> to vector<4x4xf32>
    %c0_317 = arith.constant 0 : index
    %c2_318 = arith.constant 2 : index
    %c15_319 = arith.constant 15 : index
    %c0_320 = arith.constant 0 : index
    %c0_321 = arith.constant 0 : index
    %265 = vector.load %arg4[%c0_317, %c2_318, %c15_319, %c0_320, %c0_321] : memref<1x4x16x4x4xf32, #tpu.memory_space<vmem>>, vector<1x1x1x4x4xf32>
    %266 = vector.shape_cast %265 : vector<1x1x1x4x4xf32> to vector<4x4xf32>
    %267 = vector.shape_cast %264 : vector<4x4xf32> to vector<1x1x1x4x4xf32>
    tpu.vector_store %arg4[%c0_317, %c2_318, %c15_319, %c0_320, %c0_321], %267 {strides = array<i32>} : memref<1x4x16x4x4xf32, #tpu.memory_space<vmem>>, vector<1x1x1x4x4xf32>,
    %268 = vector.extract_strided_slice %207 {offsets = [12, 12], sizes = [4, 4], strides = [1, 1]} : vector<16x16xf32> to vector<4x4xf32>
    %c0_322 = arith.constant 0 : index
    %c3_323 = arith.constant 3 : index
    %c15_324 = arith.constant 15 : index
    %c0_325 = arith.constant 0 : index
    %c0_326 = arith.constant 0 : index
    %269 = vector.load %arg4[%c0_322, %c3_323, %c15_324, %c0_325, %c0_326] : memref<1x4x16x4x4xf32, #tpu.memory_space<vmem>>, vector<1x1x1x4x4xf32>
    %270 = vector.shape_cast %269 : vector<1x1x1x4x4xf32> to vector<4x4xf32>
    %271 = vector.shape_cast %268 : vector<4x4xf32> to vector<1x1x1x4x4xf32>
    tpu.vector_store %arg4[%c0_322, %c3_323, %c15_324, %c0_325, %c0_326], %271 {strides = array<i32>} : memref<1x4x16x4x4xf32, #tpu.memory_space<vmem>>, vector<1x1x1x4x4xf32>,
    return
  }
  func.func @transform_0(%arg0: i32, %arg1: i32) -> (i32, i32, i32) {
    %c0_i32 = arith.constant 0 : i32
    %c0_i32_0 = arith.constant 0 : i32
    return %arg0, %arg1, %c0_i32 : i32, i32, i32
  }
  func.func @transform_1(%arg0: i32, %arg1: i32) -> (i32, i32) {
    %c0_i32 = arith.constant 0 : i32
    %c0_i32_0 = arith.constant 0 : i32
    %c0_i32_1 = arith.constant 0 : i32
    return %c0_i32, %c0_i32_0 : i32, i32
  }
  func.func @transform_2(%arg0: i32, %arg1: i32) -> (i32, i32, i32, i32, i32) {
    %c0_i32 = arith.constant 0 : i32
    %c0_i32_0 = arith.constant 0 : i32
    %c0_i32_1 = arith.constant 0 : i32
    %c0_i32_2 = arith.constant 0 : i32
    return %arg0, %arg1, %c0_i32, %c0_i32_0, %c0_i32_1 : i32, i32, i32, i32, i32
  }
}

</mosaic_0001>

<llo_original>
// kernel: tpu_custom_call.1
$region0: #{tpu_custom_call.1}
  #allocation0 [shape = 'u32[]', space=smem, size = 0x4, offset = 0x4, fixed_abs, tag = 'smem constant byte address 0x4 - core index']
  #allocation1 [shape = 'u32[144,128]{1,0:T(1,128)}', space=vmem, size = 0x12000, scoped, tag = 'internal scratch']
  %s0 = inlined_call_operand.vmem [shape: f32[2,64,16], index: 0, kind: input, shape index: {}]
  %s1 = inlined_call_operand.vmem [shape: f32[16,16], index: 1, kind: input, shape index: {}]
  %s2 = inlined_call_operand.vmem [shape: f32[2,4,16,4,4], index: 2, kind: output, shape index: {}]
  %s3 = sld [smem:[#allocation0]]
  $region41: #{tpu_custom_call.1} parent=0
    _
  %s5 = ssub.s32 1, %s3
  %s6 = scalar_select 0, %s5, %s3
  loop: start=0, step=1, limit=4
  $region2: #{tpu_custom_call.1} parent=0 // loop_pre_header
    _
  $region3: #{tpu_custom_call.1} parent=0 // loop_header
    %s8 = sphi 0, %s12
    %p9 = scmp.ge.s32.totalorder %s8, 4
    %s15 = sphi 0, %s27
    %s16 = sphi 0, %s23
    %s17 = sphi 0, %s15
    %s18 = sphi 0, %s16
    %s19 = sphi 0, %s17
    %s20 = sphi 0, %s18
    %s32 = sphi 0, %s34
    %s35 = sphi 0, %s32
    %s36 = sphi 0, %s35
    %s52 = sphi 0, %s36
    %s56 = sphi 0, %s56
    %s58 = sphi 0, %s56
    %s59 = sphi 0, %s58
    %s73 = sphi 0, %s59
    %s81 = sphi 0, %s83
    %s84 = sphi 0, %s81
    %s85 = sphi 0, %s84
    %s101 = sphi 0, %s85
  $region4: #{tpu_custom_call.1} parent=0 // loop_header_branch
    %11 = sbr.rel (%p9) target = $region8
  $region5: #{tpu_custom_call.1} parent=0 // loop_body
    %s13 = ssub.s32 %s8, 1
    %s14 = ssub.s32 %s8, 2
    %s21 = sadd.s32 1, %s16
    %p22 = scmp.ge.s32.totalorder %s21, 1
    %s23 = scalar_select %p22, 0, %s21
    %s24 = sadd.s32 1, %s15
    %s25 = scalar_select %p22, %s24, %s15
    %p26 = scmp.ge.s32.totalorder %s25, 2
    %s27 = scalar_select %p26, 0, %s25
    %s28 = ssub.s32 %s15, %s27
    %s29 = ssub.s32 %s16, %s23
    %s30 = sor.u32 %s28, %s29
    %p31 = scmp.eq.s32.totalorder %s30, 0
    %s33 = sadd.s32 %s32, 1
    %s34 = scalar_select %p31, %s32, %s33
    %p37 = pneg %p31
    %p38 = scmp.eq.s32.totalorder %s8, 1
    %p39 = por %p37, %p38
    %p40 = scmp.ne.s32.totalorder %s32, %s35
    %p41 = scmp.eq.s32.totalorder %s8, 0
    %p42 = por %p40, %p41
    %p43 = scmp.ne.s32.totalorder %s32, %s35
    %p44 = scmp.eq.s32.totalorder %s13, 1
    %p45 = por %p43, %p44
    %p46 = scmp.ne.s32.totalorder %s35, %s36
    %p47 = scmp.eq.s32.totalorder %s13, 0
    %p48 = por %p46, %p47
    %p49 = scmp.ne.s32.totalorder %s35, %s36
    %p50 = scmp.eq.s32.totalorder %s14, 1
    %p51 = por %p49, %p50
    %p53 = scmp.ne.s32.totalorder %s36, %s52
    %p54 = scmp.eq.s32.totalorder %s14, 0
    %p55 = por %p53, %p54
    %s57 = sadd.s32 %s56, 1
    %p60 = scmp.eq.s32.totalorder %s8, 1
    %p61 = scmp.ne.s32.totalorder %s56, %s58
    %p62 = scmp.eq.s32.totalorder %s8, 0
    %p63 = por %p61, %p62
    %p64 = scmp.ne.s32.totalorder %s56, %s58
    %p65 = scmp.eq.s32.totalorder %s13, 1
    %p66 = por %p64, %p65
    %p67 = scmp.ne.s32.totalorder %s58, %s59
    %p68 = scmp.eq.s32.totalorder %s13, 0
    %p69 = por %p67, %p68
    %p70 = scmp.ne.s32.totalorder %s58, %s59
    %p71 = scmp.eq.s32.totalorder %s14, 1
    %p72 = por %p70, %p71
    %p74 = scmp.ne.s32.totalorder %s59, %s73
    %p75 = scmp.eq.s32.totalorder %s14, 0
    %p76 = por %p74, %p75
    %s77 = ssub.s32 %s15, %s27
    %s78 = ssub.s32 %s16, %s23
    %s79 = sor.u32 %s77, %s78
    %p80 = scmp.eq.s32.totalorder %s79, 0
    %s82 = sadd.s32 %s81, 1
    %s83 = scalar_select %p80, %s81, %s82
    %p86 = pneg %p80
    %p87 = scmp.eq.s32.totalorder %s8, 1
    %p88 = por %p86, %p87
    %p89 = scmp.ne.s32.totalorder %s81, %s84
    %p90 = scmp.eq.s32.totalorder %s8, 0
    %p91 = por %p89, %p90
    %p92 = scmp.ne.s32.totalorder %s81, %s84
    %p93 = scmp.eq.s32.totalorder %s13, 1
    %p94 = por %p92, %p93
    %p95 = scmp.ne.s32.totalorder %s84, %s85
    %p96 = scmp.eq.s32.totalorder %s13, 0
    %p97 = por %p95, %p96
    %p98 = scmp.ne.s32.totalorder %s84, %s85
    %p99 = scmp.eq.s32.totalorder %s14, 1
    %p100 = por %p98, %p99
    %p102 = scmp.ne.s32.totalorder %s85, %s101
    %p103 = scmp.eq.s32.totalorder %s14, 0
    %p104 = por %p102, %p103
    %p105 = scmp.le.s32.totalorder 1, %s8
    %p106 = scmp.lt.s32.totalorder %s8, 3
    %p107 = pnand %p105, %p106
    %p108 = pneg %p107
    // Predicated region
    $region9: #{tpu_custom_call.1} parent=5 // pred_check
      _
    $region10: #{tpu_custom_call.1} parent=5 // pred_check_branch
      %110 = sbr.rel (%p107) target = $region12
    $region11: #{tpu_custom_call.1} parent=5 // pred_region
      %s111 = ssub.s32 %s8, 1
      // Predicated region
      $region13: #{tpu_custom_call.1} parent=11 // pred_check
        %p112 = pneg %p69
      $region14: #{tpu_custom_call.1} parent=11 // pred_check_branch
        %114 = sbr.rel (%p112) target = $region16
      $region15: #{tpu_custom_call.1} parent=11 // pred_region
        _
      $region16: #{tpu_custom_call.1} parent=11 // pred_fallthru
        _
    $region12: #{tpu_custom_call.1} parent=5 // pred_fallthru
      _
    %p115 = scmp.lt.s32.totalorder %s8, 2
    // Predicated region
    $region17: #{tpu_custom_call.1} parent=5 // pred_check
      %p116 = pneg %p115
    $region18: #{tpu_custom_call.1} parent=5 // pred_check_branch
      %118 = sbr.rel (%p116) target = $region20
    $region19: #{tpu_custom_call.1} parent=5 // pred_region
      // Predicated region
      $region21: #{tpu_custom_call.1} parent=19 // pred_check
        %p119 = pneg %p42
      $region22: #{tpu_custom_call.1} parent=19 // pred_check_branch
        %121 = sbr.rel (%p119) target = $region24
      $region23: #{tpu_custom_call.1} parent=19 // pred_region
        %s122 = smul.u32 8, %s16
        %p123 = scmp.lt.s32.totalorder %s15, 1
        %s124 = scalar_select %p123, %s15, 1
        %p125 = scmp.lt.s32.totalorder %s122, 7
        %s126 = scalar_select %p125, %s122, 7
        %s127 = smul.addr %s124, 8
        %s128 = sadd.s32 %s126, %s127
        %s129 = smul.addr %s128, 8
        %s130 = scalar_lea.vmem %s0, %s129
        %s131 = smul.u32 8, %s16
      $region24: #{tpu_custom_call.1} parent=19 // pred_fallthru
        _
    $region20: #{tpu_custom_call.1} parent=5 // pred_fallthru
      _
    %p132 = scmp.le.s32.totalorder 1, %s8
    %p133 = scmp.lt.s32.totalorder %s8, 3
    %p134 = pnand %p132, %p133
    %p135 = pneg %p134
    // Predicated region
    $region25: #{tpu_custom_call.1} parent=5 // pred_check
      _
    $region26: #{tpu_custom_call.1} parent=5 // pred_check_branch
      %137 = sbr.rel (%p134) target = $region28
    $region27: #{tpu_custom_call.1} parent=5 // pred_region
      %s138 = ssub.s32 %s8, 1
      %s139 = smul.u32 8, %s18
      %p140 = scmp.lt.s32.totalorder %s17, 1
      %s141 = scalar_select %p140, %s17, 1
      %p142 = scmp.lt.s32.totalorder %s139, 7
      %s143 = scalar_select %p142, %s139, 7
      %s144 = smul.addr %s141, 8
      %s145 = sadd.s32 %s143, %s144
      %s146 = smul.addr %s145, 8
      %s147 = scalar_lea.vmem %s0, %s146
      %p148 = pneg %p48
      %p149 = pneg %p45
      %p150 = pneg %p69
      %p151 = pneg %p66
      %p152 = pneg %p97
      %p153 = pneg %p94
      %s154 = smul.u32 4, %s18
      %p155 = scmp.lt.s32.totalorder %s17, 1
      %s156 = scalar_select %p155, %s17, 1
      %p157 = scmp.lt.s32.totalorder %s154, 3
      %s158 = scalar_select %p157, %s154, 3
      %s159 = smul.addr %s158, 16
      %s160 = smul.addr %s156, 64
      %s161 = sadd.s32 %s159, %s160
      %s162 = smul.addr %s161, 4
      %s163 = scalar_lea.vmem %s2, %s162
      %s164 = smul.u32 8, %s18
      %p165 = scmp.lt.s32.totalorder %s17, 1
      %s166 = scalar_select %p165, %s17, 1
      %p167 = scmp.lt.s32.totalorder %s164, 7
      %s168 = scalar_select %p167, %s164, 7
      %s169 = smul.addr %s166, 8
      %s170 = sadd.s32 %s168, %s169
      %s171 = smul.addr %s170, 8
      %s172 = scalar_lea.vmem %s0, %s171
      %s173 = smul.u32 8, %s18
      %s174 = smul.u32 4, %s18
      %p175 = scmp.lt.s32.totalorder %s17, 1
      %s176 = scalar_select %p175, %s17, 1
      %p177 = scmp.lt.s32.totalorder %s174, 3
      %s178 = scalar_select %p177, %s174, 3
      %s179 = smul.addr %s178, 16
      %s180 = smul.addr %s176, 64
      %s181 = sadd.s32 %s179, %s180
      %s182 = smul.addr %s181, 4
      %s183 = scalar_lea.vmem %s2, %s182
      %s184 = smul.u32 4, %s18
      %v185 = vld [vmem:[%s172] ss:$4 sm:$0xff]
      %s186 = scalar_lea.vmem %s172, 32
      %v187 = vld [vmem:[%s186] ss:$4 sm:$0xff]
      %v188 = vld [vmem:[%s1] sm:$0xff]
      %v189 = vld [vmem:[%s1 + $0x8] sm:$0xff]
      %vm190 = vcmask 130048
      %v192 = vsel %vm190, %v185, 0
      %v195 = vsel %vm190, %v187, 0
      %197 = vmatprep.subr.mxu0 0.0
      %v198 = vand.u32 %v188, 4294901760
      %199 = vmatpush1.msra.mxu0 %v198
      %200 = vmatprep.subr.mxu0 0.0
      %v201 = vand.u32 %v189, 4294901760
      %202 = vmatpush1.msra.mxu0 %v201
      %203 = vmatprep.subr.mxu0 0.0
      %204 = vmatpush1.msra.mxu0 0.0
      %205 = vmatprep.subr.mxu0 0.0
      %206 = vmatpush1.msra.mxu0 0.0
      %207 = vmatprep.subr.mxu0 0.0
      %208 = vmatpush1.msra.mxu0 0.0
      %209 = vmatprep.subr.mxu0 0.0
      %210 = vmatpush1.msra.mxu0 0.0
      %211 = vmatprep.subr.mxu0 0.0
      %212 = vmatpush1.msra.mxu0 0.0
      %213 = vmatprep.subr.mxu0 0.0
      %214 = vmatpush1.msra.mxu0 0.0
      %215 = vmatprep.subr.mxu0 0.0
      %216 = vmatpush1.msra.mxu0 0.0
      %217 = vmatprep.subr.mxu0 0.0
      %218 = vmatpush1.msra.mxu0 0.0
      %219 = vmatprep.subr.mxu0 0.0
      %220 = vmatpush1.msra.mxu0 0.0
      %221 = vmatprep.subr.mxu0 0.0
      %222 = vmatpush1.msra.mxu0 0.0
      %223 = vmatprep.subr.mxu0 0.0
      %224 = vmatpush1.msra.mxu0 0.0
      %225 = vmatprep.subr.mxu0 0.0
      %226 = vmatpush1.msra.mxu0 0.0
      %227 = vmatprep.subr.mxu0 0.0
      %228 = vmatpush1.msra.mxu0 0.0
      %229 = vmatprep.subr.mxu0 0.0
      %230 = vmatpush1.msra.mxu0 0.0
      %231 = vmatprep.subr.mxu0 0.0
      %232 = vmatpush1.msra.mxu0 0.0
      %233 = vmatprep.subr.mxu0 0.0
      %234 = vmatpush1.msra.mxu0 0.0
      %235 = vmatprep.subr.mxu0 0.0
      %236 = vmatpush1.msra.mxu0 0.0
      %237 = vmatprep.subr.mxu0 0.0
      %238 = vmatpush1.msra.mxu0 0.0
      %239 = vmatprep.subr.mxu0 0.0
      %240 = vmatpush1.msra.mxu0 0.0
      %241 = vmatprep.subr.mxu0 0.0
      %242 = vmatpush1.msra.mxu0 0.0
      %243 = vmatprep.subr.mxu0 0.0
      %244 = vmatpush1.msra.mxu0 0.0
      %245 = vmatprep.subr.mxu0 0.0
      %246 = vmatpush1.msra.mxu0 0.0
      %247 = vmatprep.subr.mxu0 0.0
      %248 = vmatpush1.msra.mxu0 0.0
      %249 = vmatprep.subr.mxu0 0.0
      %250 = vmatpush1.msra.mxu0 0.0
      %251 = vmatprep.subr.mxu0 0.0
      %252 = vmatpush1.msra.mxu0 0.0
      %253 = vmatprep.subr.mxu0 0.0
      %254 = vmatpush1.msra.mxu0 0.0
      %255 = vmatprep.subr.mxu0 0.0
      %256 = vmatpush1.msra.mxu0 0.0
      %257 = vmatprep.subr.mxu0 0.0
      %258 = vmatpush1.msra.mxu0 0.0
      %259 = vmatprep.subr.mxu0 0.0
      %260 = vmatpush1.msra.mxu0 0.0
      %261 = vmatprep.subr.mxu0 0.0
      %262 = vmatpush1.msra.mxu0 0.0
      %263 = vmatprep.mubr.f32.mxu0 0.0
      %v264 = vand.u32 %v192, 4294901760
      %v265 = vsub.f32 %v192, %v264
      %v266 = vand.u32 %v265, 4294901760
      %v267 = vsub.f32 %v265, %v266
      %v268 = vand.u32 %v267, 4294901760
      %269 = vmatmul.mubr.f32.gmra.mrb[0].mxu0 %v268
      %v270 = vpop.f32.mrb[0].mxu0
      %v271 = vadd.f32 0.0, %v270
      %v272 = vpop.f32.mrb[0].mxu0
      %273 = vmatprep.mubr.f32.mxu0 0.0
      %v274 = vand.u32 %v195, 4294901760
      %v275 = vsub.f32 %v195, %v274
      %v276 = vand.u32 %v275, 4294901760
      %v277 = vsub.f32 %v275, %v276
      %v278 = vand.u32 %v277, 4294901760
      %279 = vmatmul.mubr.f32.gmra.mrb[0].mxu0 %v278
      %v280 = vpop.f32.mrb[0].mxu0
      %v281 = vadd.f32 0.0, %v280
      %v282 = vpop.f32.mrb[0].mxu0
      %283 = vdwg.mxu0
      %284 = vmatprep.subr.mxu0 0.0
      %v285 = vand.u32 %v188, 4294901760
      %v286 = vsub.f32 %v188, %v285
      %v287 = vand.u32 %v286, 4294901760
      %v288 = vsub.f32 %v286, %v287
      %v289 = vand.u32 %v288, 4294901760
      %290 = vmatpush1.msra.mxu0 %v289
      %291 = vmatprep.subr.mxu0 0.0
      %v292 = vand.u32 %v189, 4294901760
      %v293 = vsub.f32 %v189, %v292
      %v294 = vand.u32 %v293, 4294901760
      %v295 = vsub.f32 %v293, %v294
      %v296 = vand.u32 %v295, 4294901760
      %297 = vmatpush1.msra.mxu0 %v296
      %298 = vmatprep.subr.mxu0 0.0
      %299 = vmatpush1.msra.mxu0 0.0
      %300 = vmatprep.subr.mxu0 0.0
      %301 = vmatpush1.msra.mxu0 0.0
      %302 = vmatprep.subr.mxu0 0.0
      %303 = vmatpush1.msra.mxu0 0.0
      %304 = vmatprep.subr.mxu0 0.0
      %305 = vmatpush1.msra.mxu0 0.0
      %306 = vmatprep.subr.mxu0 0.0
      %307 = vmatpush1.msra.mxu0 0.0
      %308 = vmatprep.subr.mxu0 0.0
      %309 = vmatpush1.msra.mxu0 0.0
      %310 = vmatprep.subr.mxu0 0.0
      %311 = vmatpush1.msra.mxu0 0.0
      %312 = vmatprep.subr.mxu0 0.0
      %313 = vmatpush1.msra.mxu0 0.0
      %314 = vmatprep.subr.mxu0 0.0
      %315 = vmatpush1.msra.mxu0 0.0
      %316 = vmatprep.subr.mxu0 0.0
      %317 = vmatpush1.msra.mxu0 0.0
      %318 = vmatprep.subr.mxu0 0.0
      %319 = vmatpush1.msra.mxu0 0.0
      %320 = vmatprep.subr.mxu0 0.0
      %321 = vmatpush1.msra.mxu0 0.0
      %322 = vmatprep.subr.mxu0 0.0
      %323 = vmatpush1.msra.mxu0 0.0
      %324 = vmatprep.subr.mxu0 0.0
      %325 = vmatpush1.msra.mxu0 0.0
      %326 = vmatprep.subr.mxu0 0.0
      %327 = vmatpush1.msra.mxu0 0.0
      %328 = vmatprep.subr.mxu0 0.0
      %329 = vmatpush1.msra.mxu0 0.0
      %330 = vmatprep.subr.mxu0 0.0
      %331 = vmatpush1.msra.mxu0 0.0
      %332 = vmatprep.subr.mxu0 0.0
      %333 = vmatpush1.msra.mxu0 0.0
      %334 = vmatprep.subr.mxu0 0.0
      %335 = vmatpush1.msra.mxu0 0.0
      %336 = vmatprep.subr.mxu0 0.0
      %337 = vmatpush1.msra.mxu0 0.0
      %338 = vmatprep.subr.mxu0 0.0
      %339 = vmatpush1.msra.mxu0 0.0
      %340 = vmatprep.subr.mxu0 0.0
      %341 = vmatpush1.msra.mxu0 0.0
      %342 = vmatprep.subr.mxu0 0.0
      %343 = vmatpush1.msra.mxu0 0.0
      %344 = vmatprep.subr.mxu0 0.0
      %345 = vmatpush1.msra.mxu0 0.0
      %346 = vmatprep.subr.mxu0 0.0
      %347 = vmatpush1.msra.mxu0 0.0
      %348 = vmatprep.subr.mxu0 0.0
      %349 = vmatpush1.msra.mxu0 0.0
      %350 = vmatprep.subr.mxu0 0.0
      %351 = vmatpush1.msra.mxu0 0.0
      %352 = vmatprep.subr.mxu0 0.0
      %353 = vmatpush1.msra.mxu0 0.0
      %354 = vmatprep.subr.mxu0 0.0
      %355 = vmatpush1.msra.mxu0 0.0
      %356 = vmatprep.subr.mxu0 0.0
      %357 = vmatpush1.msra.mxu0 0.0
      %358 = vmatprep.mubr.f32.mxu0 0.0
      %v359 = vand.u32 %v192, 4294901760
      %360 = vmatmul.mubr.f32.gmra.mrb[0].mxu0 %v359
      %v361 = vpop.f32.mrb[0].mxu0
      %v362 = vadd.f32 %v271, %v361
      %v363 = vpop.f32.mrb[0].mxu0
      %364 = vmatprep.mubr.f32.mxu0 0.0
      %v365 = vand.u32 %v195, 4294901760
      %366 = vmatmul.mubr.f32.gmra.mrb[0].mxu0 %v365
      %v367 = vpop.f32.mrb[0].mxu0
      %v368 = vadd.f32 %v281, %v367
      %v369 = vpop.f32.mrb[0].mxu0
      %370 = vdwg.mxu0
      %371 = vmatprep.subr.mxu0 0.0
      %v372 = vand.u32 %v188, 4294901760
      %v373 = vsub.f32 %v188, %v372
      %374 = vmatpush1.msra.mxu0 %v373
      %375 = vmatprep.subr.mxu0 0.0
      %v376 = vand.u32 %v189, 4294901760
      %v377 = vsub.f32 %v189, %v376
      %378 = vmatpush1.msra.mxu0 %v377
      %379 = vmatprep.subr.mxu0 0.0
      %380 = vmatpush1.msra.mxu0 0.0
      %381 = vmatprep.subr.mxu0 0.0
      %382 = vmatpush1.msra.mxu0 0.0
      %383 = vmatprep.subr.mxu0 0.0
      %384 = vmatpush1.msra.mxu0 0.0
      %385 = vmatprep.subr.mxu0 0.0
      %386 = vmatpush1.msra.mxu0 0.0
      %387 = vmatprep.subr.mxu0 0.0
      %388 = vmatpush1.msra.mxu0 0.0
      %389 = vmatprep.subr.mxu0 0.0
      %390 = vmatpush1.msra.mxu0 0.0
      %391 = vmatprep.subr.mxu0 0.0
      %392 = vmatpush1.msra.mxu0 0.0
      %393 = vmatprep.subr.mxu0 0.0
      %394 = vmatpush1.msra.mxu0 0.0
      %395 = vmatprep.subr.mxu0 0.0
      %396 = vmatpush1.msra.mxu0 0.0
      %397 = vmatprep.subr.mxu0 0.0
      %398 = vmatpush1.msra.mxu0 0.0
      %399 = vmatprep.subr.mxu0 0.0
      %400 = vmatpush1.msra.mxu0 0.0
      %401 = vmatprep.subr.mxu0 0.0
      %402 = vmatpush1.msra.mxu0 0.0
      %403 = vmatprep.subr.mxu0 0.0
      %404 = vmatpush1.msra.mxu0 0.0
      %405 = vmatprep.subr.mxu0 0.0
      %406 = vmatpush1.msra.mxu0 0.0
      %407 = vmatprep.subr.mxu0 0.0
      %408 = vmatpush1.msra.mxu0 0.0
      %409 = vmatprep.subr.mxu0 0.0
      %410 = vmatpush1.msra.mxu0 0.0
      %411 = vmatprep.subr.mxu0 0.0
      %412 = vmatpush1.msra.mxu0 0.0
      %413 = vmatprep.subr.mxu0 0.0
      %414 = vmatpush1.msra.mxu0 0.0
      %415 = vmatprep.subr.mxu0 0.0
      %416 = vmatpush1.msra.mxu0 0.0
      %417 = vmatprep.subr.mxu0 0.0
      %418 = vmatpush1.msra.mxu0 0.0
      %419 = vmatprep.subr.mxu0 0.0
      %420 = vmatpush1.msra.mxu0 0.0
      %421 = vmatprep.subr.mxu0 0.0
      %422 = vmatpush1.msra.mxu0 0.0
      %423 = vmatprep.subr.mxu0 0.0
      %424 = vmatpush1.msra.mxu0 0.0
      %425 = vmatprep.subr.mxu0 0.0
      %426 = vmatpush1.msra.mxu0 0.0
      %427 = vmatprep.subr.mxu0 0.0
      %428 = vmatpush1.msra.mxu0 0.0
      %429 = vmatprep.subr.mxu0 0.0
      %430 = vmatpush1.msra.mxu0 0.0
      %431 = vmatprep.subr.mxu0 0.0
      %432 = vmatpush1.msra.mxu0 0.0
      %433 = vmatprep.subr.mxu0 0.0
      %434 = vmatpush1.msra.mxu0 0.0
      %435 = vmatprep.subr.mxu0 0.0
      %436 = vmatpush1.msra.mxu0 0.0
      %437 = vmatprep.subr.mxu0 0.0
      %438 = vmatpush1.msra.mxu0 0.0
      %439 = vmatprep.mubr.f32.mxu0 0.0
      %v440 = vand.u32 %v192, 4294901760
      %v441 = vsub.f32 %v192, %v440
      %442 = vmatmul.mubr.f32.gmra.mrb[0].mxu0 %v441
      %v443 = vpop.f32.mrb[0].mxu0
      %v444 = vadd.f32 %v362, %v443
      %v445 = vpop.f32.mrb[0].mxu0
      %446 = vmatprep.mubr.f32.mxu0 0.0
      %v447 = vand.u32 %v195, 4294901760
      %v448 = vsub.f32 %v195, %v447
      %449 = vmatmul.mubr.f32.gmra.mrb[0].mxu0 %v448
      %v450 = vpop.f32.mrb[0].mxu0
      %v451 = vadd.f32 %v368, %v450
      %v452 = vpop.f32.mrb[0].mxu0
      %453 = vdwg.mxu0
      %454 = vmatprep.subr.mxu0 0.0
      %v455 = vand.u32 %v188, 4294901760
      %456 = vmatpush1.msra.mxu0 %v455
      %457 = vmatprep.subr.mxu0 0.0
      %v458 = vand.u32 %v189, 4294901760
      %459 = vmatpush1.msra.mxu0 %v458
      %460 = vmatprep.subr.mxu0 0.0
      %461 = vmatpush1.msra.mxu0 0.0
      %462 = vmatprep.subr.mxu0 0.0
      %463 = vmatpush1.msra.mxu0 0.0
      %464 = vmatprep.subr.mxu0 0.0
      %465 = vmatpush1.msra.mxu0 0.0
      %466 = vmatprep.subr.mxu0 0.0
      %467 = vmatpush1.msra.mxu0 0.0
      %468 = vmatprep.subr.mxu0 0.0
      %469 = vmatpush1.msra.mxu0 0.0
      %470 = vmatprep.subr.mxu0 0.0
      %471 = vmatpush1.msra.mxu0 0.0
      %472 = vmatprep.subr.mxu0 0.0
      %473 = vmatpush1.msra.mxu0 0.0
      %474 = vmatprep.subr.mxu0 0.0
      %475 = vmatpush1.msra.mxu0 0.0
      %476 = vmatprep.subr.mxu0 0.0
      %477 = vmatpush1.msra.mxu0 0.0
      %478 = vmatprep.subr.mxu0 0.0
      %479 = vmatpush1.msra.mxu0 0.0
      %480 = vmatprep.subr.mxu0 0.0
      %481 = vmatpush1.msra.mxu0 0.0
      %482 = vmatprep.subr.mxu0 0.0
      %483 = vmatpush1.msra.mxu0 0.0
      %484 = vmatprep.subr.mxu0 0.0
      %485 = vmatpush1.msra.mxu0 0.0
      %486 = vmatprep.subr.mxu0 0.0
      %487 = vmatpush1.msra.mxu0 0.0
      %488 = vmatprep.subr.mxu0 0.0
      %489 = vmatpush1.msra.mxu0 0.0
      %490 = vmatprep.subr.mxu0 0.0
      %491 = vmatpush1.msra.mxu0 0.0
      %492 = vmatprep.subr.mxu0 0.0
      %493 = vmatpush1.msra.mxu0 0.0
      %494 = vmatprep.subr.mxu0 0.0
      %495 = vmatpush1.msra.mxu0 0.0
      %496 = vmatprep.subr.mxu0 0.0
      %497 = vmatpush1.msra.mxu0 0.0
      %498 = vmatprep.subr.mxu0 0.0
      %499 = vmatpush1.msra.mxu0 0.0
      %500 = vmatprep.subr.mxu0 0.0
      %501 = vmatpush1.msra.mxu0 0.0
      %502 = vmatprep.subr.mxu0 0.0
      %503 = vmatpush1.msra.mxu0 0.0
      %504 = vmatprep.subr.mxu0 0.0
      %505 = vmatpush1.msra.mxu0 0.0
      %506 = vmatprep.subr.mxu0 0.0
      %507 = vmatpush1.msra.mxu0 0.0
      %508 = vmatprep.subr.mxu0 0.0
      %509 = vmatpush1.msra.mxu0 0.0
      %510 = vmatprep.subr.mxu0 0.0
      %511 = vmatpush1.msra.mxu0 0.0
      %512 = vmatprep.subr.mxu0 0.0
      %513 = vmatpush1.msra.mxu0 0.0
      %514 = vmatprep.subr.mxu0 0.0
      %515 = vmatpush1.msra.mxu0 0.0
      %516 = vmatprep.subr.mxu0 0.0
      %517 = vmatpush1.msra.mxu0 0.0
      %518 = vmatprep.subr.mxu0 0.0
      %519 = vmatpush1.msra.mxu0 0.0
      %520 = vmatprep.mubr.f32.mxu0 0.0
      %v521 = vand.u32 %v192, 4294901760
      %v522 = vsub.f32 %v192, %v521
      %v523 = vand.u32 %v522, 4294901760
      %524 = vmatmul.mubr.f32.gmra.mrb[0].mxu0 %v523
      %v525 = vpop.f32.mrb[0].mxu0
      %v526 = vadd.f32 %v444, %v525
      %v527 = vpop.f32.mrb[0].mxu0
      %528 = vmatprep.mubr.f32.mxu0 0.0
      %v529 = vand.u32 %v195, 4294901760
      %v530 = vsub.f32 %v195, %v529
      %v531 = vand.u32 %v530, 4294901760
      %532 = vmatmul.mubr.f32.gmra.mrb[0].mxu0 %v531
      %v533 = vpop.f32.mrb[0].mxu0
      %v534 = vadd.f32 %v451, %v533
      %v535 = vpop.f32.mrb[0].mxu0
      %536 = vdwg.mxu0
      %537 = vmatprep.subr.mxu0 0.0
      %v538 = vand.u32 %v188, 4294901760
      %v539 = vsub.f32 %v188, %v538
      %v540 = vand.u32 %v539, 4294901760
      %541 = vmatpush1.msra.mxu0 %v540
      %542 = vmatprep.subr.mxu0 0.0
      %v543 = vand.u32 %v189, 4294901760
      %v544 = vsub.f32 %v189, %v543
      %v545 = vand.u32 %v544, 4294901760
      %546 = vmatpush1.msra.mxu0 %v545
      %547 = vmatprep.subr.mxu0 0.0
      %548 = vmatpush1.msra.mxu0 0.0
      %549 = vmatprep.subr.mxu0 0.0
      %550 = vmatpush1.msra.mxu0 0.0
      %551 = vmatprep.subr.mxu0 0.0
      %552 = vmatpush1.msra.mxu0 0.0
      %553 = vmatprep.subr.mxu0 0.0
      %554 = vmatpush1.msra.mxu0 0.0
      %555 = vmatprep.subr.mxu0 0.0
      %556 = vmatpush1.msra.mxu0 0.0
      %557 = vmatprep.subr.mxu0 0.0
      %558 = vmatpush1.msra.mxu0 0.0
      %559 = vmatprep.subr.mxu0 0.0
      %560 = vmatpush1.msra.mxu0 0.0
      %561 = vmatprep.subr.mxu0 0.0
      %562 = vmatpush1.msra.mxu0 0.0
      %563 = vmatprep.subr.mxu0 0.0
      %564 = vmatpush1.msra.mxu0 0.0
      %565 = vmatprep.subr.mxu0 0.0
      %566 = vmatpush1.msra.mxu0 0.0
      %567 = vmatprep.subr.mxu0 0.0
      %568 = vmatpush1.msra.mxu0 0.0
      %569 = vmatprep.subr.mxu0 0.0
      %570 = vmatpush1.msra.mxu0 0.0
      %571 = vmatprep.subr.mxu0 0.0
      %572 = vmatpush1.msra.mxu0 0.0
      %573 = vmatprep.subr.mxu0 0.0
      %574 = vmatpush1.msra.mxu0 0.0
      %575 = vmatprep.subr.mxu0 0.0
      %576 = vmatpush1.msra.mxu0 0.0
      %577 = vmatprep.subr.mxu0 0.0
      %578 = vmatpush1.msra.mxu0 0.0
      %579 = vmatprep.subr.mxu0 0.0
      %580 = vmatpush1.msra.mxu0 0.0
      %581 = vmatprep.subr.mxu0 0.0
      %582 = vmatpush1.msra.mxu0 0.0
      %583 = vmatprep.subr.mxu0 0.0
      %584 = vmatpush1.msra.mxu0 0.0
      %585 = vmatprep.subr.mxu0 0.0
      %586 = vmatpush1.msra.mxu0 0.0
      %587 = vmatprep.subr.mxu0 0.0
      %588 = vmatpush1.msra.mxu0 0.0
      %589 = vmatprep.subr.mxu0 0.0
      %590 = vmatpush1.msra.mxu0 0.0
      %591 = vmatprep.subr.mxu0 0.0
      %592 = vmatpush1.msra.mxu0 0.0
      %593 = vmatprep.subr.mxu0 0.0
      %594 = vmatpush1.msra.mxu0 0.0
      %595 = vmatprep.subr.mxu0 0.0
      %596 = vmatpush1.msra.mxu0 0.0
      %597 = vmatprep.subr.mxu0 0.0
      %598 = vmatpush1.msra.mxu0 0.0
      %599 = vmatprep.subr.mxu0 0.0
      %600 = vmatpush1.msra.mxu0 0.0
      %601 = vmatprep.subr.mxu0 0.0
      %602 = vmatpush1.msra.mxu0 0.0
      %603 = vmatprep.subr.mxu0 0.0
      %604 = vmatpush1.msra.mxu0 0.0
      %605 = vmatprep.subr.mxu0 0.0
      %606 = vmatpush1.msra.mxu0 0.0
      %607 = vmatprep.mubr.f32.mxu0 0.0
      %v608 = vand.u32 %v192, 4294901760
      %609 = vmatmul.mubr.f32.gmra.mrb[0].mxu0 %v608
      %v610 = vpop.f32.mrb[0].mxu0
      %v611 = vadd.f32 %v526, %v610
      %v612 = vpop.f32.mrb[0].mxu0
      %613 = vmatprep.mubr.f32.mxu0 0.0
      %v614 = vand.u32 %v195, 4294901760
      %615 = vmatmul.mubr.f32.gmra.mrb[0].mxu0 %v614
      %v616 = vpop.f32.mrb[0].mxu0
      %v617 = vadd.f32 %v534, %v616
      %v618 = vpop.f32.mrb[0].mxu0
      %619 = vdwg.mxu0
      %620 = vmatprep.subr.mxu0 0.0
      %v621 = vand.u32 %v188, 4294901760
      %622 = vmatpush1.msra.mxu0 %v621
      %623 = vmatprep.subr.mxu0 0.0
      %v624 = vand.u32 %v189, 4294901760
      %625 = vmatpush1.msra.mxu0 %v624
      %626 = vmatprep.subr.mxu0 0.0
      %627 = vmatpush1.msra.mxu0 0.0
      %628 = vmatprep.subr.mxu0 0.0
      %629 = vmatpush1.msra.mxu0 0.0
      %630 = vmatprep.subr.mxu0 0.0
      %631 = vmatpush1.msra.mxu0 0.0
      %632 = vmatprep.subr.mxu0 0.0
      %633 = vmatpush1.msra.mxu0 0.0
      %634 = vmatprep.subr.mxu0 0.0
      %635 = vmatpush1.msra.mxu0 0.0
      %636 = vmatprep.subr.mxu0 0.0
      %637 = vmatpush1.msra.mxu0 0.0
      %638 = vmatprep.subr.mxu0 0.0
      %639 = vmatpush1.msra.mxu0 0.0
      %640 = vmatprep.subr.mxu0 0.0
      %641 = vmatpush1.msra.mxu0 0.0
      %642 = vmatprep.subr.mxu0 0.0
      %643 = vmatpush1.msra.mxu0 0.0
      %644 = vmatprep.subr.mxu0 0.0
      %645 = vmatpush1.msra.mxu0 0.0
      %646 = vmatprep.subr.mxu0 0.0
      %647 = vmatpush1.msra.mxu0 0.0
      %648 = vmatprep.subr.mxu0 0.0
      %649 = vmatpush1.msra.mxu0 0.0
      %650 = vmatprep.subr.mxu0 0.0
      %651 = vmatpush1.msra.mxu0 0.0
      %652 = vmatprep.subr.mxu0 0.0
      %653 = vmatpush1.msra.mxu0 0.0
      %654 = vmatprep.subr.mxu0 0.0
      %655 = vmatpush1.msra.mxu0 0.0
      %656 = vmatprep.subr.mxu0 0.0
      %657 = vmatpush1.msra.mxu0 0.0
      %658 = vmatprep.subr.mxu0 0.0
      %659 = vmatpush1.msra.mxu0 0.0
      %660 = vmatprep.subr.mxu0 0.0
      %661 = vmatpush1.msra.mxu0 0.0
      %662 = vmatprep.subr.mxu0 0.0
      %663 = vmatpush1.msra.mxu0 0.0
      %664 = vmatprep.subr.mxu0 0.0
      %665 = vmatpush1.msra.mxu0 0.0
      %666 = vmatprep.subr.mxu0 0.0
      %667 = vmatpush1.msra.mxu0 0.0
      %668 = vmatprep.subr.mxu0 0.0
      %669 = vmatpush1.msra.mxu0 0.0
      %670 = vmatprep.subr.mxu0 0.0
      %671 = vmatpush1.msra.mxu0 0.0
      %672 = vmatprep.subr.mxu0 0.0
      %673 = vmatpush1.msra.mxu0 0.0
      %674 = vmatprep.subr.mxu0 0.0
      %675 = vmatpush1.msra.mxu0 0.0
      %676 = vmatprep.subr.mxu0 0.0
      %677 = vmatpush1.msra.mxu0 0.0
      %678 = vmatprep.subr.mxu0 0.0
      %679 = vmatpush1.msra.mxu0 0.0
      %680 = vmatprep.subr.mxu0 0.0
      %681 = vmatpush1.msra.mxu0 0.0
      %682 = vmatprep.subr.mxu0 0.0
      %683 = vmatpush1.msra.mxu0 0.0
      %684 = vmatprep.subr.mxu0 0.0
      %685 = vmatpush1.msra.mxu0 0.0
      %686 = vmatprep.mubr.f32.mxu0 0.0
      %v687 = vand.u32 %v192, 4294901760
      %688 = vmatmul.mubr.f32.gmra.mrb[0].mxu0 %v687
      %v689 = vpop.f32.mrb[0].mxu0
      %v690 = vadd.f32 %v611, %v689
      %v691 = vpop.f32.mrb[0].mxu0
      %692 = vmatprep.mubr.f32.mxu0 0.0
      %v693 = vand.u32 %v195, 4294901760
      %694 = vmatmul.mubr.f32.gmra.mrb[0].mxu0 %v693
      %v695 = vpop.f32.mrb[0].mxu0
      %v696 = vadd.f32 %v617, %v695
      %v697 = vpop.f32.mrb[0].mxu0
      %698 = vdwg.mxu0
      %vm699 = vcmask 27648
      %700 = vst.msk [vmem:[%s183] sm:$0xf] %vm699, %v690
      %s701 = scalar_lea.vmem %s183, 64
      %vm702 = vcmask 31748
      %703 = vst.msk [vmem:[%s701 - $0x4] sm:$0xf0] %vm702, %v690
      %s704 = scalar_lea.vmem %s183, 128
      %705 = vst.msk [vmem:[%s704] sm:$0xf] %vm699, %v696
      %s706 = scalar_lea.vmem %s183, 192
      %707 = vst.msk [vmem:[%s706 - $0x4] sm:$0xf0] %vm702, %v696
      %709 = vrot.lane.b32.xlu0 %v690, 124
      %v710 = vpop.permute.xlu0 %709
      %s712 = scalar_lea.vmem %s183, 16
      %713 = vst.msk [vmem:[%s712] sm:$0xf] %vm699, %v710
      %s714 = scalar_lea.vmem %s183, 80
      %715 = vst.msk [vmem:[%s714 - $0x4] sm:$0xf0] %vm702, %v710
      %717 = vrot.lane.b32.xlu0 %v696, 124
      %v718 = vpop.permute.xlu0 %717
      %s720 = scalar_lea.vmem %s183, 144
      %721 = vst.msk [vmem:[%s720] sm:$0xf] %vm699, %v718
      %s722 = scalar_lea.vmem %s183, 208
      %723 = vst.msk [vmem:[%s722 - $0x4] sm:$0xf0] %vm702, %v718
      %724 = vrot.lane.b32.xlu0 %v690, 120
      %v725 = vpop.permute.xlu0 %724
      %s727 = scalar_lea.vmem %s183, 4
      %728 = vst.msk [vmem:[%s727] sm:$0xf] %vm699, %v725
      %s729 = scalar_lea.vmem %s183, 68
      %730 = vst.msk [vmem:[%s729 - $0x4] sm:$0xf0] %vm702, %v725
      %731 = vrot.lane.b32.xlu0 %v696, 120
      %v732 = vpop.permute.xlu0 %731
      %s734 = scalar_lea.vmem %s183, 132
      %735 = vst.msk [vmem:[%s734] sm:$0xf] %vm699, %v732
      %s736 = scalar_lea.vmem %s183, 196
      %737 = vst.msk [vmem:[%s736 - $0x4] sm:$0xf0] %vm702, %v732
      %738 = vrot.lane.b32.xlu0 %v690, 116
      %v739 = vpop.permute.xlu0 %738
      %s741 = scalar_lea.vmem %s183, 20
      %742 = vst.msk [vmem:[%s741] sm:$0xf] %vm699, %v739
      %s743 = scalar_lea.vmem %s183, 84
      %744 = vst.msk [vmem:[%s743 - $0x4] sm:$0xf0] %vm702, %v739
      %745 = vrot.lane.b32.xlu0 %v696, 116
      %v746 = vpop.permute.xlu0 %745
      %s748 = scalar_lea.vmem %s183, 148
      %749 = vst.msk [vmem:[%s748] sm:$0xf] %vm699, %v746
      %s750 = scalar_lea.vmem %s183, 212
      %751 = vst.msk [vmem:[%s750 - $0x4] sm:$0xf0] %vm702, %v746
      %s752 = scalar_lea.vmem %s172, 1
      %v753 = vld [vmem:[%s752] ss:$4 sm:$0xff]
      %s754 = scalar_lea.vmem %s172, 33
      %v755 = vld [vmem:[%s754] ss:$4 sm:$0xff]
      %v756 = vld [vmem:[%s1] sm:$0xff]
      %v757 = vld [vmem:[%s1 + $0x8] sm:$0xff]
      %v759 = vsel %vm190, %v753, 0
      %v762 = vsel %vm190, %v755, 0
      %764 = vmatprep.subr.mxu0 0.0
      %v765 = vand.u32 %v756, 4294901760
      %766 = vmatpush1.msra.mxu0 %v765
      %767 = vmatprep.subr.mxu0 0.0
      %v768 = vand.u32 %v757, 4294901760
      %769 = vmatpush1.msra.mxu0 %v768
      %770 = vmatprep.subr.mxu0 0.0
      %771 = vmatpush1.msra.mxu0 0.0
      %772 = vmatprep.subr.mxu0 0.0
      %773 = vmatpush1.msra.mxu0 0.0
      %774 = vmatprep.subr.mxu0 0.0
      %775 = vmatpush1.msra.mxu0 0.0
      %776 = vmatprep.subr.mxu0 0.0
      %777 = vmatpush1.msra.mxu0 0.0
      %778 = vmatprep.subr.mxu0 0.0
      %779 = vmatpush1.msra.mxu0 0.0
      %780 = vmatprep.subr.mxu0 0.0
      %781 = vmatpush1.msra.mxu0 0.0
      %782 = vmatprep.subr.mxu0 0.0
      %783 = vmatpush1.msra.mxu0 0.0
      %784 = vmatprep.subr.mxu0 0.0
      %785 = vmatpush1.msra.mxu0 0.0
      %786 = vmatprep.subr.mxu0 0.0
      %787 = vmatpush1.msra.mxu0 0.0
      %788 = vmatprep.subr.mxu0 0.0
      %789 = vmatpush1.msra.mxu0 0.0
      %790 = vmatprep.subr.mxu0 0.0
      %791 = vmatpush1.msra.mxu0 0.0
      %792 = vmatprep.subr.mxu0 0.0
      %793 = vmatpush1.msra.mxu0 0.0
      %794 = vmatprep.subr.mxu0 0.0
      %795 = vmatpush1.msra.mxu0 0.0
      %796 = vmatprep.subr.mxu0 0.0
      %797 = vmatpush1.msra.mxu0 0.0
      %798 = vmatprep.subr.mxu0 0.0
      %799 = vmatpush1.msra.mxu0 0.0
      %800 = vmatprep.subr.mxu0 0.0
      %801 = vmatpush1.msra.mxu0 0.0
      %802 = vmatprep.subr.mxu0 0.0
      %803 = vmatpush1.msra.mxu0 0.0
      %804 = vmatprep.subr.mxu0 0.0
      %805 = vmatpush1.msra.mxu0 0.0
      %806 = vmatprep.subr.mxu0 0.0
      %807 = vmatpush1.msra.mxu0 0.0
      %808 = vmatprep.subr.mxu0 0.0
      %809 = vmatpush1.msra.mxu0 0.0
      %810 = vmatprep.subr.mxu0 0.0
      %811 = vmatpush1.msra.mxu0 0.0
      %812 = vmatprep.subr.mxu0 0.0
      %813 = vmatpush1.msra.mxu0 0.0
      %814 = vmatprep.subr.mxu0 0.0
      %815 = vmatpush1.msra.mxu0 0.0
      %816 = vmatprep.subr.mxu0 0.0
      %817 = vmatpush1.msra.mxu0 0.0
      %818 = vmatprep.subr.mxu0 0.0
      %819 = vmatpush1.msra.mxu0 0.0
      %820 = vmatprep.subr.mxu0 0.0
      %821 = vmatpush1.msra.mxu0 0.0
      %822 = vmatprep.subr.mxu0 0.0
      %823 = vmatpush1.msra.mxu0 0.0
      %824 = vmatprep.subr.mxu0 0.0
      %825 = vmatpush1.msra.mxu0 0.0
      %826 = vmatprep.subr.mxu0 0.0
      %827 = vmatpush1.msra.mxu0 0.0
      %828 = vmatprep.subr.mxu0 0.0
      %829 = vmatpush1.msra.mxu0 0.0
      %830 = vmatprep.mubr.f32.mxu0 0.0
      %v831 = vand.u32 %v759, 4294901760
      %v832 = vsub.f32 %v759, %v831
      %v833 = vand.u32 %v832, 4294901760
      %v834 = vsub.f32 %v832, %v833
      %v835 = vand.u32 %v834, 4294901760
      %836 = vmatmul.mubr.f32.gmra.mrb[0].mxu0 %v835
      %v837 = vpop.f32.mrb[0].mxu0
      %v838 = vadd.f32 0.0, %v837
      %v839 = vpop.f32.mrb[0].mxu0
      %840 = vmatprep.mubr.f32.mxu0 0.0
      %v841 = vand.u32 %v762, 4294901760
      %v842 = vsub.f32 %v762, %v841
      %v843 = vand.u32 %v842, 4294901760
      %v844 = vsub.f32 %v842, %v843
      %v845 = vand.u32 %v844, 4294901760
      %846 = vmatmul.mubr.f32.gmra.mrb[0].mxu0 %v845
      %v847 = vpop.f32.mrb[0].mxu0
      %v848 = vadd.f32 0.0, %v847
      %v849 = vpop.f32.mrb[0].mxu0
      %850 = vdwg.mxu0
      %851 = vmatprep.subr.mxu0 0.0
      %v852 = vand.u32 %v756, 4294901760
      %v853 = vsub.f32 %v756, %v852
      %v854 = vand.u32 %v853, 4294901760
      %v855 = vsub.f32 %v853, %v854
      %v856 = vand.u32 %v855, 4294901760
      %857 = vmatpush1.msra.mxu0 %v856
      %858 = vmatprep.subr.mxu0 0.0
      %v859 = vand.u32 %v757, 4294901760
      %v860 = vsub.f32 %v757, %v859
      %v861 = vand.u32 %v860, 4294901760
      %v862 = vsub.f32 %v860, %v861
      %v863 = vand.u32 %v862, 4294901760
      %864 = vmatpush1.msra.mxu0 %v863
      %865 = vmatprep.subr.mxu0 0.0
      %866 = vmatpush1.msra.mxu0 0.0
      %867 = vmatprep.subr.mxu0 0.0
      %868 = vmatpush1.msra.mxu0 0.0
      %869 = vmatprep.subr.mxu0 0.0
      %870 = vmatpush1.msra.mxu0 0.0
      %871 = vmatprep.subr.mxu0 0.0
      %872 = vmatpush1.msra.mxu0 0.0
      %873 = vmatprep.subr.mxu0 0.0
      %874 = vmatpush1.msra.mxu0 0.0
      %875 = vmatprep.subr.mxu0 0.0
      %876 = vmatpush1.msra.mxu0 0.0
      %877 = vmatprep.subr.mxu0 0.0
      %878 = vmatpush1.msra.mxu0 0.0
      %879 = vmatprep.subr.mxu0 0.0
      %880 = vmatpush1.msra.mxu0 0.0
      %881 = vmatprep.subr.mxu0 0.0
      %882 = vmatpush1.msra.mxu0 0.0
      %883 = vmatprep.subr.mxu0 0.0
      %884 = vmatpush1.msra.mxu0 0.0
      %885 = vmatprep.subr.mxu0 0.0
      %886 = vmatpush1.msra.mxu0 0.0
      %887 = vmatprep.subr.mxu0 0.0
      %888 = vmatpush1.msra.mxu0 0.0
      %889 = vmatprep.subr.mxu0 0.0
      %890 = vmatpush1.msra.mxu0 0.0
      %891 = vmatprep.subr.mxu0 0.0
      %892 = vmatpush1.msra.mxu0 0.0
      %893 = vmatprep.subr.mxu0 0.0
      %894 = vmatpush1.msra.mxu0 0.0
      %895 = vmatprep.subr.mxu0 0.0
      %896 = vmatpush1.msra.mxu0 0.0
      %897 = vmatprep.subr.mxu0 0.0
      %898 = vmatpush1.msra.mxu0 0.0
      %899 = vmatprep.subr.mxu0 0.0
      %900 = vmatpush1.msra.mxu0 0.0
      %901 = vmatprep.subr.mxu0 0.0
      %902 = vmatpush1.msra.mxu0 0.0
      %903 = vmatprep.subr.mxu0 0.0
      %904 = vmatpush1.msra.mxu0 0.0
      %905 = vmatprep.subr.mxu0 0.0
      %906 = vmatpush1.msra.mxu0 0.0
      %907 = vmatprep.subr.mxu0 0.0
      %908 = vmatpush1.msra.mxu0 0.0
      %909 = vmatprep.subr.mxu0 0.0
      %910 = vmatpush1.msra.mxu0 0.0
      %911 = vmatprep.subr.mxu0 0.0
      %912 = vmatpush1.msra.mxu0 0.0
      %913 = vmatprep.subr.mxu0 0.0
      %914 = vmatpush1.msra.mxu0 0.0
      %915 = vmatprep.subr.mxu0 0.0
      %916 = vmatpush1.msra.mxu0 0.0
      %917 = vmatprep.subr.mxu0 0.0
      %918 = vmatpush1.msra.mxu0 0.0
      %919 = vmatprep.subr.mxu0 0.0
      %920 = vmatpush1.msra.mxu0 0.0
      %921 = vmatprep.subr.mxu0 0.0
      %922 = vmatpush1.msra.mxu0 0.0
      %923 = vmatprep.subr.mxu0 0.0
      %924 = vmatpush1.msra.mxu0 0.0
      %925 = vmatprep.mubr.f32.mxu0 0.0
      %v926 = vand.u32 %v759, 4294901760
      %927 = vmatmul.mubr.f32.gmra.mrb[0].mxu0 %v926
      %v928 = vpop.f32.mrb[0].mxu0
      %v929 = vadd.f32 %v838, %v928
      %v930 = vpop.f32.mrb[0].mxu0
      %931 = vmatprep.mubr.f32.mxu0 0.0
      %v932 = vand.u32 %v762, 4294901760
      %933 = vmatmul.mubr.f32.gmra.mrb[0].mxu0 %v932
      %v934 = vpop.f32.mrb[0].mxu0
      %v935 = vadd.f32 %v848, %v934
      %v936 = vpop.f32.mrb[0].mxu0
      %937 = vdwg.mxu0
      %938 = vmatprep.subr.mxu0 0.0
      %v939 = vand.u32 %v756, 4294901760
      %v940 = vsub.f32 %v756, %v939
      %941 = vmatpush1.msra.mxu0 %v940
      %942 = vmatprep.subr.mxu0 0.0
      %v943 = vand.u32 %v757, 4294901760
      %v944 = vsub.f32 %v757, %v943
      %945 = vmatpush1.msra.mxu0 %v944
      %946 = vmatprep.subr.mxu0 0.0
      %947 = vmatpush1.msra.mxu0 0.0
      %948 = vmatprep.subr.mxu0 0.0
      %949 = vmatpush1.msra.mxu0 0.0
      %950 = vmatprep.subr.mxu0 0.0
      %951 = vmatpush1.msra.mxu0 0.0
      %952 = vmatprep.subr.mxu0 0.0
      %953 = vmatpush1.msra.mxu0 0.0
      %954 = vmatprep.subr.mxu0 0.0
      %955 = vmatpush1.msra.mxu0 0.0
      %956 = vmatprep.subr.mxu0 0.0
      %957 = vmatpush1.msra.mxu0 0.0
      %958 = vmatprep.subr.mxu0 0.0
      %959 = vmatpush1.msra.mxu0 0.0
      %960 = vmatprep.subr.mxu0 0.0
      %961 = vmatpush1.msra.mxu0 0.0
      %962 = vmatprep.subr.mxu0 0.0
      %963 = vmatpush1.msra.mxu0 0.0
      %964 = vmatprep.subr.mxu0 0.0
      %965 = vmatpush1.msra.mxu0 0.0
      %966 = vmatprep.subr.mxu0 0.0
      %967 = vmatpush1.msra.mxu0 0.0
      %968 = vmatprep.subr.mxu0 0.0
      %969 = vmatpush1.msra.mxu0 0.0
      %970 = vmatprep.subr.mxu0 0.0
      %971 = vmatpush1.msra.mxu0 0.0
      %972 = vmatprep.subr.mxu0 0.0
      %973 = vmatpush1.msra.mxu0 0.0
      %974 = vmatprep.subr.mxu0 0.0
      %975 = vmatpush1.msra.mxu0 0.0
      %976 = vmatprep.subr.mxu0 0.0
      %977 = vmatpush1.msra.mxu0 0.0
      %978 = vmatprep.subr.mxu0 0.0
      %979 = vmatpush1.msra.mxu0 0.0
      %980 = vmatprep.subr.mxu0 0.0
      %981 = vmatpush1.msra.mxu0 0.0
      %982 = vmatprep.subr.mxu0 0.0
      %983 = vmatpush1.msra.mxu0 0.0
      %984 = vmatprep.subr.mxu0 0.0
      %985 = vmatpush1.msra.mxu0 0.0
      %986 = vmatprep.subr.mxu0 0.0
      %987 = vmatpush1.msra.mxu0 0.0
      %988 = vmatprep.subr.mxu0 0.0
      %989 = vmatpush1.msra.mxu0 0.0
      %990 = vmatprep.subr.mxu0 0.0
      %991 = vmatpush1.msra.mxu0 0.0
      %992 = vmatprep.subr.mxu0 0.0
      %993 = vmatpush1.msra.mxu0 0.0
      %994 = vmatprep.subr.mxu0 0.0
      %995 = vmatpush1.msra.mxu0 0.0
      %996 = vmatprep.subr.mxu0 0.0
      %997 = vmatpush1.msra.mxu0 0.0
      %998 = vmatprep.subr.mxu0 0.0
      %999 = vmatpush1.msra.mxu0 0.0
      %1000 = vmatprep.subr.mxu0 0.0
      %1001 = vmatpush1.msra.mxu0 0.0
      %1002 = vmatprep.subr.mxu0 0.0
      %1003 = vmatpush1.msra.mxu0 0.0
      %1004 = vmatprep.subr.mxu0 0.0
      %1005 = vmatpush1.msra.mxu0 0.0
      %1006 = vmatprep.mubr.f32.mxu0 0.0
      %v1007 = vand.u32 %v759, 4294901760
      %v1008 = vsub.f32 %v759, %v1007
      %1009 = vmatmul.mubr.f32.gmra.mrb[0].mxu0 %v1008
      %v1010 = vpop.f32.mrb[0].mxu0
      %v1011 = vadd.f32 %v929, %v1010
      %v1012 = vpop.f32.mrb[0].mxu0
      %1013 = vmatprep.mubr.f32.mxu0 0.0
      %v1014 = vand.u32 %v762, 4294901760
      %v1015 = vsub.f32 %v762, %v1014
      %1016 = vmatmul.mubr.f32.gmra.mrb[0].mxu0 %v1015
      %v1017 = vpop.f32.mrb[0].mxu0
      %v1018 = vadd.f32 %v935, %v1017
      %v1019 = vpop.f32.mrb[0].mxu0
      %1020 = vdwg.mxu0
      %1021 = vmatprep.subr.mxu0 0.0
      %v1022 = vand.u32 %v756, 4294901760
      %1023 = vmatpush1.msra.mxu0 %v1022
      %1024 = vmatprep.subr.mxu0 0.0
      %v1025 = vand.u32 %v757, 4294901760
      %1026 = vmatpush1.msra.mxu0 %v1025
      %1027 = vmatprep.subr.mxu0 0.0
      %1028 = vmatpush1.msra.mxu0 0.0
      %1029 = vmatprep.subr.mxu0 0.0
      %1030 = vmatpush1.msra.mxu0 0.0
      %1031 = vmatprep.subr.mxu0 0.0
      %1032 = vmatpush1.msra.mxu0 0.0
      %1033 = vmatprep.subr.mxu0 0.0
      %1034 = vmatpush1.msra.mxu0 0.0
      %1035 = vmatprep.subr.mxu0 0.0
      %1036 = vmatpush1.msra.mxu0 0.0
      %1037 = vmatprep.subr.mxu0 0.0
      %1038 = vmatpush1.msra.mxu0 0.0
      %1039 = vmatprep.subr.mxu0 0.0
      %1040 = vmatpush1.msra.mxu0 0.0
      %1041 = vmatprep.subr.mxu0 0.0
      %1042 = vmatpush1.msra.mxu0 0.0
      %1043 = vmatprep.subr.mxu0 0.0
      %1044 = vmatpush1.msra.mxu0 0.0
      %1045 = vmatprep.subr.mxu0 0.0
      %1046 = vmatpush1.msra.mxu0 0.0
      %1047 = vmatprep.subr.mxu0 0.0
      %1048 = vmatpush1.msra.mxu0 0.0
      %1049 = vmatprep.subr.mxu0 0.0
      %1050 = vmatpush1.msra.mxu0 0.0
      %1051 = vmatprep.subr.mxu0 0.0
      %1052 = vmatpush1.msra.mxu0 0.0
      %1053 = vmatprep.subr.mxu0 0.0
      %1054 = vmatpush1.msra.mxu0 0.0
      %1055 = vmatprep.subr.mxu0 0.0
      %1056 = vmatpush1.msra.mxu0 0.0
      %1057 = vmatprep.subr.mxu0 0.0
      %1058 = vmatpush1.msra.mxu0 0.0
      %1059 = vmatprep.subr.mxu0 0.0
      %1060 = vmatpush1.msra.mxu0 0.0
      %1061 = vmatprep.subr.mxu0 0.0
      %1062 = vmatpush1.msra.mxu0 0.0
      %1063 = vmatprep.subr.mxu0 0.0
      %1064 = vmatpush1.msra.mxu0 0.0
      %1065 = vmatprep.subr.mxu0 0.0
      %1066 = vmatpush1.msra.mxu0 0.0
      %1067 = vmatprep.subr.mxu0 0.0
      %1068 = vmatpush1.msra.mxu0 0.0
      %1069 = vmatprep.subr.mxu0 0.0
      %1070 = vmatpush1.msra.mxu0 0.0
      %1071 = vmatprep.subr.mxu0 0.0
      %1072 = vmatpush1.msra.mxu0 0.0
      %1073 = vmatprep.subr.mxu0 0.0
      %1074 = vmatpush1.msra.mxu0 0.0
      %1075 = vmatprep.subr.mxu0 0.0
      %1076 = vmatpush1.msra.mxu0 0.0
      %1077 = vmatprep.subr.mxu0 0.0
      %1078 = vmatpush1.msra.mxu0 0.0
      %1079 = vmatprep.subr.mxu0 0.0
      %1080 = vmatpush1.msra.mxu0 0.0
      %1081 = vmatprep.subr.mxu0 0.0
      %1082 = vmatpush1.msra.mxu0 0.0
      %1083 = vmatprep.subr.mxu0 0.0
      %1084 = vmatpush1.msra.mxu0 0.0
      %1085 = vmatprep.subr.mxu0 0.0
      %1086 = vmatpush1.msra.mxu0 0.0
      %1087 = vmatprep.mubr.f32.mxu0 0.0
      %v1088 = vand.u32 %v759, 4294901760
      %v1089 = vsub.f32 %v759, %v1088
      %v1090 = vand.u32 %v1089, 4294901760
      %1091 = vmatmul.mubr.f32.gmra.mrb[0].mxu0 %v1090
      %v1092 = vpop.f32.mrb[0].mxu0
      %v1093 = vadd.f32 %v1011, %v1092
      %v1094 = vpop.f32.mrb[0].mxu0
      %1095 = vmatprep.mubr.f32.mxu0 0.0
      %v1096 = vand.u32 %v762, 4294901760
      %v1097 = vsub.f32 %v762, %v1096
      %v1098 = vand.u32 %v1097, 4294901760
      %1099 = vmatmul.mubr.f32.gmra.mrb[0].mxu0 %v1098
      %v1100 = vpop.f32.mrb[0].mxu0
      %v1101 = vadd.f32 %v1018, %v1100
      %v1102 = vpop.f32.mrb[0].mxu0
      %1103 = vdwg.mxu0
      %1104 = vmatprep.subr.mxu0 0.0
      %v1105 = vand.u32 %v756, 4294901760
      %v1106 = vsub.f32 %v756, %v1105
      %v1107 = vand.u32 %v1106, 4294901760
      %1108 = vmatpush1.msra.mxu0 %v1107
      %1109 = vmatprep.subr.mxu0 0.0
      %v1110 = vand.u32 %v757, 4294901760
      %v1111 = vsub.f32 %v757, %v1110
      %v1112 = vand.u32 %v1111, 4294901760
      %1113 = vmatpush1.msra.mxu0 %v1112
      %1114 = vmatprep.subr.mxu0 0.0
      %1115 = vmatpush1.msra.mxu0 0.0
      %1116 = vmatprep.subr.mxu0 0.0
      %1117 = vmatpush1.msra.mxu0 0.0
      %1118 = vmatprep.subr.mxu0 0.0
      %1119 = vmatpush1.msra.mxu0 0.0
      %1120 = vmatprep.subr.mxu0 0.0
      %1121 = vmatpush1.msra.mxu0 0.0
      %1122 = vmatprep.subr.mxu0 0.0
      %1123 = vmatpush1.msra.mxu0 0.0
      %1124 = vmatprep.subr.mxu0 0.0
      %1125 = vmatpush1.msra.mxu0 0.0
      %1126 = vmatprep.subr.mxu0 0.0
      %1127 = vmatpush1.msra.mxu0 0.0
      %1128 = vmatprep.subr.mxu0 0.0
      %1129 = vmatpush1.msra.mxu0 0.0
      %1130 = vmatprep.subr.mxu0 0.0
      %1131 = vmatpush1.msra.mxu0 0.0
      %1132 = vmatprep.subr.mxu0 0.0
      %1133 = vmatpush1.msra.mxu0 0.0
      %1134 = vmatprep.subr.mxu0 0.0
      %1135 = vmatpush1.msra.mxu0 0.0
      %1136 = vmatprep.subr.mxu0 0.0
      %1137 = vmatpush1.msra.mxu0 0.0
      %1138 = vmatprep.subr.mxu0 0.0
      %1139 = vmatpush1.msra.mxu0 0.0
      %1140 = vmatprep.subr.mxu0 0.0
      %1141 = vmatpush1.msra.mxu0 0.0
      %1142 = vmatprep.subr.mxu0 0.0
      %1143 = vmatpush1.msra.mxu0 0.0
      %1144 = vmatprep.subr.mxu0 0.0
      %1145 = vmatpush1.msra.mxu0 0.0
      %1146 = vmatprep.subr.mxu0 0.0
      %1147 = vmatpush1.msra.mxu0 0.0
      %1148 = vmatprep.subr.mxu0 0.0
      %1149 = vmatpush1.msra.mxu0 0.0
      %1150 = vmatprep.subr.mxu0 0.0
      %1151 = vmatpush1.msra.mxu0 0.0
      %1152 = vmatprep.subr.mxu0 0.0
      %1153 = vmatpush1.msra.mxu0 0.0
      %1154 = vmatprep.subr.mxu0 0.0
      %1155 = vmatpush1.msra.mxu0 0.0
      %1156 = vmatprep.subr.mxu0 0.0
      %1157 = vmatpush1.msra.mxu0 0.0
      %1158 = vmatprep.subr.mxu0 0.0
      %1159 = vmatpush1.msra.mxu0 0.0
      %1160 = vmatprep.subr.mxu0 0.0
      %1161 = vmatpush1.msra.mxu0 0.0
      %1162 = vmatprep.subr.mxu0 0.0
      %1163 = vmatpush1.msra.mxu0 0.0
      %1164 = vmatprep.subr.mxu0 0.0
      %1165 = vmatpush1.msra.mxu0 0.0
      %1166 = vmatprep.subr.mxu0 0.0
      %1167 = vmatpush1.msra.mxu0 0.0
      %1168 = vmatprep.subr.mxu0 0.0
      %1169 = vmatpush1.msra.mxu0 0.0
      %1170 = vmatprep.subr.mxu0 0.0
      %1171 = vmatpush1.msra.mxu0 0.0
      %1172 = vmatprep.subr.mxu0 0.0
      %1173 = vmatpush1.msra.mxu0 0.0
      %1174 = vmatprep.mubr.f32.mxu0 0.0
      %v1175 = vand.u32 %v759, 4294901760
      %1176 = vmatmul.mubr.f32.gmra.mrb[0].mxu0 %v1175
      %v1177 = vpop.f32.mrb[0].mxu0
      %v1178 = vadd.f32 %v1093, %v1177
      %v1179 = vpop.f32.mrb[0].mxu0
      %1180 = vmatprep.mubr.f32.mxu0 0.0
      %v1181 = vand.u32 %v762, 4294901760
      %1182 = vmatmul.mubr.f32.gmra.mrb[0].mxu0 %v1181
      %v1183 = vpop.f32.mrb[0].mxu0
      %v1184 = vadd.f32 %v1101, %v1183
      %v1185 = vpop.f32.mrb[0].mxu0
      %1186 = vdwg.mxu0
      %1187 = vmatprep.subr.mxu0 0.0
      %v1188 = vand.u32 %v756, 4294901760
      %1189 = vmatpush1.msra.mxu0 %v1188
      %1190 = vmatprep.subr.mxu0 0.0
      %v1191 = vand.u32 %v757, 4294901760
      %1192 = vmatpush1.msra.mxu0 %v1191
      %1193 = vmatprep.subr.mxu0 0.0
      %1194 = vmatpush1.msra.mxu0 0.0
      %1195 = vmatprep.subr.mxu0 0.0
      %1196 = vmatpush1.msra.mxu0 0.0
      %1197 = vmatprep.subr.mxu0 0.0
      %1198 = vmatpush1.msra.mxu0 0.0
      %1199 = vmatprep.subr.mxu0 0.0
      %1200 = vmatpush1.msra.mxu0 0.0
      %1201 = vmatprep.subr.mxu0 0.0
      %1202 = vmatpush1.msra.mxu0 0.0
      %1203 = vmatprep.subr.mxu0 0.0
      %1204 = vmatpush1.msra.mxu0 0.0
      %1205 = vmatprep.subr.mxu0 0.0
      %1206 = vmatpush1.msra.mxu0 0.0
      %1207 = vmatprep.subr.mxu0 0.0
      %1208 = vmatpush1.msra.mxu0 0.0
      %1209 = vmatprep.subr.mxu0 0.0
      %1210 = vmatpush1.msra.mxu0 0.0
      %1211 = vmatprep.subr.mxu0 0.0
      %1212 = vmatpush1.msra.mxu0 0.0
      %1213 = vmatprep.subr.mxu0 0.0
      %1214 = vmatpush1.msra.mxu0 0.0
      %1215 = vmatprep.subr.mxu0 0.0
      %1216 = vmatpush1.msra.mxu0 0.0
      %1217 = vmatprep.subr.mxu0 0.0
      %1218 = vmatpush1.msra.mxu0 0.0
      %1219 = vmatprep.subr.mxu0 0.0
      %1220 = vmatpush1.msra.mxu0 0.0
      %1221 = vmatprep.subr.mxu0 0.0
      %1222 = vmatpush1.msra.mxu0 0.0
      %1223 = vmatprep.subr.mxu0 0.0
      %1224 = vmatpush1.msra.mxu0 0.0
      %1225 = vmatprep.subr.mxu0 0.0
      %1226 = vmatpush1.msra.mxu0 0.0
      %1227 = vmatprep.subr.mxu0 0.0
      %1228 = vmatpush1.msra.mxu0 0.0
      %1229 = vmatprep.subr.mxu0 0.0
      %1230 = vmatpush1.msra.mxu0 0.0
      %1231 = vmatprep.subr.mxu0 0.0
      %1232 = vmatpush1.msra.mxu0 0.0
      %1233 = vmatprep.subr.mxu0 0.0
      %1234 = vmatpush1.msra.mxu0 0.0
      %1235 = vmatprep.subr.mxu0 0.0
      %1236 = vmatpush1.msra.mxu0 0.0
      %1237 = vmatprep.subr.mxu0 0.0
      %1238 = vmatpush1.msra.mxu0 0.0
      %1239 = vmatprep.subr.mxu0 0.0
      %1240 = vmatpush1.msra.mxu0 0.0
      %1241 = vmatprep.subr.mxu0 0.0
      %1242 = vmatpush1.msra.mxu0 0.0
      %1243 = vmatprep.subr.mxu0 0.0
      %1244 = vmatpush1.msra.mxu0 0.0
      %1245 = vmatprep.subr.mxu0 0.0
      %1246 = vmatpush1.msra.mxu0 0.0
      %1247 = vmatprep.subr.mxu0 0.0
      %1248 = vmatpush1.msra.mxu0 0.0
      %1249 = vmatprep.subr.mxu0 0.0
      %1250 = vmatpush1.msra.mxu0 0.0
      %1251 = vmatprep.subr.mxu0 0.0
      %1252 = vmatpush1.msra.mxu0 0.0
      %1253 = vmatprep.mubr.f32.mxu0 0.0
      %v1254 = vand.u32 %v759, 4294901760
      %1255 = vmatmul.mubr.f32.gmra.mrb[0].mxu0 %v1254
      %v1256 = vpop.f32.mrb[0].mxu0
      %v1257 = vadd.f32 %v1178, %v1256
      %v1258 = vpop.f32.mrb[0].mxu0
      %1259 = vmatprep.mubr.f32.mxu0 0.0
      %v1260 = vand.u32 %v762, 4294901760
      %1261 = vmatmul.mubr.f32.gmra.mrb[0].mxu0 %v1260
      %v1262 = vpop.f32.mrb[0].mxu0
      %v1263 = vadd.f32 %v1184, %v1262
      %v1264 = vpop.f32.mrb[0].mxu0
      %1265 = vdwg.mxu0
      %s1266 = scalar_lea.vmem %s183, 32
      %1267 = vst.msk [vmem:[%s1266] sm:$0xf] %vm699, %v1257
      %s1268 = scalar_lea.vmem %s183, 96
      %1269 = vst.msk [vmem:[%s1268 - $0x4] sm:$0xf0] %vm702, %v1257
      %s1270 = scalar_lea.vmem %s183, 160
      %1271 = vst.msk [vmem:[%s1270] sm:$0xf] %vm699, %v1263
      %s1272 = scalar_lea.vmem %s183, 224
      %1273 = vst.msk [vmem:[%s1272 - $0x4] sm:$0xf0] %vm702, %v1263
      %1275 = vrot.lane.b32.xlu0 %v1257, 124
      %v1276 = vpop.permute.xlu0 %1275
      %s1278 = scalar_lea.vmem %s183, 48
      %1279 = vst.msk [vmem:[%s1278] sm:$0xf] %vm699, %v1276
      %s1280 = scalar_lea.vmem %s183, 112
      %1281 = vst.msk [vmem:[%s1280 - $0x4] sm:$0xf0] %vm702, %v1276
      %1283 = vrot.lane.b32.xlu0 %v1263, 124
      %v1284 = vpop.permute.xlu0 %1283
      %s1286 = scalar_lea.vmem %s183, 176
      %1287 = vst.msk [vmem:[%s1286] sm:$0xf] %vm699, %v1284
      %s1288 = scalar_lea.vmem %s183, 240
      %1289 = vst.msk [vmem:[%s1288 - $0x4] sm:$0xf0] %vm702, %v1284
      %1290 = vrot.lane.b32.xlu0 %v1257, 120
      %v1291 = vpop.permute.xlu0 %1290
      %s1293 = scalar_lea.vmem %s183, 36
      %1294 = vst.msk [vmem:[%s1293] sm:$0xf] %vm699, %v1291
      %s1295 = scalar_lea.vmem %s183, 100
      %1296 = vst.msk [vmem:[%s1295 - $0x4] sm:$0xf0] %vm702, %v1291
      %1297 = vrot.lane.b32.xlu0 %v1263, 120
      %v1298 = vpop.permute.xlu0 %1297
      %s1300 = scalar_lea.vmem %s183, 164
      %1301 = vst.msk [vmem:[%s1300] sm:$0xf] %vm699, %v1298
      %s1302 = scalar_lea.vmem %s183, 228
      %1303 = vst.msk [vmem:[%s1302 - $0x4] sm:$0xf0] %vm702, %v1298
      %1304 = vrot.lane.b32.xlu0 %v1257, 116
      %v1305 = vpop.permute.xlu0 %1304
      %s1307 = scalar_lea.vmem %s183, 52
      %1308 = vst.msk [vmem:[%s1307] sm:$0xf] %vm699, %v1305
      %s1309 = scalar_lea.vmem %s183, 116
      %1310 = vst.msk [vmem:[%s1309 - $0x4] sm:$0xf0] %vm702, %v1305
      %1311 = vrot.lane.b32.xlu0 %v1263, 116
      %v1312 = vpop.permute.xlu0 %1311
      %s1314 = scalar_lea.vmem %s183, 180
      %1315 = vst.msk [vmem:[%s1314] sm:$0xf] %vm699, %v1312
      %s1316 = scalar_lea.vmem %s183, 244
      %1317 = vst.msk [vmem:[%s1316 - $0x4] sm:$0xf0] %vm702, %v1312
      %s1318 = scalar_lea.vmem %s172, 2
      %v1319 = vld [vmem:[%s1318] ss:$4 sm:$0xff]
      %s1320 = scalar_lea.vmem %s172, 34
      %v1321 = vld [vmem:[%s1320] ss:$4 sm:$0xff]
      %v1322 = vld [vmem:[%s1] sm:$0xff]
      %v1323 = vld [vmem:[%s1 + $0x8] sm:$0xff]
      %v1325 = vsel %vm190, %v1319, 0
      %v1328 = vsel %vm190, %v1321, 0
      %1330 = vmatprep.subr.mxu0 0.0
      %v1331 = vand.u32 %v1322, 4294901760
      %1332 = vmatpush1.msra.mxu0 %v1331
      %1333 = vmatprep.subr.mxu0 0.0
      %v1334 = vand.u32 %v1323, 4294901760
      %1335 = vmatpush1.msra.mxu0 %v1334
      %1336 = vmatprep.subr.mxu0 0.0
      %1337 = vmatpush1.msra.mxu0 0.0
      %1338 = vmatprep.subr.mxu0 0.0
      %1339 = vmatpush1.msra.mxu0 0.0
      %1340 = vmatprep.subr.mxu0 0.0
      %1341 = vmatpush1.msra.mxu0 0.0
      %1342 = vmatprep.subr.mxu0 0.0
      %1343 = vmatpush1.msra.mxu0 0.0
      %1344 = vmatprep.subr.mxu0 0.0
      %1345 = vmatpush1.msra.mxu0 0.0
      %1346 = vmatprep.subr.mxu0 0.0
      %1347 = vmatpush1.msra.mxu0 0.0
      %1348 = vmatprep.subr.mxu0 0.0
      %1349 = vmatpush1.msra.mxu0 0.0
      %1350 = vmatprep.subr.mxu0 0.0
      %1351 = vmatpush1.msra.mxu0 0.0
      %1352 = vmatprep.subr.mxu0 0.0
      %1353 = vmatpush1.msra.mxu0 0.0
      %1354 = vmatprep.subr.mxu0 0.0
      %1355 = vmatpush1.msra.mxu0 0.0
      %1356 = vmatprep.subr.mxu0 0.0
      %1357 = vmatpush1.msra.mxu0 0.0
      %1358 = vmatprep.subr.mxu0 0.0
      %1359 = vmatpush1.msra.mxu0 0.0
      %1360 = vmatprep.subr.mxu0 0.0
      %1361 = vmatpush1.msra.mxu0 0.0
      %1362 = vmatprep.subr.mxu0 0.0
      %1363 = vmatpush1.msra.mxu0 0.0
      %1364 = vmatprep.subr.mxu0 0.0
      %1365 = vmatpush1.msra.mxu0 0.0
      %1366 = vmatprep.subr.mxu0 0.0
      %1367 = vmatpush1.msra.mxu0 0.0
      %1368 = vmatprep.subr.mxu0 0.0
      %1369 = vmatpush1.msra.mxu0 0.0
      %1370 = vmatprep.subr.mxu0 0.0
      %1371 = vmatpush1.msra.mxu0 0.0
      %1372 = vmatprep.subr.mxu0 0.0
      %1373 = vmatpush1.msra.mxu0 0.0
      %1374 = vmatprep.subr.mxu0 0.0
      %1375 = vmatpush1.msra.mxu0 0.0
      %1376 = vmatprep.subr.mxu0 0.0
      %1377 = vmatpush1.msra.mxu0 0.0
      %1378 = vmatprep.subr.mxu0 0.0
      %1379 = vmatpush1.msra.mxu0 0.0
      %1380 = vmatprep.subr.mxu0 0.0
      %1381 = vmatpush1.msra.mxu0 0.0
      %1382 = vmatprep.subr.mxu0 0.0
      %1383 = vmatpush1.msra.mxu0 0.0
      %1384 = vmatprep.subr.mxu0 0.0
      %1385 = vmatpush1.msra.mxu0 0.0
      %1386 = vmatprep.subr.mxu0 0.0
      %1387 = vmatpush1.msra.mxu0 0.0
      %1388 = vmatprep.subr.mxu0 0.0
      %1389 = vmatpush1.msra.mxu0 0.0
      %1390 = vmatprep.subr.mxu0 0.0
      %1391 = vmatpush1.msra.mxu0 0.0
      %1392 = vmatprep.subr.mxu0 0.0
      %1393 = vmatpush1.msra.mxu0 0.0
      %1394 = vmatprep.subr.mxu0 0.0
      %1395 = vmatpush1.msra.mxu0 0.0
      %1396 = vmatprep.mubr.f32.mxu0 0.0
      %v1397 = vand.u32 %v1325, 4294901760
      %v1398 = vsub.f32 %v1325, %v1397
      %v1399 = vand.u32 %v1398, 4294901760
      %v1400 = vsub.f32 %v1398, %v1399
      %v1401 = vand.u32 %v1400, 4294901760
      %1402 = vmatmul.mubr.f32.gmra.mrb[0].mxu0 %v1401
      %v1403 = vpop.f32.mrb[0].mxu0
      %v1404 = vadd.f32 0.0, %v1403
      %v1405 = vpop.f32.mrb[0].mxu0
      %1406 = vmatprep.mubr.f32.mxu0 0.0
      %v1407 = vand.u32 %v1328, 4294901760
      %v1408 = vsub.f32 %v1328, %v1407
      %v1409 = vand.u32 %v1408, 4294901760
      %v1410 = vsub.f32 %v1408, %v1409
      %v1411 = vand.u32 %v1410, 4294901760
      %1412 = vmatmul.mubr.f32.gmra.mrb[0].mxu0 %v1411
      %v1413 = vpop.f32.mrb[0].mxu0
      %v1414 = vadd.f32 0.0, %v1413
      %v1415 = vpop.f32.mrb[0].mxu0
      %1416 = vdwg.mxu0
      %1417 = vmatprep.subr.mxu0 0.0
      %v1418 = vand.u32 %v1322, 4294901760
      %v1419 = vsub.f32 %v1322, %v1418
      %v1420 = vand.u32 %v1419, 4294901760
      %v1421 = vsub.f32 %v1419, %v1420
      %v1422 = vand.u32 %v1421, 4294901760
      %1423 = vmatpush1.msra.mxu0 %v1422
      %1424 = vmatprep.subr.mxu0 0.0
      %v1425 = vand.u32 %v1323, 4294901760
      %v1426 = vsub.f32 %v1323, %v1425
      %v1427 = vand.u32 %v1426, 4294901760
      %v1428 = vsub.f32 %v1426, %v1427
      %v1429 = vand.u32 %v1428, 4294901760
      %1430 = vmatpush1.msra.mxu0 %v1429
      %1431 = vmatprep.subr.mxu0 0.0
      %1432 = vmatpush1.msra.mxu0 0.0
      %1433 = vmatprep.subr.mxu0 0.0
      %1434 = vmatpush1.msra.mxu0 0.0
      %1435 = vmatprep.subr.mxu0 0.0
      %1436 = vmatpush1.msra.mxu0 0.0
      %1437 = vmatprep.subr.mxu0 0.0
      %1438 = vmatpush1.msra.mxu0 0.0
      %1439 = vmatprep.subr.mxu0 0.0
      %1440 = vmatpush1.msra.mxu0 0.0
      %1441 = vmatprep.subr.mxu0 0.0
      %1442 = vmatpush1.msra.mxu0 0.0
      %1443 = vmatprep.subr.mxu0 0.0
      %1444 = vmatpush1.msra.mxu0 0.0
      %1445 = vmatprep.subr.mxu0 0.0
      %1446 = vmatpush1.msra.mxu0 0.0
      %1447 = vmatprep.subr.mxu0 0.0
      %1448 = vmatpush1.msra.mxu0 0.0
      %1449 = vmatprep.subr.mxu0 0.0
      %1450 = vmatpush1.msra.mxu0 0.0
      %1451 = vmatprep.subr.mxu0 0.0
      %1452 = vmatpush1.msra.mxu0 0.0
      %1453 = vmatprep.subr.mxu0 0.0
      %1454 = vmatpush1.msra.mxu0 0.0
      %1455 = vmatprep.subr.mxu0 0.0
      %1456 = vmatpush1.msra.mxu0 0.0
      %1457 = vmatprep.subr.mxu0 0.0
      %1458 = vmatpush1.msra.mxu0 0.0
      %1459 = vmatprep.subr.mxu0 0.0
      %1460 = vmatpush1.msra.mxu0 0.0
      %1461 = vmatprep.subr.mxu0 0.0
      %1462 = vmatpush1.msra.mxu0 0.0
      %1463 = vmatprep.subr.mxu0 0.0
      %1464 = vmatpush1.msra.mxu0 0.0
      %1465 = vmatprep.subr.mxu0 0.0
      %1466 = vmatpush1.msra.mxu0 0.0
      %1467 = vmatprep.subr.mxu0 0.0
      %1468 = vmatpush1.msra.mxu0 0.0
      %1469 = vmatprep.subr.mxu0 0.0
      %1470 = vmatpush1.msra.mxu0 0.0
      %1471 = vmatprep.subr.mxu0 0.0
      %1472 = vmatpush1.msra.mxu0 0.0
      %1473 = vmatprep.subr.mxu0 0.0
      %1474 = vmatpush1.msra.mxu0 0.0
      %1475 = vmatprep.subr.mxu0 0.0
      %1476 = vmatpush1.msra.mxu0 0.0
      %1477 = vmatprep.subr.mxu0 0.0
      %1478 = vmatpush1.msra.mxu0 0.0
      %1479 = vmatprep.subr.mxu0 0.0
      %1480 = vmatpush1.msra.mxu0 0.0
      %1481 = vmatprep.subr.mxu0 0.0
      %1482 = vmatpush1.msra.mxu0 0.0
      %1483 = vmatprep.subr.mxu0 0.0
      %1484 = vmatpush1.msra.mxu0 0.0
      %1485 = vmatprep.subr.mxu0 0.0
      %1486 = vmatpush1.msra.mxu0 0.0
      %1487 = vmatprep.subr.mxu0 0.0
      %1488 = vmatpush1.msra.mxu0 0.0
      %1489 = vmatprep.subr.mxu0 0.0
      %1490 = vmatpush1.msra.mxu0 0.0
      %1491 = vmatprep.mubr.f32.mxu0 0.0
      %v1492 = vand.u32 %v1325, 4294901760
      %1493 = vmatmul.mubr.f32.gmra.mrb[0].mxu0 %v1492
      %v1494 = vpop.f32.mrb[0].mxu0
      %v1495 = vadd.f32 %v1404, %v1494
      %v1496 = vpop.f32.mrb[0].mxu0
      %1497 = vmatprep.mubr.f32.mxu0 0.0
      %v1498 = vand.u32 %v1328, 4294901760
      %1499 = vmatmul.mubr.f32.gmra.mrb[0].mxu0 %v1498
      %v1500 = vpop.f32.mrb[0].mxu0
      %v1501 = vadd.f32 %v1414, %v1500
      %v1502 = vpop.f32.mrb[0].mxu0
      %1503 = vdwg.mxu0
      %1504 = vmatprep.subr.mxu0 0.0
      %v1505 = vand.u32 %v1322, 4294901760
      %v1506 = vsub.f32 %v1322, %v1505
      %1507 = vmatpush1.msra.mxu0 %v1506
      %1508 = vmatprep.subr.mxu0 0.0
      %v1509 = vand.u32 %v1323, 4294901760
      %v1510 = vsub.f32 %v1323, %v1509
      %1511 = vmatpush1.msra.mxu0 %v1510
      %1512 = vmatprep.subr.mxu0 0.0
      %1513 = vmatpush1.msra.mxu0 0.0
      %1514 = vmatprep.subr.mxu0 0.0
      %1515 = vmatpush1.msra.mxu0 0.0
      %1516 = vmatprep.subr.mxu0 0.0
      %1517 = vmatpush1.msra.mxu0 0.0
      %1518 = vmatprep.subr.mxu0 0.0
      %1519 = vmatpush1.msra.mxu0 0.0
      %1520 = vmatprep.subr.mxu0 0.0
      %1521 = vmatpush1.msra.mxu0 0.0
      %1522 = vmatprep.subr.mxu0 0.0
      %1523 = vmatpush1.msra.mxu0 0.0
      %1524 = vmatprep.subr.mxu0 0.0
      %1525 = vmatpush1.msra.mxu0 0.0
      %1526 = vmatprep.subr.mxu0 0.0
      %1527 = vmatpush1.msra.mxu0 0.0
      %1528 = vmatprep.subr.mxu0 0.0
      %1529 = vmatpush1.msra.mxu0 0.0
      %1530 = vmatprep.subr.mxu0 0.0
      %1531 = vmatpush1.msra.mxu0 0.0
      %1532 = vmatprep.subr.mxu0 0.0
      %1533 = vmatpush1.msra.mxu0 0.0
      %1534 = vmatprep.subr.mxu0 0.0
      %1535 = vmatpush1.msra.mxu0 0.0
      %1536 = vmatprep.subr.mxu0 0.0
      %1537 = vmatpush1.msra.mxu0 0.0
      %1538 = vmatprep.subr.mxu0 0.0
      %1539 = vmatpush1.msra.mxu0 0.0
      %1540 = vmatprep.subr.mxu0 0.0
      %1541 = vmatpush1.msra.mxu0 0.0
      %1542 = vmatprep.subr.mxu0 0.0
      %1543 = vmatpush1.msra.mxu0 0.0
      %1544 = vmatprep.subr.mxu0 0.0
      %1545 = vmatpush1.msra.mxu0 0.0
      %1546 = vmatprep.subr.mxu0 0.0
      %1547 = vmatpush1.msra.mxu0 0.0
      %1548 = vmatprep.subr.mxu0 0.0
      %1549 = vmatpush1.msra.mxu0 0.0
      %1550 = vmatprep.subr.mxu0 0.0
      %1551 = vmatpush1.msra.mxu0 0.0
      %1552 = vmatprep.subr.mxu0 0.0
      %1553 = vmatpush1.msra.mxu0 0.0
      %1554 = vmatprep.subr.mxu0 0.0
      %1555 = vmatpush1.msra.mxu0 0.0
      %1556 = vmatprep.subr.mxu0 0.0
      %1557 = vmatpush1.msra.mxu0 0.0
      %1558 = vmatprep.subr.mxu0 0.0
      %1559 = vmatpush1.msra.mxu0 0.0
      %1560 = vmatprep.subr.mxu0 0.0
      %1561 = vmatpush1.msra.mxu0 0.0
      %1562 = vmatprep.subr.mxu0 0.0
      %1563 = vmatpush1.msra.mxu0 0.0
      %1564 = vmatprep.subr.mxu0 0.0
      %1565 = vmatpush1.msra.mxu0 0.0
      %1566 = vmatprep.subr.mxu0 0.0
      %1567 = vmatpush1.msra.mxu0 0.0
      %1568 = vmatprep.subr.mxu0 0.0
      %1569 = vmatpush1.msra.mxu0 0.0
      %1570 = vmatprep.subr.mxu0 0.0
      %1571 = vmatpush1.msra.mxu0 0.0
      %1572 = vmatprep.mubr.f32.mxu0 0.0
      %v1573 = vand.u32 %v1325, 4294901760
      %v1574 = vsub.f32 %v1325, %v1573
      %1575 = vmatmul.mubr.f32.gmra.mrb[0].mxu0 %v1574
      %v1576 = vpop.f32.mrb[0].mxu0
      %v1577 = vadd.f32 %v1495, %v1576
      %v1578 = vpop.f32.mrb[0].mxu0
      %1579 = vmatprep.mubr.f32.mxu0 0.0
      %v1580 = vand.u32 %v1328, 4294901760
      %v1581 = vsub.f32 %v1328, %v1580
      %1582 = vmatmul.mubr.f32.gmra.mrb[0].mxu0 %v1581
      %v1583 = vpop.f32.mrb[0].mxu0
      %v1584 = vadd.f32 %v1501, %v1583
      %v1585 = vpop.f32.mrb[0].mxu0
      %1586 = vdwg.mxu0
      %1587 = vmatprep.subr.mxu0 0.0
      %v1588 = vand.u32 %v1322, 4294901760
      %1589 = vmatpush1.msra.mxu0 %v1588
      %1590 = vmatprep.subr.mxu0 0.0
      %v1591 = vand.u32 %v1323, 4294901760
      %1592 = vmatpush1.msra.mxu0 %v1591
      %1593 = vmatprep.subr.mxu0 0.0
      %1594 = vmatpush1.msra.mxu0 0.0
      %1595 = vmatprep.subr.mxu0 0.0
      %1596 = vmatpush1.msra.mxu0 0.0
      %1597 = vmatprep.subr.mxu0 0.0
      %1598 = vmatpush1.msra.mxu0 0.0
      %1599 = vmatprep.subr.mxu0 0.0
      %1600 = vmatpush1.msra.mxu0 0.0
      %1601 = vmatprep.subr.mxu0 0.0
      %1602 = vmatpush1.msra.mxu0 0.0
      %1603 = vmatprep.subr.mxu0 0.0
      %1604 = vmatpush1.msra.mxu0 0.0
      %1605 = vmatprep.subr.mxu0 0.0
      %1606 = vmatpush1.msra.mxu0 0.0
      %1607 = vmatprep.subr.mxu0 0.0
      %1608 = vmatpush1.msra.mxu0 0.0
      %1609 = vmatprep.subr.mxu0 0.0
      %1610 = vmatpush1.msra.mxu0 0.0
      %1611 = vmatprep.subr.mxu0 0.0
      %1612 = vmatpush1.msra.mxu0 0.0
      %1613 = vmatprep.subr.mxu0 0.0
      %1614 = vmatpush1.msra.mxu0 0.0
      %1615 = vmatprep.subr.mxu0 0.0
      %1616 = vmatpush1.msra.mxu0 0.0
      %1617 = vmatprep.subr.mxu0 0.0
      %1618 = vmatpush1.msra.mxu0 0.0
      %1619 = vmatprep.subr.mxu0 0.0
      %1620 = vmatpush1.msra.mxu0 0.0
      %1621 = vmatprep.subr.mxu0 0.0
      %1622 = vmatpush1.msra.mxu0 0.0
      %1623 = vmatprep.subr.mxu0 0.0
      %1624 = vmatpush1.msra.mxu0 0.0
      %1625 = vmatprep.subr.mxu0 0.0
      %1626 = vmatpush1.msra.mxu0 0.0
      %1627 = vmatprep.subr.mxu0 0.0
      %1628 = vmatpush1.msra.mxu0 0.0
      %1629 = vmatprep.subr.mxu0 0.0
      %1630 = vmatpush1.msra.mxu0 0.0
      %1631 = vmatprep.subr.mxu0 0.0
      %1632 = vmatpush1.msra.mxu0 0.0
      %1633 = vmatprep.subr.mxu0 0.0
      %1634 = vmatpush1.msra.mxu0 0.0
      %1635 = vmatprep.subr.mxu0 0.0
      %1636 = vmatpush1.msra.mxu0 0.0
      %1637 = vmatprep.subr.mxu0 0.0
      %1638 = vmatpush1.msra.mxu0 0.0
      %1639 = vmatprep.subr.mxu0 0.0
      %1640 = vmatpush1.msra.mxu0 0.0
      %1641 = vmatprep.subr.mxu0 0.0
      %1642 = vmatpush1.msra.mxu0 0.0
      %1643 = vmatprep.subr.mxu0 0.0
      %1644 = vmatpush1.msra.mxu0 0.0
      %1645 = vmatprep.subr.mxu0 0.0
      %1646 = vmatpush1.msra.mxu0 0.0
      %1647 = vmatprep.subr.mxu0 0.0
      %1648 = vmatpush1.msra.mxu0 0.0
      %1649 = vmatprep.subr.mxu0 0.0
      %1650 = vmatpush1.msra.mxu0 0.0
      %1651 = vmatprep.subr.mxu0 0.0
      %1652 = vmatpush1.msra.mxu0 0.0
      %1653 = vmatprep.mubr.f32.mxu0 0.0
      %v1654 = vand.u32 %v1325, 4294901760
      %v1655 = vsub.f32 %v1325, %v1654
      %v1656 = vand.u32 %v1655, 4294901760
      %1657 = vmatmul.mubr.f32.gmra.mrb[0].mxu0 %v1656
      %v1658 = vpop.f32.mrb[0].mxu0
      %v1659 = vadd.f32 %v1577, %v1658
      %v1660 = vpop.f32.mrb[0].mxu0
      %1661 = vmatprep.mubr.f32.mxu0 0.0
      %v1662 = vand.u32 %v1328, 4294901760
      %v1663 = vsub.f32 %v1328, %v1662
      %v1664 = vand.u32 %v1663, 4294901760
      %1665 = vmatmul.mubr.f32.gmra.mrb[0].mxu0 %v1664
      %v1666 = vpop.f32.mrb[0].mxu0
      %v1667 = vadd.f32 %v1584, %v1666
      %v1668 = vpop.f32.mrb[0].mxu0
      %1669 = vdwg.mxu0
      %1670 = vmatprep.subr.mxu0 0.0
      %v1671 = vand.u32 %v1322, 4294901760
      %v1672 = vsub.f32 %v1322, %v1671
      %v1673 = vand.u32 %v1672, 4294901760
      %1674 = vmatpush1.msra.mxu0 %v1673
      %1675 = vmatprep.subr.mxu0 0.0
      %v1676 = vand.u32 %v1323, 4294901760
      %v1677 = vsub.f32 %v1323, %v1676
      %v1678 = vand.u32 %v1677, 4294901760
      %1679 = vmatpush1.msra.mxu0 %v1678
      %1680 = vmatprep.subr.mxu0 0.0
      %1681 = vmatpush1.msra.mxu0 0.0
      %1682 = vmatprep.subr.mxu0 0.0
      %1683 = vmatpush1.msra.mxu0 0.0
      %1684 = vmatprep.subr.mxu0 0.0
      %1685 = vmatpush1.msra.mxu0 0.0
      %1686 = vmatprep.subr.mxu0 0.0
      %1687 = vmatpush1.msra.mxu0 0.0
      %1688 = vmatprep.subr.mxu0 0.0
      %1689 = vmatpush1.msra.mxu0 0.0
      %1690 = vmatprep.subr.mxu0 0.0
      %1691 = vmatpush1.msra.mxu0 0.0
      %1692 = vmatprep.subr.mxu0 0.0
      %1693 = vmatpush1.msra.mxu0 0.0
      %1694 = vmatprep.subr.mxu0 0.0
      %1695 = vmatpush1.msra.mxu0 0.0
      %1696 = vmatprep.subr.mxu0 0.0
      %1697 = vmatpush1.msra.mxu0 0.0
      %1698 = vmatprep.subr.mxu0 0.0
      %1699 = vmatpush1.msra.mxu0 0.0
      %1700 = vmatprep.subr.mxu0 0.0
      %1701 = vmatpush1.msra.mxu0 0.0
      %1702 = vmatprep.subr.mxu0 0.0
      %1703 = vmatpush1.msra.mxu0 0.0
      %1704 = vmatprep.subr.mxu0 0.0
      %1705 = vmatpush1.msra.mxu0 0.0
      %1706 = vmatprep.subr.mxu0 0.0
      %1707 = vmatpush1.msra.mxu0 0.0
      %1708 = vmatprep.subr.mxu0 0.0
      %1709 = vmatpush1.msra.mxu0 0.0
      %1710 = vmatprep.subr.mxu0 0.0
      %1711 = vmatpush1.msra.mxu0 0.0
      %1712 = vmatprep.subr.mxu0 0.0
      %1713 = vmatpush1.msra.mxu0 0.0
      %1714 = vmatprep.subr.mxu0 0.0
      %1715 = vmatpush1.msra.mxu0 0.0
      %1716 = vmatprep.subr.mxu0 0.0
      %1717 = vmatpush1.msra.mxu0 0.0
      %1718 = vmatprep.subr.mxu0 0.0
      %1719 = vmatpush1.msra.mxu0 0.0
      %1720 = vmatprep.subr.mxu0 0.0
      %1721 = vmatpush1.msra.mxu0 0.0
      %1722 = vmatprep.subr.mxu0 0.0
      %1723 = vmatpush1.msra.mxu0 0.0
      %1724 = vmatprep.subr.mxu0 0.0
      %1725 = vmatpush1.msra.mxu0 0.0
      %1726 = vmatprep.subr.mxu0 0.0
      %1727 = vmatpush1.msra.mxu0 0.0
      %1728 = vmatprep.subr.mxu0 0.0
      %1729 = vmatpush1.msra.mxu0 0.0
      %1730 = vmatprep.subr.mxu0 0.0
      %1731 = vmatpush1.msra.mxu0 0.0
      %1732 = vmatprep.subr.mxu0 0.0
      %1733 = vmatpush1.msra.mxu0 0.0
      %1734 = vmatprep.subr.mxu0 0.0
      %1735 = vmatpush1.msra.mxu0 0.0
      %1736 = vmatprep.subr.mxu0 0.0
      %1737 = vmatpush1.msra.mxu0 0.0
      %1738 = vmatprep.subr.mxu0 0.0
      %1739 = vmatpush1.msra.mxu0 0.0
      %1740 = vmatprep.mubr.f32.mxu0 0.0
      %v1741 = vand.u32 %v1325, 4294901760
      %1742 = vmatmul.mubr.f32.gmra.mrb[0].mxu0 %v1741
      %v1743 = vpop.f32.mrb[0].mxu0
      %v1744 = vadd.f32 %v1659, %v1743
      %v1745 = vpop.f32.mrb[0].mxu0
      %1746 = vmatprep.mubr.f32.mxu0 0.0
      %v1747 = vand.u32 %v1328, 4294901760
      %1748 = vmatmul.mubr.f32.gmra.mrb[0].mxu0 %v1747
      %v1749 = vpop.f32.mrb[0].mxu0
      %v1750 = vadd.f32 %v1667, %v1749
      %v1751 = vpop.f32.mrb[0].mxu0
      %1752 = vdwg.mxu0
      %1753 = vmatprep.subr.mxu0 0.0
      %v1754 = vand.u32 %v1322, 4294901760
      %1755 = vmatpush1.msra.mxu0 %v1754
      %1756 = vmatprep.subr.mxu0 0.0
      %v1757 = vand.u32 %v1323, 4294901760
      %1758 = vmatpush1.msra.mxu0 %v1757
      %1759 = vmatprep.subr.mxu0 0.0
      %1760 = vmatpush1.msra.mxu0 0.0
      %1761 = vmatprep.subr.mxu0 0.0
      %1762 = vmatpush1.msra.mxu0 0.0
      %1763 = vmatprep.subr.mxu0 0.0
      %1764 = vmatpush1.msra.mxu0 0.0
      %1765 = vmatprep.subr.mxu0 0.0
      %1766 = vmatpush1.msra.mxu0 0.0
      %1767 = vmatprep.subr.mxu0 0.0
      %1768 = vmatpush1.msra.mxu0 0.0
      %1769 = vmatprep.subr.mxu0 0.0
      %1770 = vmatpush1.msra.mxu0 0.0
      %1771 = vmatprep.subr.mxu0 0.0
      %1772 = vmatpush1.msra.mxu0 0.0
      %1773 = vmatprep.subr.mxu0 0.0
      %1774 = vmatpush1.msra.mxu0 0.0
      %1775 = vmatprep.subr.mxu0 0.0
      %1776 = vmatpush1.msra.mxu0 0.0
      %1777 = vmatprep.subr.mxu0 0.0
      %1778 = vmatpush1.msra.mxu0 0.0
      %1779 = vmatprep.subr.mxu0 0.0
      %1780 = vmatpush1.msra.mxu0 0.0
      %1781 = vmatprep.subr.mxu0 0.0
      %1782 = vmatpush1.msra.mxu0 0.0
      %1783 = vmatprep.subr.mxu0 0.0
      %1784 = vmatpush1.msra.mxu0 0.0
      %1785 = vmatprep.subr.mxu0 0.0
      %1786 = vmatpush1.msra.mxu0 0.0
      %1787 = vmatprep.subr.mxu0 0.0
      %1788 = vmatpush1.msra.mxu0 0.0
      %1789 = vmatprep.subr.mxu0 0.0
      %1790 = vmatpush1.msra.mxu0 0.0
      %1791 = vmatprep.subr.mxu0 0.0
      %1792 = vmatpush1.msra.mxu0 0.0
      %1793 = vmatprep.subr.mxu0 0.0
      %1794 = vmatpush1.msra.mxu0 0.0
      %1795 = vmatprep.subr.mxu0 0.0
      %1796 = vmatpush1.msra.mxu0 0.0
      %1797 = vmatprep.subr.mxu0 0.0
      %1798 = vmatpush1.msra.mxu0 0.0
      %1799 = vmatprep.subr.mxu0 0.0
      %1800 = vmatpush1.msra.mxu0 0.0
      %1801 = vmatprep.subr.mxu0 0.0
      %1802 = vmatpush1.msra.mxu0 0.0
      %1803 = vmatprep.subr.mxu0 0.0
      %1804 = vmatpush1.msra.mxu0 0.0
      %1805 = vmatprep.subr.mxu0 0.0
      %1806 = vmatpush1.msra.mxu0 0.0
      %1807 = vmatprep.subr.mxu0 0.0
      %1808 = vmatpush1.msra.mxu0 0.0
      %1809 = vmatprep.subr.mxu0 0.0
      %1810 = vmatpush1.msra.mxu0 0.0
      %1811 = vmatprep.subr.mxu0 0.0
      %1812 = vmatpush1.msra.mxu0 0.0
      %1813 = vmatprep.subr.mxu0 0.0
      %1814 = vmatpush1.msra.mxu0 0.0
      %1815 = vmatprep.subr.mxu0 0.0
      %1816 = vmatpush1.msra.mxu0 0.0
      %1817 = vmatprep.subr.mxu0 0.0
      %1818 = vmatpush1.msra.mxu0 0.0
      %1819 = vmatprep.mubr.f32.mxu0 0.0
      %v1820 = vand.u32 %v1325, 4294901760
      %1821 = vmatmul.mubr.f32.gmra.mrb[0].mxu0 %v1820
      %v1822 = vpop.f32.mrb[0].mxu0
      %v1823 = vadd.f32 %v1744, %v1822
      %v1824 = vpop.f32.mrb[0].mxu0
      %1825 = vmatprep.mubr.f32.mxu0 0.0
      %v1826 = vand.u32 %v1328, 4294901760
      %1827 = vmatmul.mubr.f32.gmra.mrb[0].mxu0 %v1826
      %v1828 = vpop.f32.mrb[0].mxu0
      %v1829 = vadd.f32 %v1750, %v1828
      %v1830 = vpop.f32.mrb[0].mxu0
      %1831 = vdwg.mxu0
      %s1832 = scalar_lea.vmem %s183, 8
      %1833 = vst.msk [vmem:[%s1832] sm:$0xf] %vm699, %v1823
      %s1834 = scalar_lea.vmem %s183, 72
      %1835 = vst.msk [vmem:[%s1834 - $0x4] sm:$0xf0] %vm702, %v1823
      %s1836 = scalar_lea.vmem %s183, 136
      %1837 = vst.msk [vmem:[%s1836] sm:$0xf] %vm699, %v1829
      %s1838 = scalar_lea.vmem %s183, 200
      %1839 = vst.msk [vmem:[%s1838 - $0x4] sm:$0xf0] %vm702, %v1829
      %1841 = vrot.lane.b32.xlu0 %v1823, 124
      %v1842 = vpop.permute.xlu0 %1841
      %s1844 = scalar_lea.vmem %s183, 24
      %1845 = vst.msk [vmem:[%s1844] sm:$0xf] %vm699, %v1842
      %s1846 = scalar_lea.vmem %s183, 88
      %1847 = vst.msk [vmem:[%s1846 - $0x4] sm:$0xf0] %vm702, %v1842
      %1849 = vrot.lane.b32.xlu0 %v1829, 124
      %v1850 = vpop.permute.xlu0 %1849
      %s1852 = scalar_lea.vmem %s183, 152
      %1853 = vst.msk [vmem:[%s1852] sm:$0xf] %vm699, %v1850
      %s1854 = scalar_lea.vmem %s183, 216
      %1855 = vst.msk [vmem:[%s1854 - $0x4] sm:$0xf0] %vm702, %v1850
      %1856 = vrot.lane.b32.xlu0 %v1823, 120
      %v1857 = vpop.permute.xlu0 %1856
      %s1859 = scalar_lea.vmem %s183, 12
      %1860 = vst.msk [vmem:[%s1859] sm:$0xf] %vm699, %v1857
      %s1861 = scalar_lea.vmem %s183, 76
      %1862 = vst.msk [vmem:[%s1861 - $0x4] sm:$0xf0] %vm702, %v1857
      %1863 = vrot.lane.b32.xlu0 %v1829, 120
      %v1864 = vpop.permute.xlu0 %1863
      %s1866 = scalar_lea.vmem %s183, 140
      %1867 = vst.msk [vmem:[%s1866] sm:$0xf] %vm699, %v1864
      %s1868 = scalar_lea.vmem %s183, 204
      %1869 = vst.msk [vmem:[%s1868 - $0x4] sm:$0xf0] %vm702, %v1864
      %1870 = vrot.lane.b32.xlu0 %v1823, 116
      %v1871 = vpop.permute.xlu0 %1870
      %s1873 = scalar_lea.vmem %s183, 28
      %1874 = vst.msk [vmem:[%s1873] sm:$0xf] %vm699, %v1871
      %s1875 = scalar_lea.vmem %s183, 92
      %1876 = vst.msk [vmem:[%s1875 - $0x4] sm:$0xf0] %vm702, %v1871
      %1877 = vrot.lane.b32.xlu0 %v1829, 116
      %v1878 = vpop.permute.xlu0 %1877
      %s1880 = scalar_lea.vmem %s183, 156
      %1881 = vst.msk [vmem:[%s1880] sm:$0xf] %vm699, %v1878
      %s1882 = scalar_lea.vmem %s183, 220
      %1883 = vst.msk [vmem:[%s1882 - $0x4] sm:$0xf0] %vm702, %v1878
      %s1884 = scalar_lea.vmem %s172, 3
      %v1885 = vld [vmem:[%s1884] ss:$4 sm:$0xff]
      %s1886 = scalar_lea.vmem %s172, 35
      %v1887 = vld [vmem:[%s1886] ss:$4 sm:$0xff]
      %v1888 = vld [vmem:[%s1] sm:$0xff]
      %v1889 = vld [vmem:[%s1 + $0x8] sm:$0xff]
      %v1891 = vsel %vm190, %v1885, 0
      %v1894 = vsel %vm190, %v1887, 0
      %1896 = vmatprep.subr.mxu0 0.0
      %v1897 = vand.u32 %v1888, 4294901760
      %1898 = vmatpush1.msra.mxu0 %v1897
      %1899 = vmatprep.subr.mxu0 0.0
      %v1900 = vand.u32 %v1889, 4294901760
      %1901 = vmatpush1.msra.mxu0 %v1900
      %1902 = vmatprep.subr.mxu0 0.0
      %1903 = vmatpush1.msra.mxu0 0.0
      %1904 = vmatprep.subr.mxu0 0.0
      %1905 = vmatpush1.msra.mxu0 0.0
      %1906 = vmatprep.subr.mxu0 0.0
      %1907 = vmatpush1.msra.mxu0 0.0
      %1908 = vmatprep.subr.mxu0 0.0
      %1909 = vmatpush1.msra.mxu0 0.0
      %1910 = vmatprep.subr.mxu0 0.0
      %1911 = vmatpush1.msra.mxu0 0.0
      %1912 = vmatprep.subr.mxu0 0.0
      %1913 = vmatpush1.msra.mxu0 0.0
      %1914 = vmatprep.subr.mxu0 0.0
      %1915 = vmatpush1.msra.mxu0 0.0
      %1916 = vmatprep.subr.mxu0 0.0
      %1917 = vmatpush1.msra.mxu0 0.0
      %1918 = vmatprep.subr.mxu0 0.0
      %1919 = vmatpush1.msra.mxu0 0.0
      %1920 = vmatprep.subr.mxu0 0.0
      %1921 = vmatpush1.msra.mxu0 0.0
      %1922 = vmatprep.subr.mxu0 0.0
      %1923 = vmatpush1.msra.mxu0 0.0
      %1924 = vmatprep.subr.mxu0 0.0
      %1925 = vmatpush1.msra.mxu0 0.0
      %1926 = vmatprep.subr.mxu0 0.0
      %1927 = vmatpush1.msra.mxu0 0.0
      %1928 = vmatprep.subr.mxu0 0.0
      %1929 = vmatpush1.msra.mxu0 0.0
      %1930 = vmatprep.subr.mxu0 0.0
      %1931 = vmatpush1.msra.mxu0 0.0
      %1932 = vmatprep.subr.mxu0 0.0
      %1933 = vmatpush1.msra.mxu0 0.0
      %1934 = vmatprep.subr.mxu0 0.0
      %1935 = vmatpush1.msra.mxu0 0.0
      %1936 = vmatprep.subr.mxu0 0.0
      %1937 = vmatpush1.msra.mxu0 0.0
      %1938 = vmatprep.subr.mxu0 0.0
      %1939 = vmatpush1.msra.mxu0 0.0
      %1940 = vmatprep.subr.mxu0 0.0
      %1941 = vmatpush1.msra.mxu0 0.0
      %1942 = vmatprep.subr.mxu0 0.0
      %1943 = vmatpush1.msra.mxu0 0.0
      %1944 = vmatprep.subr.mxu0 0.0
      %1945 = vmatpush1.msra.mxu0 0.0
      %1946 = vmatprep.subr.mxu0 0.0
      %1947 = vmatpush1.msra.mxu0 0.0
      %1948 = vmatprep.subr.mxu0 0.0
      %1949 = vmatpush1.msra.mxu0 0.0
      %1950 = vmatprep.subr.mxu0 0.0
      %1951 = vmatpush1.msra.mxu0 0.0
      %1952 = vmatprep.subr.mxu0 0.0
      %1953 = vmatpush1.msra.mxu0 0.0
      %1954 = vmatprep.subr.mxu0 0.0
      %1955 = vmatpush1.msra.mxu0 0.0
      %1956 = vmatprep.subr.mxu0 0.0
      %1957 = vmatpush1.msra.mxu0 0.0
      %1958 = vmatprep.subr.mxu0 0.0
      %1959 = vmatpush1.msra.mxu0 0.0
      %1960 = vmatprep.subr.mxu0 0.0
      %1961 = vmatpush1.msra.mxu0 0.0
      %1962 = vmatprep.mubr.f32.mxu0 0.0
      %v1963 = vand.u32 %v1891, 4294901760
      %v1964 = vsub.f32 %v1891, %v1963
      %v1965 = vand.u32 %v1964, 4294901760
      %v1966 = vsub.f32 %v1964, %v1965
      %v1967 = vand.u32 %v1966, 4294901760
      %1968 = vmatmul.mubr.f32.gmra.mrb[0].mxu0 %v1967
      %v1969 = vpop.f32.mrb[0].mxu0
      %v1970 = vadd.f32 0.0, %v1969
      %v1971 = vpop.f32.mrb[0].mxu0
      %1972 = vmatprep.mubr.f32.mxu0 0.0
      %v1973 = vand.u32 %v1894, 4294901760
      %v1974 = vsub.f32 %v1894, %v1973
      %v1975 = vand.u32 %v1974, 4294901760
      %v1976 = vsub.f32 %v1974, %v1975
      %v1977 = vand.u32 %v1976, 4294901760
      %1978 = vmatmul.mubr.f32.gmra.mrb[0].mxu0 %v1977
      %v1979 = vpop.f32.mrb[0].mxu0
      %v1980 = vadd.f32 0.0, %v1979
      %v1981 = vpop.f32.mrb[0].mxu0
      %1982 = vdwg.mxu0
      %1983 = vmatprep.subr.mxu0 0.0
      %v1984 = vand.u32 %v1888, 4294901760
      %v1985 = vsub.f32 %v1888, %v1984
      %v1986 = vand.u32 %v1985, 4294901760
      %v1987 = vsub.f32 %v1985, %v1986
      %v1988 = vand.u32 %v1987, 4294901760
      %1989 = vmatpush1.msra.mxu0 %v1988
      %1990 = vmatprep.subr.mxu0 0.0
      %v1991 = vand.u32 %v1889, 4294901760
      %v1992 = vsub.f32 %v1889, %v1991
      %v1993 = vand.u32 %v1992, 4294901760
      %v1994 = vsub.f32 %v1992, %v1993
      %v1995 = vand.u32 %v1994, 4294901760
      %1996 = vmatpush1.msra.mxu0 %v1995
      %1997 = vmatprep.subr.mxu0 0.0
      %1998 = vmatpush1.msra.mxu0 0.0
      %1999 = vmatprep.subr.mxu0 0.0
      %2000 = vmatpush1.msra.mxu0 0.0
      %2001 = vmatprep.subr.mxu0 0.0
      %2002 = vmatpush1.msra.mxu0 0.0
      %2003 = vmatprep.subr.mxu0 0.0
      %2004 = vmatpush1.msra.mxu0 0.0
      %2005 = vmatprep.subr.mxu0 0.0
      %2006 = vmatpush1.msra.mxu0 0.0
      %2007 = vmatprep.subr.mxu0 0.0
      %2008 = vmatpush1.msra.mxu0 0.0
      %2009 = vmatprep.subr.mxu0 0.0
      %2010 = vmatpush1.msra.mxu0 0.0
      %2011 = vmatprep.subr.mxu0 0.0
      %2012 = vmatpush1.msra.mxu0 0.0
      %2013 = vmatprep.subr.mxu0 0.0
      %2014 = vmatpush1.msra.mxu0 0.0
      %2015 = vmatprep.subr.mxu0 0.0
      %2016 = vmatpush1.msra.mxu0 0.0
      %2017 = vmatprep.subr.mxu0 0.0
      %2018 = vmatpush1.msra.mxu0 0.0
      %2019 = vmatprep.subr.mxu0 0.0
      %2020 = vmatpush1.msra.mxu0 0.0
      %2021 = vmatprep.subr.mxu0 0.0
      %2022 = vmatpush1.msra.mxu0 0.0
      %2023 = vmatprep.subr.mxu0 0.0
      %2024 = vmatpush1.msra.mxu0 0.0
      %2025 = vmatprep.subr.mxu0 0.0
      %2026 = vmatpush1.msra.mxu0 0.0
      %2027 = vmatprep.subr.mxu0 0.0
      %2028 = vmatpush1.msra.mxu0 0.0
      %2029 = vmatprep.subr.mxu0 0.0
      %2030 = vmatpush1.msra.mxu0 0.0
      %2031 = vmatprep.subr.mxu0 0.0
      %2032 = vmatpush1.msra.mxu0 0.0
      %2033 = vmatprep.subr.mxu0 0.0
      %2034 = vmatpush1.msra.mxu0 0.0
      %2035 = vmatprep.subr.mxu0 0.0
      %2036 = vmatpush1.msra.mxu0 0.0
      %2037 = vmatprep.subr.mxu0 0.0
      %2038 = vmatpush1.msra.mxu0 0.0
      %2039 = vmatprep.subr.mxu0 0.0
      %2040 = vmatpush1.msra.mxu0 0.0
      %2041 = vmatprep.subr.mxu0 0.0
      %2042 = vmatpush1.msra.mxu0 0.0
      %2043 = vmatprep.subr.mxu0 0.0
      %2044 = vmatpush1.msra.mxu0 0.0
      %2045 = vmatprep.subr.mxu0 0.0
      %2046 = vmatpush1.msra.mxu0 0.0
      %2047 = vmatprep.subr.mxu0 0.0
      %2048 = vmatpush1.msra.mxu0 0.0
      %2049 = vmatprep.subr.mxu0 0.0
      %2050 = vmatpush1.msra.mxu0 0.0
      %2051 = vmatprep.subr.mxu0 0.0
      %2052 = vmatpush1.msra.mxu0 0.0
      %2053 = vmatprep.subr.mxu0 0.0
      %2054 = vmatpush1.msra.mxu0 0.0
      %2055 = vmatprep.subr.mxu0 0.0
      %2056 = vmatpush1.msra.mxu0 0.0
      %2057 = vmatprep.mubr.f32.mxu0 0.0
      %v2058 = vand.u32 %v1891, 4294901760
      %2059 = vmatmul.mubr.f32.gmra.mrb[0].mxu0 %v2058
      %v2060 = vpop.f32.mrb[0].mxu0
      %v2061 = vadd.f32 %v1970, %v2060
      %v2062 = vpop.f32.mrb[0].mxu0
      %2063 = vmatprep.mubr.f32.mxu0 0.0
      %v2064 = vand.u32 %v1894, 4294901760
      %2065 = vmatmul.mubr.f32.gmra.mrb[0].mxu0 %v2064
      %v2066 = vpop.f32.mrb[0].mxu0
      %v2067 = vadd.f32 %v1980, %v2066
      %v2068 = vpop.f32.mrb[0].mxu0
      %2069 = vdwg.mxu0
      %2070 = vmatprep.subr.mxu0 0.0
      %v2071 = vand.u32 %v1888, 4294901760
      %v2072 = vsub.f32 %v1888, %v2071
      %2073 = vmatpush1.msra.mxu0 %v2072
      %2074 = vmatprep.subr.mxu0 0.0
      %v2075 = vand.u32 %v1889, 4294901760
      %v2076 = vsub.f32 %v1889, %v2075
      %2077 = vmatpush1.msra.mxu0 %v2076
      %2078 = vmatprep.subr.mxu0 0.0
      %2079 = vmatpush1.msra.mxu0 0.0
      %2080 = vmatprep.subr.mxu0 0.0
      %2081 = vmatpush1.msra.mxu0 0.0
      %2082 = vmatprep.subr.mxu0 0.0
      %2083 = vmatpush1.msra.mxu0 0.0
      %2084 = vmatprep.subr.mxu0 0.0
      %2085 = vmatpush1.msra.mxu0 0.0
      %2086 = vmatprep.subr.mxu0 0.0
      %2087 = vmatpush1.msra.mxu0 0.0
      %2088 = vmatprep.subr.mxu0 0.0
      %2089 = vmatpush1.msra.mxu0 0.0
      %2090 = vmatprep.subr.mxu0 0.0
      %2091 = vmatpush1.msra.mxu0 0.0
      %2092 = vmatprep.subr.mxu0 0.0
      %2093 = vmatpush1.msra.mxu0 0.0
      %2094 = vmatprep.subr.mxu0 0.0
      %2095 = vmatpush1.msra.mxu0 0.0
      %2096 = vmatprep.subr.mxu0 0.0
      %2097 = vmatpush1.msra.mxu0 0.0
      %2098 = vmatprep.subr.mxu0 0.0
      %2099 = vmatpush1.msra.mxu0 0.0
      %2100 = vmatprep.subr.mxu0 0.0
      %2101 = vmatpush1.msra.mxu0 0.0
      %2102 = vmatprep.subr.mxu0 0.0
      %2103 = vmatpush1.msra.mxu0 0.0
      %2104 = vmatprep.subr.mxu0 0.0
      %2105 = vmatpush1.msra.mxu0 0.0
      %2106 = vmatprep.subr.mxu0 0.0
      %2107 = vmatpush1.msra.mxu0 0.0
      %2108 = vmatprep.subr.mxu0 0.0
      %2109 = vmatpush1.msra.mxu0 0.0
      %2110 = vmatprep.subr.mxu0 0.0
      %2111 = vmatpush1.msra.mxu0 0.0
      %2112 = vmatprep.subr.mxu0 0.0
      %2113 = vmatpush1.msra.mxu0 0.0
      %2114 = vmatprep.subr.mxu0 0.0
      %2115 = vmatpush1.msra.mxu0 0.0
      %2116 = vmatprep.subr.mxu0 0.0
      %2117 = vmatpush1.msra.mxu0 0.0
      %2118 = vmatprep.subr.mxu0 0.0
      %2119 = vmatpush1.msra.mxu0 0.0
      %2120 = vmatprep.subr.mxu0 0.0
      %2121 = vmatpush1.msra.mxu0 0.0
      %2122 = vmatprep.subr.mxu0 0.0
      %2123 = vmatpush1.msra.mxu0 0.0
      %2124 = vmatprep.subr.mxu0 0.0
      %2125 = vmatpush1.msra.mxu0 0.0
      %2126 = vmatprep.subr.mxu0 0.0
      %2127 = vmatpush1.msra.mxu0 0.0
      %2128 = vmatprep.subr.mxu0 0.0
      %2129 = vmatpush1.msra.mxu0 0.0
      %2130 = vmatprep.subr.mxu0 0.0
      %2131 = vmatpush1.msra.mxu0 0.0
      %2132 = vmatprep.subr.mxu0 0.0
      %2133 = vmatpush1.msra.mxu0 0.0
      %2134 = vmatprep.subr.mxu0 0.0
      %2135 = vmatpush1.msra.mxu0 0.0
      %2136 = vmatprep.subr.mxu0 0.0
      %2137 = vmatpush1.msra.mxu0 0.0
      %2138 = vmatprep.mubr.f32.mxu0 0.0
      %v2139 = vand.u32 %v1891, 4294901760
      %v2140 = vsub.f32 %v1891, %v2139
      %2141 = vmatmul.mubr.f32.gmra.mrb[0].mxu0 %v2140
      %v2142 = vpop.f32.mrb[0].mxu0
      %v2143 = vadd.f32 %v2061, %v2142
      %v2144 = vpop.f32.mrb[0].mxu0
      %2145 = vmatprep.mubr.f32.mxu0 0.0
      %v2146 = vand.u32 %v1894, 4294901760
      %v2147 = vsub.f32 %v1894, %v2146
      %2148 = vmatmul.mubr.f32.gmra.mrb[0].mxu0 %v2147
      %v2149 = vpop.f32.mrb[0].mxu0
      %v2150 = vadd.f32 %v2067, %v2149
      %v2151 = vpop.f32.mrb[0].mxu0
      %2152 = vdwg.mxu0
      %2153 = vmatprep.subr.mxu0 0.0
      %v2154 = vand.u32 %v1888, 4294901760
      %2155 = vmatpush1.msra.mxu0 %v2154
      %2156 = vmatprep.subr.mxu0 0.0
      %v2157 = vand.u32 %v1889, 4294901760
      %2158 = vmatpush1.msra.mxu0 %v2157
      %2159 = vmatprep.subr.mxu0 0.0
      %2160 = vmatpush1.msra.mxu0 0.0
      %2161 = vmatprep.subr.mxu0 0.0
      %2162 = vmatpush1.msra.mxu0 0.0
      %2163 = vmatprep.subr.mxu0 0.0
      %2164 = vmatpush1.msra.mxu0 0.0
      %2165 = vmatprep.subr.mxu0 0.0
      %2166 = vmatpush1.msra.mxu0 0.0
      %2167 = vmatprep.subr.mxu0 0.0
      %2168 = vmatpush1.msra.mxu0 0.0
      %2169 = vmatprep.subr.mxu0 0.0
      %2170 = vmatpush1.msra.mxu0 0.0
      %2171 = vmatprep.subr.mxu0 0.0
      %2172 = vmatpush1.msra.mxu0 0.0
      %2173 = vmatprep.subr.mxu0 0.0
      %2174 = vmatpush1.msra.mxu0 0.0
      %2175 = vmatprep.subr.mxu0 0.0
      %2176 = vmatpush1.msra.mxu0 0.0
      %2177 = vmatprep.subr.mxu0 0.0
      %2178 = vmatpush1.msra.mxu0 0.0
      %2179 = vmatprep.subr.mxu0 0.0
      %2180 = vmatpush1.msra.mxu0 0.0
      %2181 = vmatprep.subr.mxu0 0.0
      %2182 = vmatpush1.msra.mxu0 0.0
      %2183 = vmatprep.subr.mxu0 0.0
      %2184 = vmatpush1.msra.mxu0 0.0
      %2185 = vmatprep.subr.mxu0 0.0
      %2186 = vmatpush1.msra.mxu0 0.0
      %2187 = vmatprep.subr.mxu0 0.0
      %2188 = vmatpush1.msra.mxu0 0.0
      %2189 = vmatprep.subr.mxu0 0.0
      %2190 = vmatpush1.msra.mxu0 0.0
      %2191 = vmatprep.subr.mxu0 0.0
      %2192 = vmatpush1.msra.mxu0 0.0
      %2193 = vmatprep.subr.mxu0 0.0
      %2194 = vmatpush1.msra.mxu0 0.0
      %2195 = vmatprep.subr.mxu0 0.0
      %2196 = vmatpush1.msra.mxu0 0.0
      %2197 = vmatprep.subr.mxu0 0.0
      %2198 = vmatpush1.msra.mxu0 0.0
      %2199 = vmatprep.subr.mxu0 0.0
      %2200 = vmatpush1.msra.mxu0 0.0
      %2201 = vmatprep.subr.mxu0 0.0
      %2202 = vmatpush1.msra.mxu0 0.0
      %2203 = vmatprep.subr.mxu0 0.0
      %2204 = vmatpush1.msra.mxu0 0.0
      %2205 = vmatprep.subr.mxu0 0.0
      %2206 = vmatpush1.msra.mxu0 0.0
      %2207 = vmatprep.subr.mxu0 0.0
      %2208 = vmatpush1.msra.mxu0 0.0
      %2209 = vmatprep.subr.mxu0 0.0
      %2210 = vmatpush1.msra.mxu0 0.0
      %2211 = vmatprep.subr.mxu0 0.0
      %2212 = vmatpush1.msra.mxu0 0.0
      %2213 = vmatprep.subr.mxu0 0.0
      %2214 = vmatpush1.msra.mxu0 0.0
      %2215 = vmatprep.subr.mxu0 0.0
      %2216 = vmatpush1.msra.mxu0 0.0
      %2217 = vmatprep.subr.mxu0 0.0
      %2218 = vmatpush1.msra.mxu0 0.0
      %2219 = vmatprep.mubr.f32.mxu0 0.0
      %v2220 = vand.u32 %v1891, 4294901760
      %v2221 = vsub.f32 %v1891, %v2220
      %v2222 = vand.u32 %v2221, 4294901760
      %2223 = vmatmul.mubr.f32.gmra.mrb[0].mxu0 %v2222
      %v2224 = vpop.f32.mrb[0].mxu0
      %v2225 = vadd.f32 %v2143, %v2224
      %v2226 = vpop.f32.mrb[0].mxu0
      %2227 = vmatprep.mubr.f32.mxu0 0.0
      %v2228 = vand.u32 %v1894, 4294901760
      %v2229 = vsub.f32 %v1894, %v2228
      %v2230 = vand.u32 %v2229, 4294901760
      %2231 = vmatmul.mubr.f32.gmra.mrb[0].mxu0 %v2230
      %v2232 = vpop.f32.mrb[0].mxu0
      %v2233 = vadd.f32 %v2150, %v2232
      %v2234 = vpop.f32.mrb[0].mxu0
      %2235 = vdwg.mxu0
      %2236 = vmatprep.subr.mxu0 0.0
      %v2237 = vand.u32 %v1888, 4294901760
      %v2238 = vsub.f32 %v1888, %v2237
      %v2239 = vand.u32 %v2238, 4294901760
      %2240 = vmatpush1.msra.mxu0 %v2239
      %2241 = vmatprep.subr.mxu0 0.0
      %v2242 = vand.u32 %v1889, 4294901760
      %v2243 = vsub.f32 %v1889, %v2242
      %v2244 = vand.u32 %v2243, 4294901760
      %2245 = vmatpush1.msra.mxu0 %v2244
      %2246 = vmatprep.subr.mxu0 0.0
      %2247 = vmatpush1.msra.mxu0 0.0
      %2248 = vmatprep.subr.mxu0 0.0
      %2249 = vmatpush1.msra.mxu0 0.0
      %2250 = vmatprep.subr.mxu0 0.0
      %2251 = vmatpush1.msra.mxu0 0.0
      %2252 = vmatprep.subr.mxu0 0.0
      %2253 = vmatpush1.msra.mxu0 0.0
      %2254 = vmatprep.subr.mxu0 0.0
      %2255 = vmatpush1.msra.mxu0 0.0
      %2256 = vmatprep.subr.mxu0 0.0
      %2257 = vmatpush1.msra.mxu0 0.0
      %2258 = vmatprep.subr.mxu0 0.0
      %2259 = vmatpush1.msra.mxu0 0.0
      %2260 = vmatprep.subr.mxu0 0.0
      %2261 = vmatpush1.msra.mxu0 0.0
      %2262 = vmatprep.subr.mxu0 0.0
      %2263 = vmatpush1.msra.mxu0 0.0
      %2264 = vmatprep.subr.mxu0 0.0
      %2265 = vmatpush1.msra.mxu0 0.0
      %2266 = vmatprep.subr.mxu0 0.0
      %2267 = vmatpush1.msra.mxu0 0.0
      %2268 = vmatprep.subr.mxu0 0.0
      %2269 = vmatpush1.msra.mxu0 0.0
      %2270 = vmatprep.subr.mxu0 0.0
      %2271 = vmatpush1.msra.mxu0 0.0
      %2272 = vmatprep.subr.mxu0 0.0
      %2273 = vmatpush1.msra.mxu0 0.0
      %2274 = vmatprep.subr.mxu0 0.0
      %2275 = vmatpush1.msra.mxu0 0.0
      %2276 = vmatprep.subr.mxu0 0.0
      %2277 = vmatpush1.msra.mxu0 0.0
      %2278 = vmatprep.subr.mxu0 0.0
      %2279 = vmatpush1.msra.mxu0 0.0
      %2280 = vmatprep.subr.mxu0 0.0
      %2281 = vmatpush1.msra.mxu0 0.0
      %2282 = vmatprep.subr.mxu0 0.0
      %2283 = vmatpush1.msra.mxu0 0.0
      %2284 = vmatprep.subr.mxu0 0.0
      %2285 = vmatpush1.msra.mxu0 0.0
      %2286 = vmatprep.subr.mxu0 0.0
      %2287 = vmatpush1.msra.mxu0 0.0
      %2288 = vmatprep.subr.mxu0 0.0
      %2289 = vmatpush1.msra.mxu0 0.0
      %2290 = vmatprep.subr.mxu0 0.0
      %2291 = vmatpush1.msra.mxu0 0.0
      %2292 = vmatprep.subr.mxu0 0.0
      %2293 = vmatpush1.msra.mxu0 0.0
      %2294 = vmatprep.subr.mxu0 0.0
      %2295 = vmatpush1.msra.mxu0 0.0
      %2296 = vmatprep.subr.mxu0 0.0
      %2297 = vmatpush1.msra.mxu0 0.0
      %2298 = vmatprep.subr.mxu0 0.0
      %2299 = vmatpush1.msra.mxu0 0.0
      %2300 = vmatprep.subr.mxu0 0.0
      %2301 = vmatpush1.msra.mxu0 0.0
      %2302 = vmatprep.subr.mxu0 0.0
      %2303 = vmatpush1.msra.mxu0 0.0
      %2304 = vmatprep.subr.mxu0 0.0
      %2305 = vmatpush1.msra.mxu0 0.0
      %2306 = vmatprep.mubr.f32.mxu0 0.0
      %v2307 = vand.u32 %v1891, 4294901760
      %2308 = vmatmul.mubr.f32.gmra.mrb[0].mxu0 %v2307
      %v2309 = vpop.f32.mrb[0].mxu0
      %v2310 = vadd.f32 %v2225, %v2309
      %v2311 = vpop.f32.mrb[0].mxu0
      %2312 = vmatprep.mubr.f32.mxu0 0.0
      %v2313 = vand.u32 %v1894, 4294901760
      %2314 = vmatmul.mubr.f32.gmra.mrb[0].mxu0 %v2313
      %v2315 = vpop.f32.mrb[0].mxu0
      %v2316 = vadd.f32 %v2233, %v2315
      %v2317 = vpop.f32.mrb[0].mxu0
      %2318 = vdwg.mxu0
      %2319 = vmatprep.subr.mxu0 0.0
      %v2320 = vand.u32 %v1888, 4294901760
      %2321 = vmatpush1.msra.mxu0 %v2320
      %2322 = vmatprep.subr.mxu0 0.0
      %v2323 = vand.u32 %v1889, 4294901760
      %2324 = vmatpush1.msra.mxu0 %v2323
      %2325 = vmatprep.subr.mxu0 0.0
      %2326 = vmatpush1.msra.mxu0 0.0
      %2327 = vmatprep.subr.mxu0 0.0
      %2328 = vmatpush1.msra.mxu0 0.0
      %2329 = vmatprep.subr.mxu0 0.0
      %2330 = vmatpush1.msra.mxu0 0.0
      %2331 = vmatprep.subr.mxu0 0.0
      %2332 = vmatpush1.msra.mxu0 0.0
      %2333 = vmatprep.subr.mxu0 0.0
      %2334 = vmatpush1.msra.mxu0 0.0
      %2335 = vmatprep.subr.mxu0 0.0
      %2336 = vmatpush1.msra.mxu0 0.0
      %2337 = vmatprep.subr.mxu0 0.0
      %2338 = vmatpush1.msra.mxu0 0.0
      %2339 = vmatprep.subr.mxu0 0.0
      %2340 = vmatpush1.msra.mxu0 0.0
      %2341 = vmatprep.subr.mxu0 0.0
      %2342 = vmatpush1.msra.mxu0 0.0
      %2343 = vmatprep.subr.mxu0 0.0
      %2344 = vmatpush1.msra.mxu0 0.0
      %2345 = vmatprep.subr.mxu0 0.0
      %2346 = vmatpush1.msra.mxu0 0.0
      %2347 = vmatprep.subr.mxu0 0.0
      %2348 = vmatpush1.msra.mxu0 0.0
      %2349 = vmatprep.subr.mxu0 0.0
      %2350 = vmatpush1.msra.mxu0 0.0
      %2351 = vmatprep.subr.mxu0 0.0
      %2352 = vmatpush1.msra.mxu0 0.0
      %2353 = vmatprep.subr.mxu0 0.0
      %2354 = vmatpush1.msra.mxu0 0.0
      %2355 = vmatprep.subr.mxu0 0.0
      %2356 = vmatpush1.msra.mxu0 0.0
      %2357 = vmatprep.subr.mxu0 0.0
      %2358 = vmatpush1.msra.mxu0 0.0
      %2359 = vmatprep.subr.mxu0 0.0
      %2360 = vmatpush1.msra.mxu0 0.0
      %2361 = vmatprep.subr.mxu0 0.0
      %2362 = vmatpush1.msra.mxu0 0.0
      %2363 = vmatprep.subr.mxu0 0.0
      %2364 = vmatpush1.msra.mxu0 0.0
      %2365 = vmatprep.subr.mxu0 0.0
      %2366 = vmatpush1.msra.mxu0 0.0
      %2367 = vmatprep.subr.mxu0 0.0
      %2368 = vmatpush1.msra.mxu0 0.0
      %2369 = vmatprep.subr.mxu0 0.0
      %2370 = vmatpush1.msra.mxu0 0.0
      %2371 = vmatprep.subr.mxu0 0.0
      %2372 = vmatpush1.msra.mxu0 0.0
      %2373 = vmatprep.subr.mxu0 0.0
      %2374 = vmatpush1.msra.mxu0 0.0
      %2375 = vmatprep.subr.mxu0 0.0
      %2376 = vmatpush1.msra.mxu0 0.0
      %2377 = vmatprep.subr.mxu0 0.0
      %2378 = vmatpush1.msra.mxu0 0.0
      %2379 = vmatprep.subr.mxu0 0.0
      %2380 = vmatpush1.msra.mxu0 0.0
      %2381 = vmatprep.subr.mxu0 0.0
      %2382 = vmatpush1.msra.mxu0 0.0
      %2383 = vmatprep.subr.mxu0 0.0
      %2384 = vmatpush1.msra.mxu0 0.0
      %2385 = vmatprep.mubr.f32.mxu0 0.0
      %v2386 = vand.u32 %v1891, 4294901760
      %2387 = vmatmul.mubr.f32.gmra.mrb[0].mxu0 %v2386
      %v2388 = vpop.f32.mrb[0].mxu0
      %v2389 = vadd.f32 %v2310, %v2388
      %v2390 = vpop.f32.mrb[0].mxu0
      %2391 = vmatprep.mubr.f32.mxu0 0.0
      %v2392 = vand.u32 %v1894, 4294901760
      %2393 = vmatmul.mubr.f32.gmra.mrb[0].mxu0 %v2392
      %v2394 = vpop.f32.mrb[0].mxu0
      %v2395 = vadd.f32 %v2316, %v2394
      %v2396 = vpop.f32.mrb[0].mxu0
      %2397 = vdwg.mxu0
      %s2398 = scalar_lea.vmem %s183, 40
      %2399 = vst.msk [vmem:[%s2398] sm:$0xf] %vm699, %v2389
      %s2400 = scalar_lea.vmem %s183, 104
      %2401 = vst.msk [vmem:[%s2400 - $0x4] sm:$0xf0] %vm702, %v2389
      %s2402 = scalar_lea.vmem %s183, 168
      %2403 = vst.msk [vmem:[%s2402] sm:$0xf] %vm699, %v2395
      %s2404 = scalar_lea.vmem %s183, 232
      %2405 = vst.msk [vmem:[%s2404 - $0x4] sm:$0xf0] %vm702, %v2395
      %2407 = vrot.lane.b32.xlu0 %v2389, 124
      %v2408 = vpop.permute.xlu0 %2407
      %s2410 = scalar_lea.vmem %s183, 56
      %2411 = vst.msk [vmem:[%s2410] sm:$0xf] %vm699, %v2408
      %s2412 = scalar_lea.vmem %s183, 120
      %2413 = vst.msk [vmem:[%s2412 - $0x4] sm:$0xf0] %vm702, %v2408
      %2415 = vrot.lane.b32.xlu0 %v2395, 124
      %v2416 = vpop.permute.xlu0 %2415
      %s2418 = scalar_lea.vmem %s183, 184
      %2419 = vst.msk [vmem:[%s2418] sm:$0xf] %vm699, %v2416
      %s2420 = scalar_lea.vmem %s183, 248
      %2421 = vst.msk [vmem:[%s2420 - $0x4] sm:$0xf0] %vm702, %v2416
      %2422 = vrot.lane.b32.xlu0 %v2389, 120
      %v2423 = vpop.permute.xlu0 %2422
      %s2425 = scalar_lea.vmem %s183, 44
      %2426 = vst.msk [vmem:[%s2425] sm:$0xf] %vm699, %v2423
      %s2427 = scalar_lea.vmem %s183, 108
      %2428 = vst.msk [vmem:[%s2427 - $0x4] sm:$0xf0] %vm702, %v2423
      %2429 = vrot.lane.b32.xlu0 %v2395, 120
      %v2430 = vpop.permute.xlu0 %2429
      %s2432 = scalar_lea.vmem %s183, 172
      %2433 = vst.msk [vmem:[%s2432] sm:$0xf] %vm699, %v2430
      %s2434 = scalar_lea.vmem %s183, 236
      %2435 = vst.msk [vmem:[%s2434 - $0x4] sm:$0xf0] %vm702, %v2430
      %2436 = vrot.lane.b32.xlu0 %v2389, 116
      %v2437 = vpop.permute.xlu0 %2436
      %s2439 = scalar_lea.vmem %s183, 60
      %2440 = vst.msk [vmem:[%s2439] sm:$0xf] %vm699, %v2437
      %s2441 = scalar_lea.vmem %s183, 124
      %2442 = vst.msk [vmem:[%s2441 - $0x4] sm:$0xf0] %vm702, %v2437
      %2443 = vrot.lane.b32.xlu0 %v2395, 116
      %v2444 = vpop.permute.xlu0 %2443
      %s2446 = scalar_lea.vmem %s183, 188
      %2447 = vst.msk [vmem:[%s2446] sm:$0xf] %vm699, %v2444
      %s2448 = scalar_lea.vmem %s183, 252
      %2449 = vst.msk [vmem:[%s2448 - $0x4] sm:$0xf0] %vm702, %v2444
      %s2450 = smul.u32 4, %s18
      %p2451 = scmp.lt.s32.totalorder %s17, 1
      %s2452 = scalar_select %p2451, %s17, 1
      %p2453 = scmp.lt.s32.totalorder %s2450, 3
      %s2454 = scalar_select %p2453, %s2450, 3
      %s2455 = smul.addr %s2454, 16
      %s2456 = smul.addr %s2452, 64
      %s2457 = sadd.s32 %s2455, %s2456
      %s2458 = smul.addr %s2457, 4
      %s2459 = scalar_lea.vmem %s2, %s2458
      // Predicated region
      $region29: #{tpu_custom_call.1} parent=27 // pred_check
        %p2460 = pneg %p94
      $region30: #{tpu_custom_call.1} parent=27 // pred_check_branch
        %2462 = sbr.rel (%p2460) target = $region32
      $region31: #{tpu_custom_call.1} parent=27 // pred_region
        %s2463 = smul.u32 4, %s18
      $region32: #{tpu_custom_call.1} parent=27 // pred_fallthru
        _
    $region28: #{tpu_custom_call.1} parent=5 // pred_fallthru
      _
    %p2464 = scmp.le.s32.totalorder 2, %s8
    // Predicated region
    $region33: #{tpu_custom_call.1} parent=5 // pred_check
      %p2465 = pneg %p2464
    $region34: #{tpu_custom_call.1} parent=5 // pred_check_branch
      %2467 = sbr.rel (%p2465) target = $region36
    $region35: #{tpu_custom_call.1} parent=5 // pred_region
      %s2468 = ssub.s32 %s8, 2
      // Predicated region
      $region37: #{tpu_custom_call.1} parent=35 // pred_check
        %p2469 = pneg %p100
      $region38: #{tpu_custom_call.1} parent=35 // pred_check_branch
        %2471 = sbr.rel (%p2469) target = $region40
      $region39: #{tpu_custom_call.1} parent=35 // pred_region
        %s2472 = smul.u32 4, %s20
        %p2473 = scmp.lt.s32.totalorder %s19, 1
        %s2474 = scalar_select %p2473, %s19, 1
        %p2475 = scmp.lt.s32.totalorder %s2472, 3
        %s2476 = scalar_select %p2475, %s2472, 3
        %s2477 = smul.addr %s2476, 16
        %s2478 = smul.addr %s2474, 64
        %s2479 = sadd.s32 %s2477, %s2478
        %s2480 = smul.addr %s2479, 4
        %s2481 = scalar_lea.vmem %s2, %s2480
      $region40: #{tpu_custom_call.1} parent=35 // pred_fallthru
        _
    $region36: #{tpu_custom_call.1} parent=5 // pred_fallthru
      _
  $region6: #{tpu_custom_call.1} parent=0 // loop_footer
    %s12 = sadd.s32 1, %s8
  $region7: #{tpu_custom_call.1} parent=0 // loop_footer_branch
    %7 = sbr.rel target = $region3
  $region8: #{tpu_custom_call.1} parent=0 // loop_exit
    _

</llo_original>
